<compile_context>
chip_gen: v5e
topology: v5e:2x2
jax: 0.10.0
libtpu: 0.0.40
codegen_flags: <defaults>
</compile_context>

<pallas_src>
import functools
import math

import jax
import jax.numpy as jnp
from jax.experimental import pallas as pl
from jax.experimental.pallas import tpu as pltpu

_LN_EPS = 1e-5  # matches torch.nn.LayerNorm default


# ---------------------------------------------------------------------------
# Fused Pallas kernels
# ---------------------------------------------------------------------------
def _ln(y, g, b, eps):
    """One-pass LayerNorm: mean/var in a single sweep (saves a lane reduction)."""
    mu = jnp.mean(y, axis=-1, keepdims=True)
    var = jnp.maximum(jnp.mean(y * y, axis=-1, keepdims=True) - mu * mu, 0.0)
    return (y - mu) * jax.lax.rsqrt(var + eps) * g + b


def _attn_block_kernel(xq_ref, xkv_ref, m_ref,
                       wqkv_ref, bqkv_ref, wo_ref, bo_ref,
                       g_ref, b_ref, o_ref, *, n_heads, eps, fuse_qkv):
    """Fused: QKV proj -> head-batched attention -> out proj -> +res -> LN."""
    xq = xq_ref[0]                      # (tq, D) f32  query tile / residual
    bias = m_ref[0]                     # (Mqb, Sk) additive mask (broadcasts)
    Tq, D = xq.shape
    H = n_heads
    dh = D // H
    scale = 1.0 / math.sqrt(dh)

    wqkv = wqkv_ref[...]                # (D, 3D) bf16 (pre-cast in wrapper)
    bqkv = bqkv_ref[...]                # (1, 3D) f32
    xq_b = xq.astype(jnp.bfloat16)

    if fuse_qkv:
        # self-attention with full-sequence query tile: one lane-dense N=3D dot
        qkv = jnp.dot(xq_b, wqkv, preferred_element_type=jnp.float32) + bqkv
        q, k, v = qkv[:, :D], qkv[:, D:2 * D], qkv[:, 2 * D:]
    else:
        xkv_b = xkv_ref[0].astype(jnp.bfloat16)          # (Sk, D)
        q = jnp.dot(xq_b, wqkv[:, :D],
                    preferred_element_type=jnp.float32) + bqkv[:, :D]
        kv = jnp.dot(xkv_b, wqkv[:, D:],
                     preferred_element_type=jnp.float32) + bqkv[:, D:]
        k, v = kv[:, :D], kv[:, D:]

    Sk = k.shape[0]
    # Head-batched attention: one relayout per operand instead of per head,
    # then batched MXU matmuls over all heads at once.
    qh = jnp.swapaxes(q.astype(jnp.bfloat16).reshape(Tq, H, dh), 0, 1)  # (H,Tq,dh)
    kh = jnp.swapaxes(k.astype(jnp.bfloat16).reshape(Sk, H, dh), 0, 1)  # (H,Sk,dh)
    vh = jnp.swapaxes(v.astype(jnp.bfloat16).reshape(Sk, H, dh), 0, 1)  # (H,Sk,dh)

    s = jnp.einsum('hqd,hkd->hqk', qh, kh,
                   preferred_element_type=jnp.float32) * scale + bias[None]
    s = s - jnp.max(s, axis=-1, keepdims=True)
    p = jnp.exp(s)
    p = p / jnp.sum(p, axis=-1, keepdims=True)          # exact softmax (torch parity)
    oh = jnp.einsum('hqk,hkd->hqd', p.astype(jnp.bfloat16), vh,
                    preferred_element_type=jnp.float32)                 # (H,Tq,dh)
    o = jnp.swapaxes(oh, 0, 1).reshape(Tq, D).astype(jnp.bfloat16)      # merge heads

    attn = jnp.dot(o, wo_ref[...], preferred_element_type=jnp.float32) + bo_ref[...]
    y = xq + attn
    o_ref[0] = _ln(y, g_ref[...], b_ref[...], eps)


def _ffn_adapter_kernel(x_ref, w1_ref, b1_ref, w2_ref, b2_ref, g_ref, b_ref,
                        wd_ref, bd_ref, wu_ref, bu_ref, o_ref, *, eps):
    """Fused: FFN (w1/relu/w2) -> +res -> LN -> bottleneck adapter (+res)."""
    x = x_ref[...]                                                # (tm, D) f32
    h = jnp.dot(x.astype(jnp.bfloat16), w1_ref[...],
                preferred_element_type=jnp.float32) + b1_ref[...]
    h = jnp.maximum(h, 0.0)
    f = jnp.dot(h.astype(jnp.bfloat16), w2_ref[...],
                preferred_element_type=jnp.float32) + b2_ref[...]
    y = _ln(x + f, g_ref[...], b_ref[...], eps)
    a = jnp.dot(y.astype(jnp.bfloat16), wd_ref[...],
                preferred_element_type=jnp.float32) + bd_ref[...]
    a = jnp.maximum(a, 0.0)
    o_ref[...] = y + jnp.dot(a.astype(jnp.bfloat16), wu_ref[...],
                             preferred_element_type=jnp.float32) + bu_ref[...]


def _gen_logsoftmax_kernel(x_ref, w_ref, b_ref, logit_ref, logp_ref):
    """Fused: generator projection + exact log_softmax (no HBM round trip)."""
    logit = jnp.dot(x_ref[...].astype(jnp.bfloat16), w_ref[...],
                    preferred_element_type=jnp.float32) + b_ref[...]
    logit_ref[...] = logit
    z = logit - jnp.max(logit, axis=-1, keepdims=True)
    lse = jnp.log(jnp.sum(jnp.exp(z), axis=-1, keepdims=True))    # exact f32 lse
    logp_ref[...] = z - lse


# ---------------------------------------------------------------------------
# Tiling / VMEM helpers
# ---------------------------------------------------------------------------
def _row_tile(m, bytes_per_row, budget_bytes=8 << 20, cap=1024):
    """Largest row tile dividing m whose per-row working set fits the budget."""
    fit = max(8, budget_bytes // max(bytes_per_row, 1))
    cap = int(min(cap, fit))
    if m <= cap:
        return m
    t = cap - (cap % 8)
    while t >= 8:                     # prefer multiples of 8 (sublane aligned)
        if m % t == 0:
            return t
        t -= 8
    t = min(cap, m)
    while t >= 1:                     # fallback: any divisor within budget
        if m % t == 0:
            return t
        t -= 1
    return m


def _vmem_limit(block_bytes, extra_bytes=0):
    """Explicit scoped-VMEM limit: double-buffered blocks + temporaries + slack,
    clamped to [32 MiB, 64 MiB] (>= default everywhere, <= v7x physical)."""
    need = 2 * block_bytes + extra_bytes
    return int(min(max(need + (8 << 20), 32 << 20), 64 << 20))


# ---------------------------------------------------------------------------
# Pallas wrappers
# ---------------------------------------------------------------------------
def attention_block(xq, xkv, mask_bias, p, ln_g, ln_b, n_heads, *, is_self,
                    eps=_LN_EPS):
    B, Sq, D = xq.shape
    Sk = xkv.shape[1]
    Mq = mask_bias.shape[1]               # 1 (padding mask) or Sq (causal mask)

    row_bytes = 4 * (8 * D + 3 * n_heads * Sk)          # per-query-row estimate
    tq = _row_tile(Sq, row_bytes, budget_bytes=6 << 20, cap=256)
    fuse_qkv = bool(is_self) and (tq == Sq)             # K/V need the full seq
    Mqb = 1 if Mq == 1 else tq

    # bf16 weights at the pallas_call boundary: halves weight DMA + VMEM.
    wqkv = p["wqkv"].astype(jnp.bfloat16)
    wo = p["wo"].astype(jnp.bfloat16)
    bqkv = p["bqkv"].reshape(1, 3 * D)
    bo = p["bo"].reshape(1, D)

    block_bytes = (tq * D * 4 + Sk * D * 4 + Mqb * Sk * 4
                   + D * 3 * D * 2 + 3 * D * 4 + D * D * 2 + 3 * D * 4
                   + tq * D * 4)
    extra = 4 * n_heads * tq * Sk * 4 + 6 * tq * D * 4

    mask_index = (lambda b, i: (b, 0, 0)) if Mq == 1 else (lambda b, i: (b, i, 0))
    kern = functools.partial(_attn_block_kernel, n_heads=n_heads, eps=eps,
                             fuse_qkv=fuse_qkv)
    return pl.pallas_call(
        kern,
        out_shape=jax.ShapeDtypeStruct((B, Sq, D), jnp.float32),
        grid=(B, Sq // tq),
        in_specs=[
            pl.BlockSpec((1, tq, D), lambda b, i: (b, i, 0)),
            pl.BlockSpec((1, Sk, D), lambda b, i: (b, 0, 0)),
            pl.BlockSpec((1, Mqb, Sk), mask_index),
            pl.BlockSpec((D, 3 * D), lambda b, i: (0, 0)),
            pl.BlockSpec((1, 3 * D), lambda b, i: (0, 0)),
            pl.BlockSpec((D, D), lambda b, i: (0, 0)),
            pl.BlockSpec((1, D), lambda b, i: (0, 0)),
            pl.BlockSpec((1, D), lambda b, i: (0, 0)),
            pl.BlockSpec((1, D), lambda b, i: (0, 0)),
        ],
        out_specs=pl.BlockSpec((1, tq, D), lambda b, i: (b, i, 0)),
        compiler_params=pltpu.CompilerParams(
            dimension_semantics=("parallel", "parallel"),
            vmem_limit_bytes=_vmem_limit(block_bytes, extra)),
    )(xq, xkv, mask_bias, wqkv, bqkv, wo, bo,
      ln_g.reshape(1, D), ln_b.reshape(1, D))


def ffn_adapter_block(x, ffn_p, ln_g, ln_b, wd, bd, wu, bu, eps=_LN_EPS):
    B, S, D = x.shape
    F = ffn_p["w1"].shape[-1]
    A = wd.shape[-1]
    x2 = x.reshape(-1, D)
    M = x2.shape[0]
    tm = _row_tile(M, 4 * (4 * D + 2 * F + A))

    w1 = ffn_p["w1"].astype(jnp.bfloat16)
    w2 = ffn_p["w2"].astype(jnp.bfloat16)
    wdb = wd.astype(jnp.bfloat16)
    wub = wu.astype(jnp.bfloat16)

    block_bytes = (2 * tm * D * 4 + D * F * 2 + F * 4 + F * D * 2 + D * 4
                   + 2 * D * 4 + D * A * 2 + A * 4 + A * D * 2 + D * 4)
    extra = tm * (2 * F + A + 2 * D) * 4
    # TODO(synk): at production d_ff, add a K grid axis over d_ff with a VMEM
    # accumulator (pl.when init/finalize) instead of holding (D,F)+(F,D) resident.

    kern = functools.partial(_ffn_adapter_kernel, eps=eps)
    out = pl.pallas_call(
        kern,
        out_shape=jax.ShapeDtypeStruct((M, D), jnp.float32),
        grid=(M // tm,),
        in_specs=[
            pl.BlockSpec((tm, D), lambda i: (i, 0)),
            pl.BlockSpec((D, F), lambda i: (0, 0)),
            pl.BlockSpec((1, F), lambda i: (0, 0)),
            pl.BlockSpec((F, D), lambda i: (0, 0)),
            pl.BlockSpec((1, D), lambda i: (0, 0)),
            pl.BlockSpec((1, D), lambda i: (0, 0)),
            pl.BlockSpec((1, D), lambda i: (0, 0)),
            pl.BlockSpec((D, A), lambda i: (0, 0)),
            pl.BlockSpec((1, A), lambda i: (0, 0)),
            pl.BlockSpec((A, D), lambda i: (0, 0)),
            pl.BlockSpec((1, D), lambda i: (0, 0)),
        ],
        out_specs=pl.BlockSpec((tm, D), lambda i: (i, 0)),
        compiler_params=pltpu.CompilerParams(
            dimension_semantics=("parallel",),
            vmem_limit_bytes=_vmem_limit(block_bytes, extra)),
    )(x2, w1, ffn_p["b1"].reshape(1, F), w2, ffn_p["b2"].reshape(1, D),
      ln_g.reshape(1, D), ln_b.reshape(1, D),
      wdb, bd.reshape(1, A), wub, bu.reshape(1, D))
    return out.reshape(B, S, D)


def generator_log_softmax(x, w, b):
    B, T, D = x.shape
    V = w.shape[-1]
    x2 = x.reshape(-1, D)
    M = x2.shape[0]
    tm = _row_tile(M, 4 * (D + 3 * V))
    wb = w.astype(jnp.bfloat16)
    block_bytes = tm * D * 4 + D * V * 2 + V * 4 + 2 * tm * V * 4
    extra = 2 * tm * V * 4
    # TODO(synk): at production vocab, tile V with a running max/logsumexp scratch
    # and emit the secondary (M,V) output in bf16 to halve HBM writeback.
    logit, logp = pl.pallas_call(
        _gen_logsoftmax_kernel,
        out_shape=(jax.ShapeDtypeStruct((M, V), jnp.float32),
                   jax.ShapeDtypeStruct((M, V), jnp.float32)),
        grid=(M // tm,),
        in_specs=[
            pl.BlockSpec((tm, D), lambda i: (i, 0)),
            pl.BlockSpec((D, V), lambda i: (0, 0)),
            pl.BlockSpec((1, V), lambda i: (0, 0)),
        ],
        out_specs=(pl.BlockSpec((tm, V), lambda i: (i, 0)),
                   pl.BlockSpec((tm, V), lambda i: (i, 0))),
        compiler_params=pltpu.CompilerParams(
            dimension_semantics=("parallel",),
            vmem_limit_bytes=_vmem_limit(block_bytes, extra)),
    )(x2, wb, b.reshape(1, V))
    return logit.reshape(B, T, V), logp.reshape(B, T, V)


# ---------------------------------------------------------------------------
# Model glue (embeddings, masks, layer stacking) — plain jnp
# ---------------------------------------------------------------------------
def embed(tokens, table, pe, d_model):
    x = jnp.take(table, tokens, axis=0) * math.sqrt(d_model)
    return x + pe[: tokens.shape[1]][None, :, :]


def mask_to_bias(mask):
    # keep natural shape (B, Mq, Sk); broadcast happens inside the kernel
    return (1.0 - mask.astype(jnp.float32)) * -1e9


def encoder_forward(x, src_mask, params, target_domain, cfg):
    B, S, D = x.shape
    self_bias = mask_to_bias(src_mask)                 # (B, 1, S) — never per-head
    pool_mask = src_mask.reshape(B, S, 1).astype(jnp.float32)
    adapter_outputs, mix_logits = [], []
    for lp in params["enc_layers"]:
        x = attention_block(x, x, self_bias, lp["self_attn"],
                            lp["ln1_g"], lp["ln1_b"], cfg["n_heads"], is_self=True)
        ad = lp["adapters"]
        x = ffn_adapter_block(x, lp["ffn"], lp["ln2_g"], lp["ln2_b"],
                              ad["wd"][target_domain], ad["bd"][target_domain],
                              ad["wu"][target_domain], ad["bu"][target_domain])
        adapter_outputs.append(x)
        # tiny pooled domain-mix classifier — stays in XLA (launch cost >> matmul)
        pooled = jnp.sum(x * pool_mask, axis=1) / jnp.maximum(
            jnp.sum(pool_mask, axis=1), 1.0)
        mix_logits.append(pooled @ lp["dom_w"] + lp["dom_b"])
    return {
        "memory": x,
        "mix_layer_logits": jnp.stack(mix_logits),           # (L, B, n_domains)
        "layer_adapter_output": jnp.stack(adapter_outputs),  # (L, B, S, D)
    }


def decoder_forward(x, memory, src_mask, trg_mask, params, target_domain, cfg):
    B, T, D = x.shape
    self_bias = mask_to_bias(trg_mask)                 # (B, T, T) causal
    cross_bias = mask_to_bias(src_mask)                # (B, 1, S)
    adapter_outputs, mix_logits = [], []
    for lp in params["dec_layers"]:
        x = attention_block(x, x, self_bias, lp["self_attn"],
                            lp["ln1_g"], lp["ln1_b"], cfg["n_heads"], is_self=True)
        x = attention_block(x, memory, cross_bias, lp["cross_attn"],
                            lp["ln2_g"], lp["ln2_b"], cfg["n_heads"], is_self=False)
        ad = lp["adapters"]
        x = ffn_adapter_block(x, lp["ffn"], lp["ln3_g"], lp["ln3_b"],
                              ad["wd"][target_domain], ad["bd"][target_domain],
                              ad["wu"][target_domain], ad["bu"][target_domain])
        adapter_outputs.append(x)
        # TODO(synk): decoder mix-classifier pooling uses an all-ones mask
        # (reference padding-mask pooling behavior unspecified).
        pooled = jnp.mean(x, axis=1)
        mix_logits.append(pooled @ lp["dom_w"] + lp["dom_b"])
    return {
        "logits": x,
        "mix_layer_logits": jnp.stack(mix_logits),
        "layer_adapter_output": jnp.stack(adapter_outputs),
    }


def transformer_forward(params, src, src_mask, trg_input, trg, trg_mask,
                        target_domain, cfg, mix_output=False, used_domain_list=None):
    # mix_output=False path: single target-domain adapter (mirrors default call).
    # TODO(synk): mix_output=True soft gating over used_domain_list adapters not implemented.
    del trg, mix_output, used_domain_list
    src_emb = embed(src, params["src_emb"], params["pe"], cfg["d_model"])
    enc = encoder_forward(src_emb, src_mask, params, target_domain, cfg)
    trg_emb = embed(trg_input, params["trg_emb"], params["pe"], cfg["d_model"])
    dec = decoder_forward(trg_emb, enc["memory"], src_mask, trg_mask, params,
                          target_domain, cfg)
    logit, log_prob = generator_log_softmax(dec["logits"], params["gen_w"], params["gen_b"])
    return {
        "logit": logit,
        "log_prob": log_prob,
        "enc_mix_layer_logits": enc["mix_layer_logits"],
        "enc_adapter_output": enc["layer_adapter_output"],
        "dec_adapter_output": dec["layer_adapter_output"],
        "dec_mix_layer_logits": dec["mix_layer_logits"],
    }


# ---------------------------------------------------------------------------
# Deterministic parameter init
# ---------------------------------------------------------------------------
def _dense(key, shape, scale=0.02):
    return (jax.random.normal(key, shape, jnp.float32) * scale).astype(jnp.float32)


def _sinusoidal_pe(max_len, d_model):
    pos = jnp.arange(max_len, dtype=jnp.float32)[:, None]
    i = jnp.arange(d_model, dtype=jnp.float32)[None, :]
    angle = pos / jnp.power(10000.0, (2.0 * jnp.floor(i / 2.0)) / d_model)
    pe = jnp.where(jnp.mod(i, 2.0) == 0.0, jnp.sin(angle), jnp.cos(angle))
    return pe.astype(jnp.float32)


def init_params(key, cfg):
    D, F, A, V = cfg["d_model"], cfg["d_ff"], cfg["adapter_dim"], cfg["vocab"]
    ND = cfg["n_domains"]
    keys = iter(jax.random.split(key, 512))

    def attn_params():
        # Q, K, V projection weights pre-concatenated (D, 3D): one lane-dense
        # MXU call on the self-attention path, sliced for cross-attention.
        return {
            "wqkv": _dense(next(keys), (D, 3 * D)),
            "bqkv": jnp.zeros((3 * D,), jnp.float32),
            "wo": _dense(next(keys), (D, D)), "bo": jnp.zeros((D,), jnp.float32),
        }

    def ffn_params():
        return {
            "w1": _dense(next(keys), (D, F)), "b1": jnp.zeros((F,), jnp.float32),
            "w2": _dense(next(keys), (F, D)), "b2": jnp.zeros((D,), jnp.float32),
        }

    def adapter_params():
        return {
            "wd": _dense(next(keys), (ND, D, A)), "bd": jnp.zeros((ND, A), jnp.float32),
            "wu": _dense(next(keys), (ND, A, D)), "bu": jnp.zeros((ND, D), jnp.float32),
        }

    def enc_layer():
        return {
            "self_attn": attn_params(), "ffn": ffn_params(), "adapters": adapter_params(),
            "ln1_g": jnp.ones((D,), jnp.float32), "ln1_b": jnp.zeros((D,), jnp.float32),
            "ln2_g": jnp.ones((D,), jnp.float32), "ln2_b": jnp.zeros((D,), jnp.float32),
            "dom_w": _dense(next(keys), (D, ND)), "dom_b": jnp.zeros((ND,), jnp.float32),
        }

    def dec_layer():
        lp = enc_layer()
        lp["cross_attn"] = attn_params()
        lp["ln3_g"] = jnp.ones((D,), jnp.float32)
        lp["ln3_b"] = jnp.zeros((D,), jnp.float32)
        return lp

    return {
        "src_emb": _dense(next(keys), (V, D), scale=1.0),
        "trg_emb": _dense(next(keys), (V, D), scale=1.0),
        "pe": _sinusoidal_pe(cfg["max_len"], D),
        "enc_layers": [enc_layer() for _ in range(cfg["n_layers"])],
        "dec_layers": [dec_layer() for _ in range(cfg["n_layers"])],
        "gen_w": _dense(next(keys), (D, V)),
        "gen_b": jnp.zeros((V,), jnp.float32),
    }


# ---------------------------------------------------------------------------
# Main
# ---------------------------------------------------------------------------
if __name__ == "__main__":
    cfg = dict(
        vocab=64, d_model=32, n_heads=4, d_ff=64, n_layers=2,
        adapter_dim=16, n_domains=3, max_len=32,
    )
    B, Ssrc, Strg = 2, 8, 8
    key = jax.random.PRNGKey(0)
    kp, ks, kt = jax.random.split(key, 3)

    params = init_params(kp, cfg)

    src = jax.random.randint(ks, (B, Ssrc), 0, cfg["vocab"])
    trg_input = jax.random.randint(kt, (B, Strg), 0, cfg["vocab"])
    trg = jnp.roll(trg_input, -1, axis=1)

    # src_mask: (B, 1, Ssrc); last two source positions of batch 1 are padding.
    src_mask = jnp.ones((B, 1, Ssrc), jnp.float32).at[1, 0, Ssrc - 2:].set(0.0)
    # trg_mask: (B, Strg, Strg) causal mask.
    causal = jnp.tril(jnp.ones((Strg, Strg), jnp.float32))
    trg_mask = jnp.broadcast_to(causal[None, :, :], (B, Strg, Strg))

    target_domain = 1  # index into adapter bank (module uses a named domain)

    fwd = jax.jit(functools.partial(
        transformer_forward, cfg=cfg, target_domain=target_domain,
        mix_output=False, used_domain_list=None))

    out = fwd(params, src, src_mask, trg_input, trg, trg_mask)
    jax.block_until_ready(out)

    assert out["logit"].shape == (B, Strg, cfg["vocab"])
    assert out["log_prob"].shape == (B, Strg, cfg["vocab"])
    assert out["enc_adapter_output"].shape == (cfg["n_layers"], B, Ssrc, cfg["d_model"])
    assert out["dec_adapter_output"].shape == (cfg["n_layers"], B, Strg, cfg["d_model"])
    assert out["enc_mix_layer_logits"].shape == (cfg["n_layers"], B, cfg["n_domains"])
    assert out["dec_mix_layer_logits"].shape == (cfg["n_layers"], B, cfg["n_domains"])
    # log_softmax sanity: each row sums (in prob space) to ~1
    assert bool(jnp.allclose(jnp.sum(jnp.exp(out["log_prob"]), -1), 1.0, atol=1e-4))
    assert bool(jnp.all(jnp.isfinite(out["logit"])))

    print("KERNEL_OK")
</pallas_src>

<mosaic_0001>
module attributes {stable_mosaic.version = 11 : i64} {
  func.func @_attn_block_kernel(%arg0: i32, %arg1: i32, %arg2: memref<1x8x32xf32, #tpu.memory_space<vmem>>, %arg3: memref<1x8x32xf32, #tpu.memory_space<vmem>>, %arg4: memref<1x1x8xf32, #tpu.memory_space<vmem>>, %arg5: memref<32x96xbf16, #tpu.memory_space<vmem>>, %arg6: memref<1x96xf32, #tpu.memory_space<vmem>>, %arg7: memref<32x32xbf16, #tpu.memory_space<vmem>>, %arg8: memref<1x32xf32, #tpu.memory_space<vmem>>, %arg9: memref<1x32xf32, #tpu.memory_space<vmem>>, %arg10: memref<1x32xf32, #tpu.memory_space<vmem>>, %arg11: memref<1x8x32xf32, #tpu.memory_space<vmem>>) attributes {dimension_semantics = [#tpu.dimension_semantics<parallel>, #tpu.dimension_semantics<parallel>], iteration_bounds = array<i64: 2, 1>, scalar_prefetch = 0 : i64, scratch_operands = 0 : i64, tpu.core_type = #tpu.core_type<tc>, window_params = [{transform_indices = @transform_0, window_bounds = array<i64: 1, 8, 32>}, {transform_indices = @transform_1, window_bounds = array<i64: 1, 8, 32>}, {transform_indices = @transform_2, window_bounds = array<i64: 1, 1, 8>}, {pipeline_mode = #tpu.pipeline_mode<synchronous>, transform_indices = @transform_3, window_bounds = array<i64: 32, 96>}, {pipeline_mode = #tpu.pipeline_mode<synchronous>, transform_indices = @transform_4, window_bounds = array<i64: 1, 96>}, {pipeline_mode = #tpu.pipeline_mode<synchronous>, transform_indices = @transform_5, window_bounds = array<i64: 32, 32>}, {pipeline_mode = #tpu.pipeline_mode<synchronous>, transform_indices = @transform_6, window_bounds = array<i64: 1, 32>}, {pipeline_mode = #tpu.pipeline_mode<synchronous>, transform_indices = @transform_7, window_bounds = array<i64: 1, 32>}, {pipeline_mode = #tpu.pipeline_mode<synchronous>, transform_indices = @transform_8, window_bounds = array<i64: 1, 32>}, {transform_indices = @transform_9, window_bounds = array<i64: 1, 8, 32>}]} {
    %c0 = arith.constant 0 : index
    %c0_0 = arith.constant 0 : index
    %c0_1 = arith.constant 0 : index
    %0 = vector.load %arg2[%c0, %c0_0, %c0_1] : memref<1x8x32xf32, #tpu.memory_space<vmem>>, vector<1x8x32xf32>
    %1 = vector.shape_cast %0 : vector<1x8x32xf32> to vector<8x32xf32>
    %c0_2 = arith.constant 0 : index
    %c0_3 = arith.constant 0 : index
    %c0_4 = arith.constant 0 : index
    %2 = vector.load %arg4[%c0_2, %c0_3, %c0_4] : memref<1x1x8xf32, #tpu.memory_space<vmem>>, vector<1x1x8xf32>
    %3 = vector.shape_cast %2 : vector<1x1x8xf32> to vector<1x8xf32>
    %c0_5 = arith.constant 0 : index
    %c0_6 = arith.constant 0 : index
    %4 = vector.load %arg5[%c0_5, %c0_6] : memref<32x96xbf16, #tpu.memory_space<vmem>>, vector<32x96xbf16>
    %c0_7 = arith.constant 0 : index
    %c0_8 = arith.constant 0 : index
    %5 = vector.load %arg6[%c0_7, %c0_8] : memref<1x96xf32, #tpu.memory_space<vmem>>, vector<1x96xf32>
    %6 = arith.truncf %1 : vector<8x32xf32> to vector<8x32xbf16>
    %cst = arith.constant dense<0.000000e+00> : vector<8x96xf32>
    %7 = tpu.matmul %6, %4, %cst {dimension_numbers = #tpu.dot_dimension_numbers<[1], [0], [0], [1], [0, 0, 1, 1], [], []>} : vector<8x32xbf16>, vector<32x96xbf16>, vector<8x96xf32> -> vector<8x96xf32>
    %8 = vector.broadcast %5 : vector<1x96xf32> to vector<8x96xf32>
    %9 = arith.addf %7, %8 : vector<8x96xf32>
    %10 = vector.extract_strided_slice %9 {offsets = [0, 0], sizes = [8, 32], strides = [1, 1]} : vector<8x96xf32> to vector<8x32xf32>
    %11 = vector.extract_strided_slice %9 {offsets = [0, 32], sizes = [8, 32], strides = [1, 1]} : vector<8x96xf32> to vector<8x32xf32>
    %12 = vector.extract_strided_slice %9 {offsets = [0, 64], sizes = [8, 32], strides = [1, 1]} : vector<8x96xf32> to vector<8x32xf32>
    %13 = arith.truncf %10 : vector<8x32xf32> to vector<8x32xbf16>
    %14 = vector.shape_cast %13 : vector<8x32xbf16> to vector<8x4x8xbf16>
    %15 = tpu.transpose %14, [1, 0, 2] : vector<8x4x8xbf16> -> vector<4x8x8xbf16>
    %16 = arith.truncf %11 : vector<8x32xf32> to vector<8x32xbf16>
    %17 = vector.shape_cast %16 : vector<8x32xbf16> to vector<8x4x8xbf16>
    %18 = tpu.transpose %17, [1, 0, 2] : vector<8x4x8xbf16> -> vector<4x8x8xbf16>
    %19 = arith.truncf %12 : vector<8x32xf32> to vector<8x32xbf16>
    %20 = vector.shape_cast %19 : vector<8x32xbf16> to vector<8x4x8xbf16>
    %21 = tpu.transpose %20, [1, 0, 2] : vector<8x4x8xbf16> -> vector<4x8x8xbf16>
    "tpu.trace_start"() <{level = 10 : i32, message = "hqd,hkd->hqk"}> : () -> ()
    %cst_9 = arith.constant dense<0.000000e+00> : vector<4x8x8xf32>
    %22 = tpu.matmul %15, %18, %cst_9 {dimension_numbers = #tpu.dot_dimension_numbers<[2], [2], [1], [1], [0, 0, 0, 1, 1, 1], [0], [0]>} : vector<4x8x8xbf16>, vector<4x8x8xbf16>, vector<4x8x8xf32> -> vector<4x8x8xf32>
    "tpu.trace_stop"() : () -> ()
    %cst_10 = arith.constant 0.353553385 : f32
    %23 = vector.broadcast %cst_10 : f32 to vector<4x8x8xf32>
    %24 = arith.mulf %22, %23 : vector<4x8x8xf32>
    %25 = vector.shape_cast %3 : vector<1x8xf32> to vector<1x1x8xf32>
    %26 = vector.broadcast %25 : vector<1x1x8xf32> to vector<4x8x8xf32>
    %27 = arith.addf %24, %26 : vector<4x8x8xf32>
    %cst_11 = arith.constant dense<0xFF800000> : vector<4x8xf32>
    %28 = vector.multi_reduction <maximumf>, %27, %cst_11 [2] : vector<4x8x8xf32> to vector<4x8xf32>
    %29 = vector.shape_cast %28 : vector<4x8xf32> to vector<4x8x1xf32>
    %30 = vector.broadcast %29 : vector<4x8x1xf32> to vector<4x8x8xf32>
    %31 = arith.subf %27, %30 : vector<4x8x8xf32>
    %32 = math.exp %31 : vector<4x8x8xf32>
    %cst_12 = arith.constant dense<0.000000e+00> : vector<4x8xf32>
    %33 = vector.multi_reduction <add>, %32, %cst_12 [2] : vector<4x8x8xf32> to vector<4x8xf32>
    %34 = vector.shape_cast %33 : vector<4x8xf32> to vector<4x8x1xf32>
    %35 = vector.broadcast %34 : vector<4x8x1xf32> to vector<4x8x8xf32>
    %36 = arith.divf %32, %35 : vector<4x8x8xf32>
    %37 = arith.truncf %36 : vector<4x8x8xf32> to vector<4x8x8xbf16>
    "tpu.trace_start"() <{level = 10 : i32, message = "hqk,hkd->hqd"}> : () -> ()
    %cst_13 = arith.constant dense<0.000000e+00> : vector<4x8x8xf32>
    %38 = tpu.matmul %37, %21, %cst_13 {dimension_numbers = #tpu.dot_dimension_numbers<[2], [1], [1], [2], [0, 0, 0, 1, 1, 2], [0], [0]>} : vector<4x8x8xbf16>, vector<4x8x8xbf16>, vector<4x8x8xf32> -> vector<4x8x8xf32>
    "tpu.trace_stop"() : () -> ()
    %39 = tpu.transpose %38, [1, 0, 2] : vector<4x8x8xf32> -> vector<8x4x8xf32>
    %40 = vector.shape_cast %39 : vector<8x4x8xf32> to vector<8x32xf32>
    %41 = arith.truncf %40 : vector<8x32xf32> to vector<8x32xbf16>
    %c0_14 = arith.constant 0 : index
    %c0_15 = arith.constant 0 : index
    %42 = vector.load %arg7[%c0_14, %c0_15] : memref<32x32xbf16, #tpu.memory_space<vmem>>, vector<32x32xbf16>
    %cst_16 = arith.constant dense<0.000000e+00> : vector<8x32xf32>
    %43 = tpu.matmul %41, %42, %cst_16 {dimension_numbers = #tpu.dot_dimension_numbers<[1], [0], [0], [1], [0, 0, 1, 1], [], []>} : vector<8x32xbf16>, vector<32x32xbf16>, vector<8x32xf32> -> vector<8x32xf32>
    %c0_17 = arith.constant 0 : index
    %c0_18 = arith.constant 0 : index
    %44 = vector.load %arg8[%c0_17, %c0_18] : memref<1x32xf32, #tpu.memory_space<vmem>>, vector<1x32xf32>
    %45 = vector.broadcast %44 : vector<1x32xf32> to vector<8x32xf32>
    %46 = arith.addf %43, %45 : vector<8x32xf32>
    %47 = arith.addf %1, %46 : vector<8x32xf32>
    %c0_19 = arith.constant 0 : index
    %c0_20 = arith.constant 0 : index
    %48 = vector.load %arg9[%c0_19, %c0_20] : memref<1x32xf32, #tpu.memory_space<vmem>>, vector<1x32xf32>
    %c0_21 = arith.constant 0 : index
    %c0_22 = arith.constant 0 : index
    %49 = vector.load %arg10[%c0_21, %c0_22] : memref<1x32xf32, #tpu.memory_space<vmem>>, vector<1x32xf32>
    %cst_23 = arith.constant dense<0.000000e+00> : vector<8xf32>
    %50 = vector.multi_reduction <add>, %47, %cst_23 [1] : vector<8x32xf32> to vector<8xf32>
    %51 = vector.shape_cast %50 : vector<8xf32> to vector<8x1xf32>
    %cst_24 = arith.constant 3.200000e+01 : f32
    %52 = vector.broadcast %cst_24 : f32 to vector<8x1xf32>
    %53 = arith.divf %51, %52 : vector<8x1xf32>
    %54 = arith.mulf %47, %47 : vector<8x32xf32>
    %cst_25 = arith.constant dense<0.000000e+00> : vector<8xf32>
    %55 = vector.multi_reduction <add>, %54, %cst_25 [1] : vector<8x32xf32> to vector<8xf32>
    %56 = vector.shape_cast %55 : vector<8xf32> to vector<8x1xf32>
    %cst_26 = arith.constant 3.200000e+01 : f32
    %57 = vector.broadcast %cst_26 : f32 to vector<8x1xf32>
    %58 = arith.divf %56, %57 : vector<8x1xf32>
    %59 = arith.mulf %53, %53 : vector<8x1xf32>
    %60 = arith.subf %58, %59 : vector<8x1xf32>
    %cst_27 = arith.constant 0.000000e+00 : f32
    %61 = vector.broadcast %cst_27 : f32 to vector<8x1xf32>
    %62 = arith.maximumf %60, %61 : vector<8x1xf32>
    %63 = vector.broadcast %53 : vector<8x1xf32> to vector<8x32xf32>
    %64 = arith.subf %47, %63 : vector<8x32xf32>
    %cst_28 = arith.constant 9.99999974E-6 : f32
    %65 = vector.broadcast %cst_28 : f32 to vector<8x1xf32>
    %66 = arith.addf %62, %65 : vector<8x1xf32>
    %67 = math.rsqrt %66 : vector<8x1xf32>
    %68 = vector.broadcast %67 : vector<8x1xf32> to vector<8x32xf32>
    %69 = arith.mulf %64, %68 : vector<8x32xf32>
    %70 = vector.broadcast %48 : vector<1x32xf32> to vector<8x32xf32>
    %71 = arith.mulf %69, %70 : vector<8x32xf32>
    %72 = vector.broadcast %49 : vector<1x32xf32> to vector<8x32xf32>
    %73 = arith.addf %71, %72 : vector<8x32xf32>
    %c0_29 = arith.constant 0 : index
    %c0_30 = arith.constant 0 : index
    %c0_31 = arith.constant 0 : index
    %74 = vector.load %arg11[%c0_29, %c0_30, %c0_31] : memref<1x8x32xf32, #tpu.memory_space<vmem>>, vector<1x8x32xf32>
    %75 = vector.shape_cast %74 : vector<1x8x32xf32> to vector<8x32xf32>
    %76 = vector.shape_cast %73 : vector<8x32xf32> to vector<1x8x32xf32>
    tpu.vector_store %arg11[%c0_29, %c0_30, %c0_31], %76 {strides = array<i32>} : memref<1x8x32xf32, #tpu.memory_space<vmem>>, vector<1x8x32xf32>,
    return
  }
  func.func @transform_0(%arg0: i32, %arg1: i32) -> (i32, i32, i32) {
    %c0_i32 = arith.constant 0 : i32
    %c0_i32_0 = arith.constant 0 : i32
    return %arg0, %arg1, %c0_i32 : i32, i32, i32
  }
  func.func @transform_1(%arg0: i32, %arg1: i32) -> (i32, i32, i32) {
    %c0_i32 = arith.constant 0 : i32
    %c0_i32_0 = arith.constant 0 : i32
    %c0_i32_1 = arith.constant 0 : i32
    return %arg0, %c0_i32, %c0_i32_0 : i32, i32, i32
  }
  func.func @transform_2(%arg0: i32, %arg1: i32) -> (i32, i32, i32) {
    %c0_i32 = arith.constant 0 : i32
    %c0_i32_0 = arith.constant 0 : i32
    %c0_i32_1 = arith.constant 0 : i32
    return %arg0, %c0_i32, %c0_i32_0 : i32, i32, i32
  }
  func.func @transform_3(%arg0: i32, %arg1: i32) -> (i32, i32) {
    %c0_i32 = arith.constant 0 : i32
    %c0_i32_0 = arith.constant 0 : i32
    %c0_i32_1 = arith.constant 0 : i32
    return %c0_i32, %c0_i32_0 : i32, i32
  }
  func.func @transform_4(%arg0: i32, %arg1: i32) -> (i32, i32) {
    %c0_i32 = arith.constant 0 : i32
    %c0_i32_0 = arith.constant 0 : i32
    %c0_i32_1 = arith.constant 0 : i32
    return %c0_i32, %c0_i32_0 : i32, i32
  }
  func.func @transform_5(%arg0: i32, %arg1: i32) -> (i32, i32) {
    %c0_i32 = arith.constant 0 : i32
    %c0_i32_0 = arith.constant 0 : i32
    %c0_i32_1 = arith.constant 0 : i32
    return %c0_i32, %c0_i32_0 : i32, i32
  }
  func.func @transform_6(%arg0: i32, %arg1: i32) -> (i32, i32) {
    %c0_i32 = arith.constant 0 : i32
    %c0_i32_0 = arith.constant 0 : i32
    %c0_i32_1 = arith.constant 0 : i32
    return %c0_i32, %c0_i32_0 : i32, i32
  }
  func.func @transform_7(%arg0: i32, %arg1: i32) -> (i32, i32) {
    %c0_i32 = arith.constant 0 : i32
    %c0_i32_0 = arith.constant 0 : i32
    %c0_i32_1 = arith.constant 0 : i32
    return %c0_i32, %c0_i32_0 : i32, i32
  }
  func.func @transform_8(%arg0: i32, %arg1: i32) -> (i32, i32) {
    %c0_i32 = arith.constant 0 : i32
    %c0_i32_0 = arith.constant 0 : i32
    %c0_i32_1 = arith.constant 0 : i32
    return %c0_i32, %c0_i32_0 : i32, i32
  }
  func.func @transform_9(%arg0: i32, %arg1: i32) -> (i32, i32, i32) {
    %c0_i32 = arith.constant 0 : i32
    %c0_i32_0 = arith.constant 0 : i32
    return %arg0, %arg1, %c0_i32 : i32, i32, i32
  }
}

module attributes {stable_mosaic.version = 11 : i64} {
  func.func @_ffn_adapter_kernel(%arg0: i32, %arg1: memref<16x32xf32, #tpu.memory_space<vmem>>, %arg2: memref<32x64xbf16, #tpu.memory_space<vmem>>, %arg3: memref<1x64xf32, #tpu.memory_space<vmem>>, %arg4: memref<64x32xbf16, #tpu.memory_space<vmem>>, %arg5: memref<1x32xf32, #tpu.memory_space<vmem>>, %arg6: memref<1x32xf32, #tpu.memory_space<vmem>>, %arg7: memref<1x32xf32, #tpu.memory_space<vmem>>, %arg8: memref<32x16xbf16, #tpu.memory_space<vmem>>, %arg9: memref<1x16xf32, #tpu.memory_space<vmem>>, %arg10: memref<16x32xbf16, #tpu.memory_space<vmem>>, %arg11: memref<1x32xf32, #tpu.memory_space<vmem>>, %arg12: memref<16x32xf32, #tpu.memory_space<vmem>>) attributes {dimension_semantics = [#tpu.dimension_semantics<parallel>], iteration_bounds = array<i64: 1>, scalar_prefetch = 0 : i64, scratch_operands = 0 : i64, tpu.core_type = #tpu.core_type<tc>, window_params = [{transform_indices = @transform_0, window_bounds = array<i64: 16, 32>}, {pipeline_mode = #tpu.pipeline_mode<synchronous>, transform_indices = @transform_1, window_bounds = array<i64: 32, 64>}, {pipeline_mode = #tpu.pipeline_mode<synchronous>, transform_indices = @transform_2, window_bounds = array<i64: 1, 64>}, {pipeline_mode = #tpu.pipeline_mode<synchronous>, transform_indices = @transform_3, window_bounds = array<i64: 64, 32>}, {pipeline_mode = #tpu.pipeline_mode<synchronous>, transform_indices = @transform_4, window_bounds = array<i64: 1, 32>}, {pipeline_mode = #tpu.pipeline_mode<synchronous>, transform_indices = @transform_5, window_bounds = array<i64: 1, 32>}, {pipeline_mode = #tpu.pipeline_mode<synchronous>, transform_indices = @transform_6, window_bounds = array<i64: 1, 32>}, {pipeline_mode = #tpu.pipeline_mode<synchronous>, transform_indices = @transform_7, window_bounds = array<i64: 32, 16>}, {pipeline_mode = #tpu.pipeline_mode<synchronous>, transform_indices = @transform_8, window_bounds = array<i64: 1, 16>}, {pipeline_mode = #tpu.pipeline_mode<synchronous>, transform_indices = @transform_9, window_bounds = array<i64: 16, 32>}, {pipeline_mode = #tpu.pipeline_mode<synchronous>, transform_indices = @transform_10, window_bounds = array<i64: 1, 32>}, {transform_indices = @transform_11, window_bounds = array<i64: 16, 32>}]} {
    %c0 = arith.constant 0 : index
    %c0_0 = arith.constant 0 : index
    %0 = vector.load %arg1[%c0, %c0_0] : memref<16x32xf32, #tpu.memory_space<vmem>>, vector<16x32xf32>
    %1 = arith.truncf %0 : vector<16x32xf32> to vector<16x32xbf16>
    %c0_1 = arith.constant 0 : index
    %c0_2 = arith.constant 0 : index
    %2 = vector.load %arg2[%c0_1, %c0_2] : memref<32x64xbf16, #tpu.memory_space<vmem>>, vector<32x64xbf16>
    %cst = arith.constant dense<0.000000e+00> : vector<16x64xf32>
    %3 = tpu.matmul %1, %2, %cst {dimension_numbers = #tpu.dot_dimension_numbers<[1], [0], [0], [1], [0, 0, 1, 1], [], []>} : vector<16x32xbf16>, vector<32x64xbf16>, vector<16x64xf32> -> vector<16x64xf32>
    %c0_3 = arith.constant 0 : index
    %c0_4 = arith.constant 0 : index
    %4 = vector.load %arg3[%c0_3, %c0_4] : memref<1x64xf32, #tpu.memory_space<vmem>>, vector<1x64xf32>
    %5 = vector.broadcast %4 : vector<1x64xf32> to vector<16x64xf32>
    %6 = arith.addf %3, %5 : vector<16x64xf32>
    %cst_5 = arith.constant 0.000000e+00 : f32
    %7 = vector.broadcast %cst_5 : f32 to vector<16x64xf32>
    %8 = arith.maximumf %6, %7 : vector<16x64xf32>
    %9 = arith.truncf %8 : vector<16x64xf32> to vector<16x64xbf16>
    %c0_6 = arith.constant 0 : index
    %c0_7 = arith.constant 0 : index
    %10 = vector.load %arg4[%c0_6, %c0_7] : memref<64x32xbf16, #tpu.memory_space<vmem>>, vector<64x32xbf16>
    %cst_8 = arith.constant dense<0.000000e+00> : vector<16x32xf32>
    %11 = tpu.matmul %9, %10, %cst_8 {dimension_numbers = #tpu.dot_dimension_numbers<[1], [0], [0], [1], [0, 0, 1, 1], [], []>} : vector<16x64xbf16>, vector<64x32xbf16>, vector<16x32xf32> -> vector<16x32xf32>
    %c0_9 = arith.constant 0 : index
    %c0_10 = arith.constant 0 : index
    %12 = vector.load %arg5[%c0_9, %c0_10] : memref<1x32xf32, #tpu.memory_space<vmem>>, vector<1x32xf32>
    %13 = vector.broadcast %12 : vector<1x32xf32> to vector<16x32xf32>
    %14 = arith.addf %11, %13 : vector<16x32xf32>
    %15 = arith.addf %0, %14 : vector<16x32xf32>
    %c0_11 = arith.constant 0 : index
    %c0_12 = arith.constant 0 : index
    %16 = vector.load %arg6[%c0_11, %c0_12] : memref<1x32xf32, #tpu.memory_space<vmem>>, vector<1x32xf32>
    %c0_13 = arith.constant 0 : index
    %c0_14 = arith.constant 0 : index
    %17 = vector.load %arg7[%c0_13, %c0_14] : memref<1x32xf32, #tpu.memory_space<vmem>>, vector<1x32xf32>
    %cst_15 = arith.constant dense<0.000000e+00> : vector<16xf32>
    %18 = vector.multi_reduction <add>, %15, %cst_15 [1] : vector<16x32xf32> to vector<16xf32>
    %19 = vector.shape_cast %18 : vector<16xf32> to vector<16x1xf32>
    %cst_16 = arith.constant 3.200000e+01 : f32
    %20 = vector.broadcast %cst_16 : f32 to vector<16x1xf32>
    %21 = arith.divf %19, %20 : vector<16x1xf32>
    %22 = arith.mulf %15, %15 : vector<16x32xf32>
    %cst_17 = arith.constant dense<0.000000e+00> : vector<16xf32>
    %23 = vector.multi_reduction <add>, %22, %cst_17 [1] : vector<16x32xf32> to vector<16xf32>
    %24 = vector.shape_cast %23 : vector<16xf32> to vector<16x1xf32>
    %cst_18 = arith.constant 3.200000e+01 : f32
    %25 = vector.broadcast %cst_18 : f32 to vector<16x1xf32>
    %26 = arith.divf %24, %25 : vector<16x1xf32>
    %27 = arith.mulf %21, %21 : vector<16x1xf32>
    %28 = arith.subf %26, %27 : vector<16x1xf32>
    %cst_19 = arith.constant 0.000000e+00 : f32
    %29 = vector.broadcast %cst_19 : f32 to vector<16x1xf32>
    %30 = arith.maximumf %28, %29 : vector<16x1xf32>
    %31 = vector.broadcast %21 : vector<16x1xf32> to vector<16x32xf32>
    %32 = arith.subf %15, %31 : vector<16x32xf32>
    %cst_20 = arith.constant 9.99999974E-6 : f32
    %33 = vector.broadcast %cst_20 : f32 to vector<16x1xf32>
    %34 = arith.addf %30, %33 : vector<16x1xf32>
    %35 = math.rsqrt %34 : vector<16x1xf32>
    %36 = vector.broadcast %35 : vector<16x1xf32> to vector<16x32xf32>
    %37 = arith.mulf %32, %36 : vector<16x32xf32>
    %38 = vector.broadcast %16 : vector<1x32xf32> to vector<16x32xf32>
    %39 = arith.mulf %37, %38 : vector<16x32xf32>
    %40 = vector.broadcast %17 : vector<1x32xf32> to vector<16x32xf32>
    %41 = arith.addf %39, %40 : vector<16x32xf32>
    %42 = arith.truncf %41 : vector<16x32xf32> to vector<16x32xbf16>
    %c0_21 = arith.constant 0 : index
    %c0_22 = arith.constant 0 : index
    %43 = vector.load %arg8[%c0_21, %c0_22] : memref<32x16xbf16, #tpu.memory_space<vmem>>, vector<32x16xbf16>
    %cst_23 = arith.constant dense<0.000000e+00> : vector<16x16xf32>
    %44 = tpu.matmul %42, %43, %cst_23 {dimension_numbers = #tpu.dot_dimension_numbers<[1], [0], [0], [1], [0, 0, 1, 1], [], []>} : vector<16x32xbf16>, vector<32x16xbf16>, vector<16x16xf32> -> vector<16x16xf32>
    %c0_24 = arith.constant 0 : index
    %c0_25 = arith.constant 0 : index
    %45 = vector.load %arg9[%c0_24, %c0_25] : memref<1x16xf32, #tpu.memory_space<vmem>>, vector<1x16xf32>
    %46 = vector.broadcast %45 : vector<1x16xf32> to vector<16x16xf32>
    %47 = arith.addf %44, %46 : vector<16x16xf32>
    %cst_26 = arith.constant 0.000000e+00 : f32
    %48 = vector.broadcast %cst_26 : f32 to vector<16x16xf32>
    %49 = arith.maximumf %47, %48 : vector<16x16xf32>
    %50 = arith.truncf %49 : vector<16x16xf32> to vector<16x16xbf16>
    %c0_27 = arith.constant 0 : index
    %c0_28 = arith.constant 0 : index
    %51 = vector.load %arg10[%c0_27, %c0_28] : memref<16x32xbf16, #tpu.memory_space<vmem>>, vector<16x32xbf16>
    %cst_29 = arith.constant dense<0.000000e+00> : vector<16x32xf32>
    %52 = tpu.matmul %50, %51, %cst_29 {dimension_numbers = #tpu.dot_dimension_numbers<[1], [0], [0], [1], [0, 0, 1, 1], [], []>} : vector<16x16xbf16>, vector<16x32xbf16>, vector<16x32xf32> -> vector<16x32xf32>
    %53 = arith.addf %41, %52 : vector<16x32xf32>
    %c0_30 = arith.constant 0 : index
    %c0_31 = arith.constant 0 : index
    %54 = vector.load %arg11[%c0_30, %c0_31] : memref<1x32xf32, #tpu.memory_space<vmem>>, vector<1x32xf32>
    %55 = vector.broadcast %54 : vector<1x32xf32> to vector<16x32xf32>
    %56 = arith.addf %53, %55 : vector<16x32xf32>
    %c0_32 = arith.constant 0 : index
    %c0_33 = arith.constant 0 : index
    %57 = vector.load %arg12[%c0_32, %c0_33] : memref<16x32xf32, #tpu.memory_space<vmem>>, vector<16x32xf32>
    tpu.vector_store %arg12[%c0_32, %c0_33], %56 {strides = array<i32>} : memref<16x32xf32, #tpu.memory_space<vmem>>, vector<16x32xf32>,
    return
  }
  func.func @transform_0(%arg0: i32) -> (i32, i32) {
    %c0_i32 = arith.constant 0 : i32
    %c0_i32_0 = arith.constant 0 : i32
    return %arg0, %c0_i32 : i32, i32
  }
  func.func @transform_1(%arg0: i32) -> (i32, i32) {
    %c0_i32 = arith.constant 0 : i32
    %c0_i32_0 = arith.constant 0 : i32
    %c0_i32_1 = arith.constant 0 : i32
    return %c0_i32, %c0_i32_0 : i32, i32
  }
  func.func @transform_2(%arg0: i32) -> (i32, i32) {
    %c0_i32 = arith.constant 0 : i32
    %c0_i32_0 = arith.constant 0 : i32
    %c0_i32_1 = arith.constant 0 : i32
    return %c0_i32, %c0_i32_0 : i32, i32
  }
  func.func @transform_3(%arg0: i32) -> (i32, i32) {
    %c0_i32 = arith.constant 0 : i32
    %c0_i32_0 = arith.constant 0 : i32
    %c0_i32_1 = arith.constant 0 : i32
    return %c0_i32, %c0_i32_0 : i32, i32
  }
  func.func @transform_4(%arg0: i32) -> (i32, i32) {
    %c0_i32 = arith.constant 0 : i32
    %c0_i32_0 = arith.constant 0 : i32
    %c0_i32_1 = arith.constant 0 : i32
    return %c0_i32, %c0_i32_0 : i32, i32
  }
  func.func @transform_5(%arg0: i32) -> (i32, i32) {
    %c0_i32 = arith.constant 0 : i32
    %c0_i32_0 = arith.constant 0 : i32
    %c0_i32_1 = arith.constant 0 : i32
    return %c0_i32, %c0_i32_0 : i32, i32
  }
  func.func @transform_6(%arg0: i32) -> (i32, i32) {
    %c0_i32 = arith.constant 0 : i32
    %c0_i32_0 = arith.constant 0 : i32
    %c0_i32_1 = arith.constant 0 : i32
    return %c0_i32, %c0_i32_0 : i32, i32
  }
  func.func @transform_7(%arg0: i32) -> (i32, i32) {
    %c0_i32 = arith.constant 0 : i32
    %c0_i32_0 = arith.constant 0 : i32
    %c0_i32_1 = arith.constant 0 : i32
    return %c0_i32, %c0_i32_0 : i32, i32
  }
  func.func @transform_8(%arg0: i32) -> (i32, i32) {
    %c0_i32 = arith.constant 0 : i32
    %c0_i32_0 = arith.constant 0 : i32
    %c0_i32_1 = arith.constant 0 : i32
    return %c0_i32, %c0_i32_0 : i32, i32
  }
  func.func @transform_9(%arg0: i32) -> (i32, i32) {
    %c0_i32 = arith.constant 0 : i32
    %c0_i32_0 = arith.constant 0 : i32
    %c0_i32_1 = arith.constant 0 : i32
    return %c0_i32, %c0_i32_0 : i32, i32
  }
  func.func @transform_10(%arg0: i32) -> (i32, i32) {
    %c0_i32 = arith.constant 0 : i32
    %c0_i32_0 = arith.constant 0 : i32
    %c0_i32_1 = arith.constant 0 : i32
    return %c0_i32, %c0_i32_0 : i32, i32
  }
  func.func @transform_11(%arg0: i32) -> (i32, i32) {
    %c0_i32 = arith.constant 0 : i32
    %c0_i32_0 = arith.constant 0 : i32
    return %arg0, %c0_i32 : i32, i32
  }
}

module attributes {stable_mosaic.version = 11 : i64} {
  func.func @_attn_block_kernel(%arg0: i32, %arg1: i32, %arg2: memref<1x8x32xf32, #tpu.memory_space<vmem>>, %arg3: memref<1x8x32xf32, #tpu.memory_space<vmem>>, %arg4: memref<1x1x8xf32, #tpu.memory_space<vmem>>, %arg5: memref<32x96xbf16, #tpu.memory_space<vmem>>, %arg6: memref<1x96xf32, #tpu.memory_space<vmem>>, %arg7: memref<32x32xbf16, #tpu.memory_space<vmem>>, %arg8: memref<1x32xf32, #tpu.memory_space<vmem>>, %arg9: memref<1x32xf32, #tpu.memory_space<vmem>>, %arg10: memref<1x32xf32, #tpu.memory_space<vmem>>, %arg11: memref<1x8x32xf32, #tpu.memory_space<vmem>>) attributes {dimension_semantics = [#tpu.dimension_semantics<parallel>, #tpu.dimension_semantics<parallel>], iteration_bounds = array<i64: 2, 1>, scalar_prefetch = 0 : i64, scratch_operands = 0 : i64, tpu.core_type = #tpu.core_type<tc>, window_params = [{transform_indices = @transform_0, window_bounds = array<i64: 1, 8, 32>}, {transform_indices = @transform_1, window_bounds = array<i64: 1, 8, 32>}, {transform_indices = @transform_2, window_bounds = array<i64: 1, 1, 8>}, {pipeline_mode = #tpu.pipeline_mode<synchronous>, transform_indices = @transform_3, window_bounds = array<i64: 32, 96>}, {pipeline_mode = #tpu.pipeline_mode<synchronous>, transform_indices = @transform_4, window_bounds = array<i64: 1, 96>}, {pipeline_mode = #tpu.pipeline_mode<synchronous>, transform_indices = @transform_5, window_bounds = array<i64: 32, 32>}, {pipeline_mode = #tpu.pipeline_mode<synchronous>, transform_indices = @transform_6, window_bounds = array<i64: 1, 32>}, {pipeline_mode = #tpu.pipeline_mode<synchronous>, transform_indices = @transform_7, window_bounds = array<i64: 1, 32>}, {pipeline_mode = #tpu.pipeline_mode<synchronous>, transform_indices = @transform_8, window_bounds = array<i64: 1, 32>}, {transform_indices = @transform_9, window_bounds = array<i64: 1, 8, 32>}]} {
    %c0 = arith.constant 0 : index
    %c0_0 = arith.constant 0 : index
    %c0_1 = arith.constant 0 : index
    %0 = vector.load %arg2[%c0, %c0_0, %c0_1] : memref<1x8x32xf32, #tpu.memory_space<vmem>>, vector<1x8x32xf32>
    %1 = vector.shape_cast %0 : vector<1x8x32xf32> to vector<8x32xf32>
    %c0_2 = arith.constant 0 : index
    %c0_3 = arith.constant 0 : index
    %c0_4 = arith.constant 0 : index
    %2 = vector.load %arg4[%c0_2, %c0_3, %c0_4] : memref<1x1x8xf32, #tpu.memory_space<vmem>>, vector<1x1x8xf32>
    %3 = vector.shape_cast %2 : vector<1x1x8xf32> to vector<1x8xf32>
    %c0_5 = arith.constant 0 : index
    %c0_6 = arith.constant 0 : index
    %4 = vector.load %arg5[%c0_5, %c0_6] : memref<32x96xbf16, #tpu.memory_space<vmem>>, vector<32x96xbf16>
    %c0_7 = arith.constant 0 : index
    %c0_8 = arith.constant 0 : index
    %5 = vector.load %arg6[%c0_7, %c0_8] : memref<1x96xf32, #tpu.memory_space<vmem>>, vector<1x96xf32>
    %6 = arith.truncf %1 : vector<8x32xf32> to vector<8x32xbf16>
    %c0_9 = arith.constant 0 : index
    %c0_10 = arith.constant 0 : index
    %c0_11 = arith.constant 0 : index
    %7 = vector.load %arg3[%c0_9, %c0_10, %c0_11] : memref<1x8x32xf32, #tpu.memory_space<vmem>>, vector<1x8x32xf32>
    %8 = vector.shape_cast %7 : vector<1x8x32xf32> to vector<8x32xf32>
    %9 = arith.truncf %8 : vector<8x32xf32> to vector<8x32xbf16>
    %10 = vector.extract_strided_slice %4 {offsets = [0, 0], sizes = [32, 32], strides = [1, 1]} : vector<32x96xbf16> to vector<32x32xbf16>
    %cst = arith.constant dense<0.000000e+00> : vector<8x32xf32>
    %11 = tpu.matmul %6, %10, %cst {dimension_numbers = #tpu.dot_dimension_numbers<[1], [0], [0], [1], [0, 0, 1, 1], [], []>} : vector<8x32xbf16>, vector<32x32xbf16>, vector<8x32xf32> -> vector<8x32xf32>
    %12 = vector.extract_strided_slice %5 {offsets = [0, 0], sizes = [1, 32], strides = [1, 1]} : vector<1x96xf32> to vector<1x32xf32>
    %13 = vector.broadcast %12 : vector<1x32xf32> to vector<8x32xf32>
    %14 = arith.addf %11, %13 : vector<8x32xf32>
    %15 = vector.extract_strided_slice %4 {offsets = [0, 32], sizes = [32, 64], strides = [1, 1]} : vector<32x96xbf16> to vector<32x64xbf16>
    %cst_12 = arith.constant dense<0.000000e+00> : vector<8x64xf32>
    %16 = tpu.matmul %9, %15, %cst_12 {dimension_numbers = #tpu.dot_dimension_numbers<[1], [0], [0], [1], [0, 0, 1, 1], [], []>} : vector<8x32xbf16>, vector<32x64xbf16>, vector<8x64xf32> -> vector<8x64xf32>
    %17 = vector.extract_strided_slice %5 {offsets = [0, 32], sizes = [1, 64], strides = [1, 1]} : vector<1x96xf32> to vector<1x64xf32>
    %18 = vector.broadcast %17 : vector<1x64xf32> to vector<8x64xf32>
    %19 = arith.addf %16, %18 : vector<8x64xf32>
    %20 = vector.extract_strided_slice %19 {offsets = [0, 0], sizes = [8, 32], strides = [1, 1]} : vector<8x64xf32> to vector<8x32xf32>
    %21 = vector.extract_strided_slice %19 {offsets = [0, 32], sizes = [8, 32], strides = [1, 1]} : vector<8x64xf32> to vector<8x32xf32>
    %22 = arith.truncf %14 : vector<8x32xf32> to vector<8x32xbf16>
    %23 = vector.shape_cast %22 : vector<8x32xbf16> to vector<8x4x8xbf16>
    %24 = tpu.transpose %23, [1, 0, 2] : vector<8x4x8xbf16> -> vector<4x8x8xbf16>
    %25 = arith.truncf %20 : vector<8x32xf32> to vector<8x32xbf16>
    %26 = vector.shape_cast %25 : vector<8x32xbf16> to vector<8x4x8xbf16>
    %27 = tpu.transpose %26, [1, 0, 2] : vector<8x4x8xbf16> -> vector<4x8x8xbf16>
    %28 = arith.truncf %21 : vector<8x32xf32> to vector<8x32xbf16>
    %29 = vector.shape_cast %28 : vector<8x32xbf16> to vector<8x4x8xbf16>
    %30 = tpu.transpose %29, [1, 0, 2] : vector<8x4x8xbf16> -> vector<4x8x8xbf16>
    "tpu.trace_start"() <{level = 10 : i32, message = "hqd,hkd->hqk"}> : () -> ()
    %cst_13 = arith.constant dense<0.000000e+00> : vector<4x8x8xf32>
    %31 = tpu.matmul %24, %27, %cst_13 {dimension_numbers = #tpu.dot_dimension_numbers<[2], [2], [1], [1], [0, 0, 0, 1, 1, 1], [0], [0]>} : vector<4x8x8xbf16>, vector<4x8x8xbf16>, vector<4x8x8xf32> -> vector<4x8x8xf32>
    "tpu.trace_stop"() : () -> ()
    %cst_14 = arith.constant 0.353553385 : f32
    %32 = vector.broadcast %cst_14 : f32 to vector<4x8x8xf32>
    %33 = arith.mulf %31, %32 : vector<4x8x8xf32>
    %34 = vector.shape_cast %3 : vector<1x8xf32> to vector<1x1x8xf32>
    %35 = vector.broadcast %34 : vector<1x1x8xf32> to vector<4x8x8xf32>
    %36 = arith.addf %33, %35 : vector<4x8x8xf32>
    %cst_15 = arith.constant dense<0xFF800000> : vector<4x8xf32>
    %37 = vector.multi_reduction <maximumf>, %36, %cst_15 [2] : vector<4x8x8xf32> to vector<4x8xf32>
    %38 = vector.shape_cast %37 : vector<4x8xf32> to vector<4x8x1xf32>
    %39 = vector.broadcast %38 : vector<4x8x1xf32> to vector<4x8x8xf32>
    %40 = arith.subf %36, %39 : vector<4x8x8xf32>
    %41 = math.exp %40 : vector<4x8x8xf32>
    %cst_16 = arith.constant dense<0.000000e+00> : vector<4x8xf32>
    %42 = vector.multi_reduction <add>, %41, %cst_16 [2] : vector<4x8x8xf32> to vector<4x8xf32>
    %43 = vector.shape_cast %42 : vector<4x8xf32> to vector<4x8x1xf32>
    %44 = vector.broadcast %43 : vector<4x8x1xf32> to vector<4x8x8xf32>
    %45 = arith.divf %41, %44 : vector<4x8x8xf32>
    %46 = arith.truncf %45 : vector<4x8x8xf32> to vector<4x8x8xbf16>
    "tpu.trace_start"() <{level = 10 : i32, message = "hqk,hkd->hqd"}> : () -> ()
    %cst_17 = arith.constant dense<0.000000e+00> : vector<4x8x8xf32>
    %47 = tpu.matmul %46, %30, %cst_17 {dimension_numbers = #tpu.dot_dimension_numbers<[2], [1], [1], [2], [0, 0, 0, 1, 1, 2], [0], [0]>} : vector<4x8x8xbf16>, vector<4x8x8xbf16>, vector<4x8x8xf32> -> vector<4x8x8xf32>
    "tpu.trace_stop"() : () -> ()
    %48 = tpu.transpose %47, [1, 0, 2] : vector<4x8x8xf32> -> vector<8x4x8xf32>
    %49 = vector.shape_cast %48 : vector<8x4x8xf32> to vector<8x32xf32>
    %50 = arith.truncf %49 : vector<8x32xf32> to vector<8x32xbf16>
    %c0_18 = arith.constant 0 : index
    %c0_19 = arith.constant 0 : index
    %51 = vector.load %arg7[%c0_18, %c0_19] : memref<32x32xbf16, #tpu.memory_space<vmem>>, vector<32x32xbf16>
    %cst_20 = arith.constant dense<0.000000e+00> : vector<8x32xf32>
    %52 = tpu.matmul %50, %51, %cst_20 {dimension_numbers = #tpu.dot_dimension_numbers<[1], [0], [0], [1], [0, 0, 1, 1], [], []>} : vector<8x32xbf16>, vector<32x32xbf16>, vector<8x32xf32> -> vector<8x32xf32>
    %c0_21 = arith.constant 0 : index
    %c0_22 = arith.constant 0 : index
    %53 = vector.load %arg8[%c0_21, %c0_22] : memref<1x32xf32, #tpu.memory_space<vmem>>, vector<1x32xf32>
    %54 = vector.broadcast %53 : vector<1x32xf32> to vector<8x32xf32>
    %55 = arith.addf %52, %54 : vector<8x32xf32>
    %56 = arith.addf %1, %55 : vector<8x32xf32>
    %c0_23 = arith.constant 0 : index
    %c0_24 = arith.constant 0 : index
    %57 = vector.load %arg9[%c0_23, %c0_24] : memref<1x32xf32, #tpu.memory_space<vmem>>, vector<1x32xf32>
    %c0_25 = arith.constant 0 : index
    %c0_26 = arith.constant 0 : index
    %58 = vector.load %arg10[%c0_25, %c0_26] : memref<1x32xf32, #tpu.memory_space<vmem>>, vector<1x32xf32>
    %cst_27 = arith.constant dense<0.000000e+00> : vector<8xf32>
    %59 = vector.multi_reduction <add>, %56, %cst_27 [1] : vector<8x32xf32> to vector<8xf32>
    %60 = vector.shape_cast %59 : vector<8xf32> to vector<8x1xf32>
    %cst_28 = arith.constant 3.200000e+01 : f32
    %61 = vector.broadcast %cst_28 : f32 to vector<8x1xf32>
    %62 = arith.divf %60, %61 : vector<8x1xf32>
    %63 = arith.mulf %56, %56 : vector<8x32xf32>
    %cst_29 = arith.constant dense<0.000000e+00> : vector<8xf32>
    %64 = vector.multi_reduction <add>, %63, %cst_29 [1] : vector<8x32xf32> to vector<8xf32>
    %65 = vector.shape_cast %64 : vector<8xf32> to vector<8x1xf32>
    %cst_30 = arith.constant 3.200000e+01 : f32
    %66 = vector.broadcast %cst_30 : f32 to vector<8x1xf32>
    %67 = arith.divf %65, %66 : vector<8x1xf32>
    %68 = arith.mulf %62, %62 : vector<8x1xf32>
    %69 = arith.subf %67, %68 : vector<8x1xf32>
    %cst_31 = arith.constant 0.000000e+00 : f32
    %70 = vector.broadcast %cst_31 : f32 to vector<8x1xf32>
    %71 = arith.maximumf %69, %70 : vector<8x1xf32>
    %72 = vector.broadcast %62 : vector<8x1xf32> to vector<8x32xf32>
    %73 = arith.subf %56, %72 : vector<8x32xf32>
    %cst_32 = arith.constant 9.99999974E-6 : f32
    %74 = vector.broadcast %cst_32 : f32 to vector<8x1xf32>
    %75 = arith.addf %71, %74 : vector<8x1xf32>
    %76 = math.rsqrt %75 : vector<8x1xf32>
    %77 = vector.broadcast %76 : vector<8x1xf32> to vector<8x32xf32>
    %78 = arith.mulf %73, %77 : vector<8x32xf32>
    %79 = vector.broadcast %57 : vector<1x32xf32> to vector<8x32xf32>
    %80 = arith.mulf %78, %79 : vector<8x32xf32>
    %81 = vector.broadcast %58 : vector<1x32xf32> to vector<8x32xf32>
    %82 = arith.addf %80, %81 : vector<8x32xf32>
    %c0_33 = arith.constant 0 : index
    %c0_34 = arith.constant 0 : index
    %c0_35 = arith.constant 0 : index
    %83 = vector.load %arg11[%c0_33, %c0_34, %c0_35] : memref<1x8x32xf32, #tpu.memory_space<vmem>>, vector<1x8x32xf32>
    %84 = vector.shape_cast %83 : vector<1x8x32xf32> to vector<8x32xf32>
    %85 = vector.shape_cast %82 : vector<8x32xf32> to vector<1x8x32xf32>
    tpu.vector_store %arg11[%c0_33, %c0_34, %c0_35], %85 {strides = array<i32>} : memref<1x8x32xf32, #tpu.memory_space<vmem>>, vector<1x8x32xf32>,
    return
  }
  func.func @transform_0(%arg0: i32, %arg1: i32) -> (i32, i32, i32) {
    %c0_i32 = arith.constant 0 : i32
    %c0_i32_0 = arith.constant 0 : i32
    return %arg0, %arg1, %c0_i32 : i32, i32, i32
  }
  func.func @transform_1(%arg0: i32, %arg1: i32) -> (i32, i32, i32) {
    %c0_i32 = arith.constant 0 : i32
    %c0_i32_0 = arith.constant 0 : i32
    %c0_i32_1 = arith.constant 0 : i32
    return %arg0, %c0_i32, %c0_i32_0 : i32, i32, i32
  }
  func.func @transform_2(%arg0: i32, %arg1: i32) -> (i32, i32, i32) {
    %c0_i32 = arith.constant 0 : i32
    %c0_i32_0 = arith.constant 0 : i32
    %c0_i32_1 = arith.constant 0 : i32
    return %arg0, %c0_i32, %c0_i32_0 : i32, i32, i32
  }
  func.func @transform_3(%arg0: i32, %arg1: i32) -> (i32, i32) {
    %c0_i32 = arith.constant 0 : i32
    %c0_i32_0 = arith.constant 0 : i32
    %c0_i32_1 = arith.constant 0 : i32
    return %c0_i32, %c0_i32_0 : i32, i32
  }
  func.func @transform_4(%arg0: i32, %arg1: i32) -> (i32, i32) {
    %c0_i32 = arith.constant 0 : i32
    %c0_i32_0 = arith.constant 0 : i32
    %c0_i32_1 = arith.constant 0 : i32
    return %c0_i32, %c0_i32_0 : i32, i32
  }
  func.func @transform_5(%arg0: i32, %arg1: i32) -> (i32, i32) {
    %c0_i32 = arith.constant 0 : i32
    %c0_i32_0 = arith.constant 0 : i32
    %c0_i32_1 = arith.constant 0 : i32
    return %c0_i32, %c0_i32_0 : i32, i32
  }
  func.func @transform_6(%arg0: i32, %arg1: i32) -> (i32, i32) {
    %c0_i32 = arith.constant 0 : i32
    %c0_i32_0 = arith.constant 0 : i32
    %c0_i32_1 = arith.constant 0 : i32
    return %c0_i32, %c0_i32_0 : i32, i32
  }
  func.func @transform_7(%arg0: i32, %arg1: i32) -> (i32, i32) {
    %c0_i32 = arith.constant 0 : i32
    %c0_i32_0 = arith.constant 0 : i32
    %c0_i32_1 = arith.constant 0 : i32
    return %c0_i32, %c0_i32_0 : i32, i32
  }
  func.func @transform_8(%arg0: i32, %arg1: i32) -> (i32, i32) {
    %c0_i32 = arith.constant 0 : i32
    %c0_i32_0 = arith.constant 0 : i32
    %c0_i32_1 = arith.constant 0 : i32
    return %c0_i32, %c0_i32_0 : i32, i32
  }
  func.func @transform_9(%arg0: i32, %arg1: i32) -> (i32, i32, i32) {
    %c0_i32 = arith.constant 0 : i32
    %c0_i32_0 = arith.constant 0 : i32
    return %arg0, %arg1, %c0_i32 : i32, i32, i32
  }
}

module attributes {stable_mosaic.version = 11 : i64} {
  func.func @_attn_block_kernel(%arg0: i32, %arg1: i32, %arg2: memref<1x8x32xf32, #tpu.memory_space<vmem>>, %arg3: memref<1x8x32xf32, #tpu.memory_space<vmem>>, %arg4: memref<1x8x8xf32, #tpu.memory_space<vmem>>, %arg5: memref<32x96xbf16, #tpu.memory_space<vmem>>, %arg6: memref<1x96xf32, #tpu.memory_space<vmem>>, %arg7: memref<32x32xbf16, #tpu.memory_space<vmem>>, %arg8: memref<1x32xf32, #tpu.memory_space<vmem>>, %arg9: memref<1x32xf32, #tpu.memory_space<vmem>>, %arg10: memref<1x32xf32, #tpu.memory_space<vmem>>, %arg11: memref<1x8x32xf32, #tpu.memory_space<vmem>>) attributes {dimension_semantics = [#tpu.dimension_semantics<parallel>, #tpu.dimension_semantics<parallel>], iteration_bounds = array<i64: 2, 1>, scalar_prefetch = 0 : i64, scratch_operands = 0 : i64, tpu.core_type = #tpu.core_type<tc>, window_params = [{transform_indices = @transform_0, window_bounds = array<i64: 1, 8, 32>}, {transform_indices = @transform_1, window_bounds = array<i64: 1, 8, 32>}, {transform_indices = @transform_2, window_bounds = array<i64: 1, 8, 8>}, {pipeline_mode = #tpu.pipeline_mode<synchronous>, transform_indices = @transform_3, window_bounds = array<i64: 32, 96>}, {pipeline_mode = #tpu.pipeline_mode<synchronous>, transform_indices = @transform_4, window_bounds = array<i64: 1, 96>}, {pipeline_mode = #tpu.pipeline_mode<synchronous>, transform_indices = @transform_5, window_bounds = array<i64: 32, 32>}, {pipeline_mode = #tpu.pipeline_mode<synchronous>, transform_indices = @transform_6, window_bounds = array<i64: 1, 32>}, {pipeline_mode = #tpu.pipeline_mode<synchronous>, transform_indices = @transform_7, window_bounds = array<i64: 1, 32>}, {pipeline_mode = #tpu.pipeline_mode<synchronous>, transform_indices = @transform_8, window_bounds = array<i64: 1, 32>}, {transform_indices = @transform_9, window_bounds = array<i64: 1, 8, 32>}]} {
    %c0 = arith.constant 0 : index
    %c0_0 = arith.constant 0 : index
    %c0_1 = arith.constant 0 : index
    %0 = vector.load %arg2[%c0, %c0_0, %c0_1] : memref<1x8x32xf32, #tpu.memory_space<vmem>>, vector<1x8x32xf32>
    %1 = vector.shape_cast %0 : vector<1x8x32xf32> to vector<8x32xf32>
    %c0_2 = arith.constant 0 : index
    %c0_3 = arith.constant 0 : index
    %c0_4 = arith.constant 0 : index
    %2 = vector.load %arg4[%c0_2, %c0_3, %c0_4] : memref<1x8x8xf32, #tpu.memory_space<vmem>>, vector<1x8x8xf32>
    %3 = vector.shape_cast %2 : vector<1x8x8xf32> to vector<8x8xf32>
    %c0_5 = arith.constant 0 : index
    %c0_6 = arith.constant 0 : index
    %4 = vector.load %arg5[%c0_5, %c0_6] : memref<32x96xbf16, #tpu.memory_space<vmem>>, vector<32x96xbf16>
    %c0_7 = arith.constant 0 : index
    %c0_8 = arith.constant 0 : index
    %5 = vector.load %arg6[%c0_7, %c0_8] : memref<1x96xf32, #tpu.memory_space<vmem>>, vector<1x96xf32>
    %6 = arith.truncf %1 : vector<8x32xf32> to vector<8x32xbf16>
    %cst = arith.constant dense<0.000000e+00> : vector<8x96xf32>
    %7 = tpu.matmul %6, %4, %cst {dimension_numbers = #tpu.dot_dimension_numbers<[1], [0], [0], [1], [0, 0, 1, 1], [], []>} : vector<8x32xbf16>, vector<32x96xbf16>, vector<8x96xf32> -> vector<8x96xf32>
    %8 = vector.broadcast %5 : vector<1x96xf32> to vector<8x96xf32>
    %9 = arith.addf %7, %8 : vector<8x96xf32>
    %10 = vector.extract_strided_slice %9 {offsets = [0, 0], sizes = [8, 32], strides = [1, 1]} : vector<8x96xf32> to vector<8x32xf32>
    %11 = vector.extract_strided_slice %9 {offsets = [0, 32], sizes = [8, 32], strides = [1, 1]} : vector<8x96xf32> to vector<8x32xf32>
    %12 = vector.extract_strided_slice %9 {offsets = [0, 64], sizes = [8, 32], strides = [1, 1]} : vector<8x96xf32> to vector<8x32xf32>
    %13 = arith.truncf %10 : vector<8x32xf32> to vector<8x32xbf16>
    %14 = vector.shape_cast %13 : vector<8x32xbf16> to vector<8x4x8xbf16>
    %15 = tpu.transpose %14, [1, 0, 2] : vector<8x4x8xbf16> -> vector<4x8x8xbf16>
    %16 = arith.truncf %11 : vector<8x32xf32> to vector<8x32xbf16>
    %17 = vector.shape_cast %16 : vector<8x32xbf16> to vector<8x4x8xbf16>
    %18 = tpu.transpose %17, [1, 0, 2] : vector<8x4x8xbf16> -> vector<4x8x8xbf16>
    %19 = arith.truncf %12 : vector<8x32xf32> to vector<8x32xbf16>
    %20 = vector.shape_cast %19 : vector<8x32xbf16> to vector<8x4x8xbf16>
    %21 = tpu.transpose %20, [1, 0, 2] : vector<8x4x8xbf16> -> vector<4x8x8xbf16>
    "tpu.trace_start"() <{level = 10 : i32, message = "hqd,hkd->hqk"}> : () -> ()
    %cst_9 = arith.constant dense<0.000000e+00> : vector<4x8x8xf32>
    %22 = tpu.matmul %15, %18, %cst_9 {dimension_numbers = #tpu.dot_dimension_numbers<[2], [2], [1], [1], [0, 0, 0, 1, 1, 1], [0], [0]>} : vector<4x8x8xbf16>, vector<4x8x8xbf16>, vector<4x8x8xf32> -> vector<4x8x8xf32>
    "tpu.trace_stop"() : () -> ()
    %cst_10 = arith.constant 0.353553385 : f32
    %23 = vector.broadcast %cst_10 : f32 to vector<4x8x8xf32>
    %24 = arith.mulf %22, %23 : vector<4x8x8xf32>
    %25 = vector.shape_cast %3 : vector<8x8xf32> to vector<1x8x8xf32>
    %26 = vector.broadcast %25 : vector<1x8x8xf32> to vector<4x8x8xf32>
    %27 = arith.addf %24, %26 : vector<4x8x8xf32>
    %cst_11 = arith.constant dense<0xFF800000> : vector<4x8xf32>
    %28 = vector.multi_reduction <maximumf>, %27, %cst_11 [2] : vector<4x8x8xf32> to vector<4x8xf32>
    %29 = vector.shape_cast %28 : vector<4x8xf32> to vector<4x8x1xf32>
    %30 = vector.broadcast %29 : vector<4x8x1xf32> to vector<4x8x8xf32>
    %31 = arith.subf %27, %30 : vector<4x8x8xf32>
    %32 = math.exp %31 : vector<4x8x8xf32>
    %cst_12 = arith.constant dense<0.000000e+00> : vector<4x8xf32>
    %33 = vector.multi_reduction <add>, %32, %cst_12 [2] : vector<4x8x8xf32> to vector<4x8xf32>
    %34 = vector.shape_cast %33 : vector<4x8xf32> to vector<4x8x1xf32>
    %35 = vector.broadcast %34 : vector<4x8x1xf32> to vector<4x8x8xf32>
    %36 = arith.divf %32, %35 : vector<4x8x8xf32>
    %37 = arith.truncf %36 : vector<4x8x8xf32> to vector<4x8x8xbf16>
    "tpu.trace_start"() <{level = 10 : i32, message = "hqk,hkd->hqd"}> : () -> ()
    %cst_13 = arith.constant dense<0.000000e+00> : vector<4x8x8xf32>
    %38 = tpu.matmul %37, %21, %cst_13 {dimension_numbers = #tpu.dot_dimension_numbers<[2], [1], [1], [2], [0, 0, 0, 1, 1, 2], [0], [0]>} : vector<4x8x8xbf16>, vector<4x8x8xbf16>, vector<4x8x8xf32> -> vector<4x8x8xf32>
    "tpu.trace_stop"() : () -> ()
    %39 = tpu.transpose %38, [1, 0, 2] : vector<4x8x8xf32> -> vector<8x4x8xf32>
    %40 = vector.shape_cast %39 : vector<8x4x8xf32> to vector<8x32xf32>
    %41 = arith.truncf %40 : vector<8x32xf32> to vector<8x32xbf16>
    %c0_14 = arith.constant 0 : index
    %c0_15 = arith.constant 0 : index
    %42 = vector.load %arg7[%c0_14, %c0_15] : memref<32x32xbf16, #tpu.memory_space<vmem>>, vector<32x32xbf16>
    %cst_16 = arith.constant dense<0.000000e+00> : vector<8x32xf32>
    %43 = tpu.matmul %41, %42, %cst_16 {dimension_numbers = #tpu.dot_dimension_numbers<[1], [0], [0], [1], [0, 0, 1, 1], [], []>} : vector<8x32xbf16>, vector<32x32xbf16>, vector<8x32xf32> -> vector<8x32xf32>
    %c0_17 = arith.constant 0 : index
    %c0_18 = arith.constant 0 : index
    %44 = vector.load %arg8[%c0_17, %c0_18] : memref<1x32xf32, #tpu.memory_space<vmem>>, vector<1x32xf32>
    %45 = vector.broadcast %44 : vector<1x32xf32> to vector<8x32xf32>
    %46 = arith.addf %43, %45 : vector<8x32xf32>
    %47 = arith.addf %1, %46 : vector<8x32xf32>
    %c0_19 = arith.constant 0 : index
    %c0_20 = arith.constant 0 : index
    %48 = vector.load %arg9[%c0_19, %c0_20] : memref<1x32xf32, #tpu.memory_space<vmem>>, vector<1x32xf32>
    %c0_21 = arith.constant 0 : index
    %c0_22 = arith.constant 0 : index
    %49 = vector.load %arg10[%c0_21, %c0_22] : memref<1x32xf32, #tpu.memory_space<vmem>>, vector<1x32xf32>
    %cst_23 = arith.constant dense<0.000000e+00> : vector<8xf32>
    %50 = vector.multi_reduction <add>, %47, %cst_23 [1] : vector<8x32xf32> to vector<8xf32>
    %51 = vector.shape_cast %50 : vector<8xf32> to vector<8x1xf32>
    %cst_24 = arith.constant 3.200000e+01 : f32
    %52 = vector.broadcast %cst_24 : f32 to vector<8x1xf32>
    %53 = arith.divf %51, %52 : vector<8x1xf32>
    %54 = arith.mulf %47, %47 : vector<8x32xf32>
    %cst_25 = arith.constant dense<0.000000e+00> : vector<8xf32>
    %55 = vector.multi_reduction <add>, %54, %cst_25 [1] : vector<8x32xf32> to vector<8xf32>
    %56 = vector.shape_cast %55 : vector<8xf32> to vector<8x1xf32>
    %cst_26 = arith.constant 3.200000e+01 : f32
    %57 = vector.broadcast %cst_26 : f32 to vector<8x1xf32>
    %58 = arith.divf %56, %57 : vector<8x1xf32>
    %59 = arith.mulf %53, %53 : vector<8x1xf32>
    %60 = arith.subf %58, %59 : vector<8x1xf32>
    %cst_27 = arith.constant 0.000000e+00 : f32
    %61 = vector.broadcast %cst_27 : f32 to vector<8x1xf32>
    %62 = arith.maximumf %60, %61 : vector<8x1xf32>
    %63 = vector.broadcast %53 : vector<8x1xf32> to vector<8x32xf32>
    %64 = arith.subf %47, %63 : vector<8x32xf32>
    %cst_28 = arith.constant 9.99999974E-6 : f32
    %65 = vector.broadcast %cst_28 : f32 to vector<8x1xf32>
    %66 = arith.addf %62, %65 : vector<8x1xf32>
    %67 = math.rsqrt %66 : vector<8x1xf32>
    %68 = vector.broadcast %67 : vector<8x1xf32> to vector<8x32xf32>
    %69 = arith.mulf %64, %68 : vector<8x32xf32>
    %70 = vector.broadcast %48 : vector<1x32xf32> to vector<8x32xf32>
    %71 = arith.mulf %69, %70 : vector<8x32xf32>
    %72 = vector.broadcast %49 : vector<1x32xf32> to vector<8x32xf32>
    %73 = arith.addf %71, %72 : vector<8x32xf32>
    %c0_29 = arith.constant 0 : index
    %c0_30 = arith.constant 0 : index
    %c0_31 = arith.constant 0 : index
    %74 = vector.load %arg11[%c0_29, %c0_30, %c0_31] : memref<1x8x32xf32, #tpu.memory_space<vmem>>, vector<1x8x32xf32>
    %75 = vector.shape_cast %74 : vector<1x8x32xf32> to vector<8x32xf32>
    %76 = vector.shape_cast %73 : vector<8x32xf32> to vector<1x8x32xf32>
    tpu.vector_store %arg11[%c0_29, %c0_30, %c0_31], %76 {strides = array<i32>} : memref<1x8x32xf32, #tpu.memory_space<vmem>>, vector<1x8x32xf32>,
    return
  }
  func.func @transform_0(%arg0: i32, %arg1: i32) -> (i32, i32, i32) {
    %c0_i32 = arith.constant 0 : i32
    %c0_i32_0 = arith.constant 0 : i32
    return %arg0, %arg1, %c0_i32 : i32, i32, i32
  }
  func.func @transform_1(%arg0: i32, %arg1: i32) -> (i32, i32, i32) {
    %c0_i32 = arith.constant 0 : i32
    %c0_i32_0 = arith.constant 0 : i32
    %c0_i32_1 = arith.constant 0 : i32
    return %arg0, %c0_i32, %c0_i32_0 : i32, i32, i32
  }
  func.func @transform_2(%arg0: i32, %arg1: i32) -> (i32, i32, i32) {
    %c0_i32 = arith.constant 0 : i32
    %c0_i32_0 = arith.constant 0 : i32
    return %arg0, %arg1, %c0_i32 : i32, i32, i32
  }
  func.func @transform_3(%arg0: i32, %arg1: i32) -> (i32, i32) {
    %c0_i32 = arith.constant 0 : i32
    %c0_i32_0 = arith.constant 0 : i32
    %c0_i32_1 = arith.constant 0 : i32
    return %c0_i32, %c0_i32_0 : i32, i32
  }
  func.func @transform_4(%arg0: i32, %arg1: i32) -> (i32, i32) {
    %c0_i32 = arith.constant 0 : i32
    %c0_i32_0 = arith.constant 0 : i32
    %c0_i32_1 = arith.constant 0 : i32
    return %c0_i32, %c0_i32_0 : i32, i32
  }
  func.func @transform_5(%arg0: i32, %arg1: i32) -> (i32, i32) {
    %c0_i32 = arith.constant 0 : i32
    %c0_i32_0 = arith.constant 0 : i32
    %c0_i32_1 = arith.constant 0 : i32
    return %c0_i32, %c0_i32_0 : i32, i32
  }
  func.func @transform_6(%arg0: i32, %arg1: i32) -> (i32, i32) {
    %c0_i32 = arith.constant 0 : i32
    %c0_i32_0 = arith.constant 0 : i32
    %c0_i32_1 = arith.constant 0 : i32
    return %c0_i32, %c0_i32_0 : i32, i32
  }
  func.func @transform_7(%arg0: i32, %arg1: i32) -> (i32, i32) {
    %c0_i32 = arith.constant 0 : i32
    %c0_i32_0 = arith.constant 0 : i32
    %c0_i32_1 = arith.constant 0 : i32
    return %c0_i32, %c0_i32_0 : i32, i32
  }
  func.func @transform_8(%arg0: i32, %arg1: i32) -> (i32, i32) {
    %c0_i32 = arith.constant 0 : i32
    %c0_i32_0 = arith.constant 0 : i32
    %c0_i32_1 = arith.constant 0 : i32
    return %c0_i32, %c0_i32_0 : i32, i32
  }
  func.func @transform_9(%arg0: i32, %arg1: i32) -> (i32, i32, i32) {
    %c0_i32 = arith.constant 0 : i32
    %c0_i32_0 = arith.constant 0 : i32
    return %arg0, %arg1, %c0_i32 : i32, i32, i32
  }
}

module attributes {stable_mosaic.version = 11 : i64} {
  func.func @_gen_logsoftmax_kernel(%arg0: i32, %arg1: memref<16x32xf32, #tpu.memory_space<vmem>>, %arg2: memref<32x64xbf16, #tpu.memory_space<vmem>>, %arg3: memref<1x64xf32, #tpu.memory_space<vmem>>, %arg4: memref<16x64xf32, #tpu.memory_space<vmem>>, %arg5: memref<16x64xf32, #tpu.memory_space<vmem>>) attributes {dimension_semantics = [#tpu.dimension_semantics<parallel>], iteration_bounds = array<i64: 1>, scalar_prefetch = 0 : i64, scratch_operands = 0 : i64, tpu.core_type = #tpu.core_type<tc>, window_params = [{transform_indices = @transform_0, window_bounds = array<i64: 16, 32>}, {pipeline_mode = #tpu.pipeline_mode<synchronous>, transform_indices = @transform_1, window_bounds = array<i64: 32, 64>}, {pipeline_mode = #tpu.pipeline_mode<synchronous>, transform_indices = @transform_2, window_bounds = array<i64: 1, 64>}, {transform_indices = @transform_3, window_bounds = array<i64: 16, 64>}, {transform_indices = @transform_4, window_bounds = array<i64: 16, 64>}]} {
    %c0 = arith.constant 0 : index
    %c0_0 = arith.constant 0 : index
    %0 = vector.load %arg1[%c0, %c0_0] : memref<16x32xf32, #tpu.memory_space<vmem>>, vector<16x32xf32>
    %1 = arith.truncf %0 : vector<16x32xf32> to vector<16x32xbf16>
    %c0_1 = arith.constant 0 : index
    %c0_2 = arith.constant 0 : index
    %2 = vector.load %arg2[%c0_1, %c0_2] : memref<32x64xbf16, #tpu.memory_space<vmem>>, vector<32x64xbf16>
    %cst = arith.constant dense<0.000000e+00> : vector<16x64xf32>
    %3 = tpu.matmul %1, %2, %cst {dimension_numbers = #tpu.dot_dimension_numbers<[1], [0], [0], [1], [0, 0, 1, 1], [], []>} : vector<16x32xbf16>, vector<32x64xbf16>, vector<16x64xf32> -> vector<16x64xf32>
    %c0_3 = arith.constant 0 : index
    %c0_4 = arith.constant 0 : index
    %4 = vector.load %arg3[%c0_3, %c0_4] : memref<1x64xf32, #tpu.memory_space<vmem>>, vector<1x64xf32>
    %5 = vector.broadcast %4 : vector<1x64xf32> to vector<16x64xf32>
    %6 = arith.addf %3, %5 : vector<16x64xf32>
    %c0_5 = arith.constant 0 : index
    %c0_6 = arith.constant 0 : index
    %7 = vector.load %arg4[%c0_5, %c0_6] : memref<16x64xf32, #tpu.memory_space<vmem>>, vector<16x64xf32>
    tpu.vector_store %arg4[%c0_5, %c0_6], %6 {strides = array<i32>} : memref<16x64xf32, #tpu.memory_space<vmem>>, vector<16x64xf32>,
    %cst_7 = arith.constant dense<0xFF800000> : vector<16xf32>
    %8 = vector.multi_reduction <maximumf>, %6, %cst_7 [1] : vector<16x64xf32> to vector<16xf32>
    %9 = vector.shape_cast %8 : vector<16xf32> to vector<16x1xf32>
    %10 = vector.broadcast %9 : vector<16x1xf32> to vector<16x64xf32>
    %11 = arith.subf %6, %10 : vector<16x64xf32>
    %12 = math.exp %11 : vector<16x64xf32>
    %cst_8 = arith.constant dense<0.000000e+00> : vector<16xf32>
    %13 = vector.multi_reduction <add>, %12, %cst_8 [1] : vector<16x64xf32> to vector<16xf32>
    %14 = vector.shape_cast %13 : vector<16xf32> to vector<16x1xf32>
    %15 = math.log %14 : vector<16x1xf32>
    %16 = vector.broadcast %15 : vector<16x1xf32> to vector<16x64xf32>
    %17 = arith.subf %11, %16 : vector<16x64xf32>
    %c0_9 = arith.constant 0 : index
    %c0_10 = arith.constant 0 : index
    %18 = vector.load %arg5[%c0_9, %c0_10] : memref<16x64xf32, #tpu.memory_space<vmem>>, vector<16x64xf32>
    tpu.vector_store %arg5[%c0_9, %c0_10], %17 {strides = array<i32>} : memref<16x64xf32, #tpu.memory_space<vmem>>, vector<16x64xf32>,
    return
  }
  func.func @transform_0(%arg0: i32) -> (i32, i32) {
    %c0_i32 = arith.constant 0 : i32
    %c0_i32_0 = arith.constant 0 : i32
    return %arg0, %c0_i32 : i32, i32
  }
  func.func @transform_1(%arg0: i32) -> (i32, i32) {
    %c0_i32 = arith.constant 0 : i32
    %c0_i32_0 = arith.constant 0 : i32
    %c0_i32_1 = arith.constant 0 : i32
    return %c0_i32, %c0_i32_0 : i32, i32
  }
  func.func @transform_2(%arg0: i32) -> (i32, i32) {
    %c0_i32 = arith.constant 0 : i32
    %c0_i32_0 = arith.constant 0 : i32
    %c0_i32_1 = arith.constant 0 : i32
    return %c0_i32, %c0_i32_0 : i32, i32
  }
  func.func @transform_3(%arg0: i32) -> (i32, i32) {
    %c0_i32 = arith.constant 0 : i32
    %c0_i32_0 = arith.constant 0 : i32
    return %arg0, %c0_i32 : i32, i32
  }
  func.func @transform_4(%arg0: i32) -> (i32, i32) {
    %c0_i32 = arith.constant 0 : i32
    %c0_i32_0 = arith.constant 0 : i32
    return %arg0, %c0_i32 : i32, i32
  }
}

</mosaic_0001>

<llo_original>
// kernel: transformer_forward.12
$region0: #{transformer_forward.12}
  #allocation0 [shape = 'u32[]', space=smem, size = 0x4, offset = 0x4, fixed_abs, tag = 'smem constant byte address 0x4 - core index']
  #allocation1 [shape = 'u32[72,128]{1,0:T(1,128)}', space=vmem, size = 0x9000, scoped, tag = 'internal scratch']
  %s0 = inlined_call_operand.vmem [shape: f32[16,32], index: 0, kind: input, shape index: {}]
  %s1 = inlined_call_operand.vmem [shape: bf16[32,64], index: 1, kind: input, shape index: {}]
  %s2 = inlined_call_operand.vmem [shape: f32[1,64], index: 2, kind: input, shape index: {}]
  %s3 = inlined_call_operand.vmem [shape: bf16[64,32], index: 3, kind: input, shape index: {}]
  %s4 = inlined_call_operand.vmem [shape: f32[1,32], index: 4, kind: input, shape index: {}]
  %s5 = inlined_call_operand.vmem [shape: f32[1,32], index: 5, kind: input, shape index: {}]
  %s6 = inlined_call_operand.vmem [shape: f32[1,32], index: 6, kind: input, shape index: {}]
  %s7 = inlined_call_operand.vmem [shape: bf16[32,16], index: 7, kind: input, shape index: {}]
  %s8 = inlined_call_operand.vmem [shape: f32[1,16], index: 8, kind: input, shape index: {}]
  %s9 = inlined_call_operand.vmem [shape: bf16[16,32], index: 9, kind: input, shape index: {}]
  %s10 = inlined_call_operand.vmem [shape: f32[1,32], index: 10, kind: input, shape index: {}]
  %s11 = inlined_call_operand.vmem [shape: f32[16,32], index: 11, kind: output, shape index: {}]
  %s12 = sld [smem:[#allocation0]]
  $region54: #{transformer_forward.12} parent=0
    _
  %s14 = ssub.s32 1, %s12
  %s15 = scalar_select 0, %s14, %s12
  // Predicated region
  $region2: #{transformer_forward.12} parent=0 // pred_check
    _
  $region3: #{transformer_forward.12} parent=0 // pred_check_branch
    %17 = sbr.rel (0) target = $region5
  $region4: #{transformer_forward.12} parent=0 // pred_region
    _
  $region5: #{transformer_forward.12} parent=0 // pred_fallthru
    _
  // Predicated region
  $region6: #{transformer_forward.12} parent=0 // pred_check
    _
  $region7: #{transformer_forward.12} parent=0 // pred_check_branch
    %19 = sbr.rel (0) target = $region9
  $region8: #{transformer_forward.12} parent=0 // pred_region
    _
  $region9: #{transformer_forward.12} parent=0 // pred_fallthru
    _
  // Predicated region
  $region10: #{transformer_forward.12} parent=0 // pred_check
    _
  $region11: #{transformer_forward.12} parent=0 // pred_check_branch
    %21 = sbr.rel (0) target = $region13
  $region12: #{transformer_forward.12} parent=0 // pred_region
    _
  $region13: #{transformer_forward.12} parent=0 // pred_fallthru
    _
  // Predicated region
  $region14: #{transformer_forward.12} parent=0 // pred_check
    _
  $region15: #{transformer_forward.12} parent=0 // pred_check_branch
    %23 = sbr.rel (0) target = $region17
  $region16: #{transformer_forward.12} parent=0 // pred_region
    _
  $region17: #{transformer_forward.12} parent=0 // pred_fallthru
    _
  // Predicated region
  $region18: #{transformer_forward.12} parent=0 // pred_check
    _
  $region19: #{transformer_forward.12} parent=0 // pred_check_branch
    %25 = sbr.rel (0) target = $region21
  $region20: #{transformer_forward.12} parent=0 // pred_region
    _
  $region21: #{transformer_forward.12} parent=0 // pred_fallthru
    _
  // Predicated region
  $region22: #{transformer_forward.12} parent=0 // pred_check
    _
  $region23: #{transformer_forward.12} parent=0 // pred_check_branch
    %27 = sbr.rel (0) target = $region25
  $region24: #{transformer_forward.12} parent=0 // pred_region
    _
  $region25: #{transformer_forward.12} parent=0 // pred_fallthru
    _
  // Predicated region
  $region26: #{transformer_forward.12} parent=0 // pred_check
    _
  $region27: #{transformer_forward.12} parent=0 // pred_check_branch
    %29 = sbr.rel (0) target = $region29
  $region28: #{transformer_forward.12} parent=0 // pred_region
    _
  $region29: #{transformer_forward.12} parent=0 // pred_fallthru
    _
  // Predicated region
  $region30: #{transformer_forward.12} parent=0 // pred_check
    _
  $region31: #{transformer_forward.12} parent=0 // pred_check_branch
    %31 = sbr.rel (0) target = $region33
  $region32: #{transformer_forward.12} parent=0 // pred_region
    _
  $region33: #{transformer_forward.12} parent=0 // pred_fallthru
    _
  // Predicated region
  $region34: #{transformer_forward.12} parent=0 // pred_check
    _
  $region35: #{transformer_forward.12} parent=0 // pred_check_branch
    %33 = sbr.rel (0) target = $region37
  $region36: #{transformer_forward.12} parent=0 // pred_region
    _
  $region37: #{transformer_forward.12} parent=0 // pred_fallthru
    _
  // Predicated region
  $region38: #{transformer_forward.12} parent=0 // pred_check
    _
  $region39: #{transformer_forward.12} parent=0 // pred_check_branch
    %35 = sbr.rel (0) target = $region41
  $region40: #{transformer_forward.12} parent=0 // pred_region
    _
  $region41: #{transformer_forward.12} parent=0 // pred_fallthru
    _
  // Predicated region
  $region42: #{transformer_forward.12} parent=0 // pred_check
    _
  $region43: #{transformer_forward.12} parent=0 // pred_check_branch
    %37 = sbr.rel (0) target = $region45
  $region44: #{transformer_forward.12} parent=0 // pred_region
    _
  $region45: #{transformer_forward.12} parent=0 // pred_fallthru
    _
  %v39 = vld [vmem:[%s0] sm:$0xff]
  %v40 = vld [vmem:[%s0 + $0x8] sm:$0xff]
  %v41 = vpack.c.bf16 %v40, %v39
  %v42 = vld [vmem:[%s1] sm:$0xf]
  %v43 = vld [vmem:[%s1 + $0x4] sm:$0xf]
  %v44 = vld [vmem:[%s1 + $0x8] sm:$0xf]
  %v45 = vld [vmem:[%s1 + $0xc] sm:$0xf]
  %v46 = vld [vmem:[%s2] sm:$0x1]
  %v48 = vperm.slane %v46, 0
  %v54 = vunpack.c.l.b16 %v42
  %v55 = vunpack.c.l.b16 %v43
  %v56 = vunpack.c.l.b16 %v44
  %v57 = vunpack.c.l.b16 %v45
  %v58 = vpack.c.b16 %v55, %v54
  %v59 = vpack.c.b16 %v57, %v56
  %vm62 = vcmask 261120
  %v64 = vsel %vm62, %v41, 0
  %66 = vmatpush.bf16.msra.mxu0 0
  %67 = vmatpush.bf16.msra.mxu0 0
  %68 = vmatpush.bf16.msra.mxu0 0
  %69 = vmatpush.bf16.msra.mxu0 0
  %70 = vmatpush.bf16.msra.mxu0 0
  %71 = vmatpush.bf16.msra.mxu0 0
  %72 = vmatpush.bf16.msra.mxu0 %v59
  %73 = vmatpush.bf16.msra.mxu0 %v58
  %74 = vmatmul.bf16.gmra.mxu0 %v64
  %v75 = vpop.f32.mrf.mxu0
  %v76 = vadd.f32 %v48, %v75
  %v77 = vpop.f32.mrf.mxu0
  %v78 = vadd.f32 %v48, %v77
  %79 = vdwg.mxu0
  %v80 = vmax.f32 %v76, 0.0
  %v81 = vmax.f32 %v78, 0.0
  %v82 = vpack.c.bf16 %v81, %v80
  %v83 = vld [vmem:[%s3] sm:$0xf]
  %v84 = vld [vmem:[%s3 + $0x4] sm:$0xf]
  %v85 = vld [vmem:[%s3 + $0x8] sm:$0xf]
  %v86 = vld [vmem:[%s3 + $0xc] sm:$0xf]
  %v87 = vld [vmem:[%s3 + $0x10] sm:$0xf]
  %v88 = vld [vmem:[%s3 + $0x14] sm:$0xf]
  %v89 = vld [vmem:[%s3 + $0x18] sm:$0xf]
  %v90 = vld [vmem:[%s3 + $0x1c] sm:$0xf]
  %v91 = vld [vmem:[%s4] sm:$0x1]
  %v93 = vperm.slane %v91, 0
  %v103 = vunpack.c.l.b16 %v83
  %v104 = vunpack.c.l.b16 %v84
  %v105 = vunpack.c.l.b16 %v85
  %v106 = vunpack.c.l.b16 %v86
  %v107 = vunpack.c.l.b16 %v87
  %v108 = vunpack.c.l.b16 %v88
  %v109 = vunpack.c.l.b16 %v89
  %v110 = vunpack.c.l.b16 %v90
  %v111 = vpack.c.b16 %v104, %v103
  %v112 = vpack.c.b16 %v106, %v105
  %v113 = vpack.c.b16 %v108, %v107
  %v114 = vpack.c.b16 %v110, %v109
  %vm119 = vcmask 523264
  %v121 = vsel %vm119, %v82, 0
  %123 = vmatpush.bf16.msra.mxu0 0
  %124 = vmatpush.bf16.msra.mxu0 0
  %125 = vmatpush.bf16.msra.mxu0 0
  %126 = vmatpush.bf16.msra.mxu0 0
  %127 = vmatpush.bf16.msra.mxu0 %v114
  %128 = vmatpush.bf16.msra.mxu0 %v113
  %129 = vmatpush.bf16.msra.mxu0 %v112
  %130 = vmatpush.bf16.msra.mxu0 %v111
  %131 = vmatmul.bf16.gmra.mxu0 %v121
  %v132 = vpop.f32.mrf.mxu0
  %v133 = vadd.f32 %v93, %v132
  %v134 = vpop.f32.mrf.mxu0
  %v135 = vadd.f32 %v93, %v134
  %136 = vdwg.mxu0
  %v137 = vadd.f32 %v39, %v133
  %v138 = vadd.f32 %v40, %v135
  %v139 = vld [vmem:[%s5] sm:$0x1]
  %v140 = vld [vmem:[%s6] sm:$0x1]
  %v141 = vsel %vm62, %v137, 0.0
  %142 = vadd.xlane.f32.xlu0 %v141
  %v143 = vpop.xlane.xlu0 %142
  %v144 = vsel %vm62, %v138, 0.0
  %145 = vadd.xlane.f32.xlu0 %v144
  %v146 = vpop.xlane.xlu0 %145
  %v147 = vrcp.pop 32.0
  %v148 = vmul.f32 32.0, %v147
  %v149 = vsub.f32 1.0, %v148
  %v150 = vmul.f32 %v147, %v149
  %v151 = vadd.f32 %v147, %v150
  %vm152 = vweird.f32 %v147
  %v153 = vsel %vm152, %v147, %v151
  %v154 = vmul.f32 %v143, %v153
  %v155 = vmul.f32 %v146, %v153
  %v156 = vmul.f32 %v137, %v137
  %v157 = vmul.f32 %v138, %v138
  %v158 = vsel %vm62, %v156, 0.0
  %159 = vadd.xlane.f32.xlu0 %v158
  %v160 = vpop.xlane.xlu0 %159
  %v161 = vsel %vm62, %v157, 0.0
  %162 = vadd.xlane.f32.xlu0 %v161
  %v163 = vpop.xlane.xlu0 %162
  %v164 = vmul.f32 %v160, %v153
  %v165 = vmul.f32 %v163, %v153
  %v166 = vmul.f32 %v154, %v154
  %v167 = vmul.f32 %v155, %v155
  %v168 = vsub.f32 %v164, %v166
  %v169 = vsub.f32 %v165, %v167
  %v170 = vmax.f32 %v168, 0.0
  %v171 = vmax.f32 %v169, 0.0
  %v172 = vsub.f32 %v137, %v154
  %v173 = vsub.f32 %v138, %v155
  %v174 = vadd.f32 %v170, 1e-05
  %v175 = vadd.f32 %v171, 1e-05
  %v176 = vrsqrt.pop %v174
  %v177 = vmul.f32 %v176, %v174
  %v178 = vmul.f32 %v177, %v176
  %v179 = vmul.f32 0.5, %v178
  %v180 = vsub.f32 1.5, %v179
  %v181 = vmul.f32 %v176, %v180
  %vm182 = vweird.f32 %v174
  %vm183 = vweird.f32 %v176
  %vm184 = vmor %vm182, %vm183
  %v185 = vsel %vm184, %v176, %v181
  %v186 = vrsqrt.pop %v175
  %v187 = vmul.f32 %v186, %v175
  %v188 = vmul.f32 %v187, %v186
  %v189 = vmul.f32 0.5, %v188
  %v190 = vsub.f32 1.5, %v189
  %v191 = vmul.f32 %v186, %v190
  %vm192 = vweird.f32 %v175
  %vm193 = vweird.f32 %v186
  %vm194 = vmor %vm192, %vm193
  %v195 = vsel %vm194, %v186, %v191
  %v196 = vmul.f32 %v172, %v185
  %v197 = vmul.f32 %v173, %v195
  %v199 = vperm.slane %v139, 0
  %v201 = vmul.f32 %v196, %v199
  %v202 = vmul.f32 %v197, %v199
  %v204 = vperm.slane %v140, 0
  %v206 = vadd.f32 %v201, %v204
  %v207 = vadd.f32 %v202, %v204
  %v208 = vpack.c.bf16 %v207, %v206
  %v209 = vld [vmem:[%s7] sm:$0xf]
  %v210 = vld [vmem:[%s7 + $0x4] sm:$0xf]
  %v211 = vld [vmem:[%s7 + $0x8] sm:$0xf]
  %v212 = vld [vmem:[%s7 + $0xc] sm:$0xf]
  %v213 = vld [vmem:[%s8] sm:$0x1]
  %v215 = vperm.slane %v213, 0
  %v221 = vunpack.c.l.b16 %v209
  %v222 = vunpack.c.l.b16 %v210
  %v223 = vunpack.c.l.b16 %v211
  %v224 = vunpack.c.l.b16 %v212
  %v225 = vpack.c.b16 %v222, %v221
  %v226 = vpack.c.b16 %v224, %v223
  %v230 = vsel %vm62, %v208, 0
  %232 = vmatpush.bf16.msra.mxu0 0
  %233 = vmatpush.bf16.msra.mxu0 0
  %234 = vmatpush.bf16.msra.mxu0 0
  %235 = vmatpush.bf16.msra.mxu0 0
  %236 = vmatpush.bf16.msra.mxu0 0
  %237 = vmatpush.bf16.msra.mxu0 0
  %238 = vmatpush.bf16.msra.mxu0 %v226
  %239 = vmatpush.bf16.msra.mxu0 %v225
  %240 = vmatmul.bf16.gmra.mxu0 %v230
  %v241 = vpop.f32.mrf.mxu0
  %v242 = vadd.f32 %v215, %v241
  %v243 = vpop.f32.mrf.mxu0
  %v244 = vadd.f32 %v215, %v243
  %245 = vdwg.mxu0
  %v246 = vmax.f32 %v242, 0.0
  %v247 = vmax.f32 %v244, 0.0
  %v248 = vpack.c.bf16 %v247, %v246
  %v249 = vld [vmem:[%s9] sm:$0xf]
  %v250 = vld [vmem:[%s9 + $0x4] sm:$0xf]
  %v253 = vunpack.c.l.b16 %v249
  %v254 = vunpack.c.l.b16 %v250
  %v255 = vpack.c.b16 %v254, %v253
  %vm257 = vcmask 130048
  %v259 = vsel %vm257, %v248, 0
  %261 = vmatpush.bf16.msra.mxu0 0
  %262 = vmatpush.bf16.msra.mxu0 0
  %263 = vmatpush.bf16.msra.mxu0 0
  %264 = vmatpush.bf16.msra.mxu0 0
  %265 = vmatpush.bf16.msra.mxu0 0
  %266 = vmatpush.bf16.msra.mxu0 0
  %267 = vmatpush.bf16.msra.mxu0 0
  %268 = vmatpush.bf16.msra.mxu0 %v255
  %269 = vmatmul.bf16.gmra.mxu0 %v259
  %v270 = vpop.f32.mrf.mxu0
  %v271 = vadd.f32 0.0, %v270
  %v272 = vpop.f32.mrf.mxu0
  %v273 = vadd.f32 0.0, %v272
  %274 = vdwg.mxu0
  %v275 = vadd.f32 %v206, %v271
  %v276 = vadd.f32 %v207, %v273
  %v277 = vld [vmem:[%s10] sm:$0x1]
  %v279 = vperm.slane %v277, 0
  %v281 = vadd.f32 %v275, %v279
  %v282 = vadd.f32 %v276, %v279
  %283 = vst.msk [vmem:[%s11] sm:$0xff] %vm62, %v281
  %284 = vst.msk [vmem:[%s11 + $0x8] sm:$0xff] %vm62, %v282
  // Predicated region
  $region46: #{transformer_forward.12} parent=0 // pred_check
    _
  $region47: #{transformer_forward.12} parent=0 // pred_check_branch
    %286 = sbr.rel (0) target = $region49
  $region48: #{transformer_forward.12} parent=0 // pred_region
    _
  $region49: #{transformer_forward.12} parent=0 // pred_fallthru
    _
  // Predicated region
  $region50: #{transformer_forward.12} parent=0 // pred_check
    _
  $region51: #{transformer_forward.12} parent=0 // pred_check_branch
    %288 = sbr.rel (0) target = $region53
  $region52: #{transformer_forward.12} parent=0 // pred_region
    _
  $region53: #{transformer_forward.12} parent=0 // pred_fallthru
    _

// kernel: transformer_forward.11
$region0: #{transformer_forward.11}
  #allocation0 [shape = 'u32[]', space=smem, size = 0x4, offset = 0x4, fixed_abs, tag = 'smem constant byte address 0x4 - core index']
  #allocation1 [shape = 'u32[72,128]{1,0:T(1,128)}', space=vmem, size = 0x9000, scoped, tag = 'internal scratch']
  %s0 = inlined_call_operand.vmem [shape: f32[2,8,32], index: 0, kind: input, shape index: {}, may-alias: {0,1}]
  %s1 = inlined_call_operand.vmem [shape: f32[2,8,32], index: 1, kind: input, shape index: {}, may-alias: {0,1}]
  %s2 = inlined_call_operand.vmem [shape: f32[2,1,8], index: 2, kind: input, shape index: {}]
  %s3 = inlined_call_operand.vmem [shape: bf16[32,96], index: 3, kind: input, shape index: {}]
  %s4 = inlined_call_operand.vmem [shape: f32[1,96], index: 4, kind: input, shape index: {}]
  %s5 = inlined_call_operand.vmem [shape: bf16[32,32], index: 5, kind: input, shape index: {}]
  %s6 = inlined_call_operand.vmem [shape: f32[1,32], index: 6, kind: input, shape index: {}]
  %s7 = inlined_call_operand.vmem [shape: f32[1,32], index: 7, kind: input, shape index: {}]
  %s8 = inlined_call_operand.vmem [shape: f32[1,32], index: 8, kind: input, shape index: {}]
  %s9 = inlined_call_operand.vmem [shape: f32[2,8,32], index: 9, kind: output, shape index: {}]
  %s10 = sld [smem:[#allocation0]]
  $region69: #{transformer_forward.11} parent=0
    _
  %s12 = ssub.s32 1, %s10
  %s13 = scalar_select 0, %s12, %s10
  loop: start=0, step=1, limit=4
  $region2: #{transformer_forward.11} parent=0 // loop_pre_header
    _
  $region3: #{transformer_forward.11} parent=0 // loop_header
    %s15 = sphi 0, %s19
    %p16 = scmp.ge.s32.totalorder %s15, 4
    %s22 = sphi 0, %s34
    %s23 = sphi 0, %s30
    %s24 = sphi 0, %s22
    %s25 = sphi 0, %s23
    %s26 = sphi 0, %s24
    %s27 = sphi 0, %s25
    %s39 = sphi 0, %s41
    %s42 = sphi 0, %s39
    %s43 = sphi 0, %s42
    %s59 = sphi 0, %s43
    %s65 = sphi 0, %s67
    %s68 = sphi 0, %s65
    %s69 = sphi 0, %s68
    %s85 = sphi 0, %s69
    %s91 = sphi 0, %s93
    %s94 = sphi 0, %s91
    %s95 = sphi 0, %s94
    %s111 = sphi 0, %s95
    %s115 = sphi 0, %s115
    %s117 = sphi 0, %s115
    %s118 = sphi 0, %s117
    %s132 = sphi 0, %s118
    %s136 = sphi 0, %s136
    %s138 = sphi 0, %s136
    %s139 = sphi 0, %s138
    %s153 = sphi 0, %s139
    %s157 = sphi 0, %s157
    %s159 = sphi 0, %s157
    %s160 = sphi 0, %s159
    %s174 = sphi 0, %s160
    %s178 = sphi 0, %s178
    %s180 = sphi 0, %s178
    %s181 = sphi 0, %s180
    %s195 = sphi 0, %s181
    %s199 = sphi 0, %s199
    %s201 = sphi 0, %s199
    %s202 = sphi 0, %s201
    %s216 = sphi 0, %s202
    %s220 = sphi 0, %s220
    %s222 = sphi 0, %s220
    %s223 = sphi 0, %s222
    %s237 = sphi 0, %s223
    %s245 = sphi 0, %s247
    %s248 = sphi 0, %s245
    %s249 = sphi 0, %s248
    %s265 = sphi 0, %s249
  $region4: #{transformer_forward.11} parent=0 // loop_header_branch
    %18 = sbr.rel (%p16) target = $region8
  $region5: #{transformer_forward.11} parent=0 // loop_body
    %s20 = ssub.s32 %s15, 1
    %s21 = ssub.s32 %s15, 2
    %s28 = sadd.s32 1, %s23
    %p29 = scmp.ge.s32.totalorder %s28, 1
    %s30 = scalar_select %p29, 0, %s28
    %s31 = sadd.s32 1, %s22
    %s32 = scalar_select %p29, %s31, %s22
    %p33 = scmp.ge.s32.totalorder %s32, 2
    %s34 = scalar_select %p33, 0, %s32
    %s35 = ssub.s32 %s22, %s34
    %s36 = ssub.s32 %s23, %s30
    %s37 = sor.u32 %s35, %s36
    %p38 = scmp.eq.s32.totalorder %s37, 0
    %s40 = sadd.s32 %s39, 1
    %s41 = scalar_select %p38, %s39, %s40
    %p44 = pneg %p38
    %p45 = scmp.eq.s32.totalorder %s15, 1
    %p46 = por %p44, %p45
    %p47 = scmp.ne.s32.totalorder %s39, %s42
    %p48 = scmp.eq.s32.totalorder %s15, 0
    %p49 = por %p47, %p48
    %p50 = scmp.ne.s32.totalorder %s39, %s42
    %p51 = scmp.eq.s32.totalorder %s20, 1
    %p52 = por %p50, %p51
    %p53 = scmp.ne.s32.totalorder %s42, %s43
    %p54 = scmp.eq.s32.totalorder %s20, 0
    %p55 = por %p53, %p54
    %p56 = scmp.ne.s32.totalorder %s42, %s43
    %p57 = scmp.eq.s32.totalorder %s21, 1
    %p58 = por %p56, %p57
    %p60 = scmp.ne.s32.totalorder %s43, %s59
    %p61 = scmp.eq.s32.totalorder %s21, 0
    %p62 = por %p60, %p61
    %s63 = ssub.s32 %s22, %s34
    %p64 = scmp.eq.s32.totalorder %s63, 0
    %s66 = sadd.s32 %s65, 1
    %s67 = scalar_select %p64, %s65, %s66
    %p70 = pneg %p64
    %p71 = scmp.eq.s32.totalorder %s15, 1
    %p72 = por %p70, %p71
    %p73 = scmp.ne.s32.totalorder %s65, %s68
    %p74 = scmp.eq.s32.totalorder %s15, 0
    %p75 = por %p73, %p74
    %p76 = scmp.ne.s32.totalorder %s65, %s68
    %p77 = scmp.eq.s32.totalorder %s20, 1
    %p78 = por %p76, %p77
    %p79 = scmp.ne.s32.totalorder %s68, %s69
    %p80 = scmp.eq.s32.totalorder %s20, 0
    %p81 = por %p79, %p80
    %p82 = scmp.ne.s32.totalorder %s68, %s69
    %p83 = scmp.eq.s32.totalorder %s21, 1
    %p84 = por %p82, %p83
    %p86 = scmp.ne.s32.totalorder %s69, %s85
    %p87 = scmp.eq.s32.totalorder %s21, 0
    %p88 = por %p86, %p87
    %s89 = ssub.s32 %s22, %s34
    %p90 = scmp.eq.s32.totalorder %s89, 0
    %s92 = sadd.s32 %s91, 1
    %s93 = scalar_select %p90, %s91, %s92
    %p96 = pneg %p90
    %p97 = scmp.eq.s32.totalorder %s15, 1
    %p98 = por %p96, %p97
    %p99 = scmp.ne.s32.totalorder %s91, %s94
    %p100 = scmp.eq.s32.totalorder %s15, 0
    %p101 = por %p99, %p100
    %p102 = scmp.ne.s32.totalorder %s91, %s94
    %p103 = scmp.eq.s32.totalorder %s20, 1
    %p104 = por %p102, %p103
    %p105 = scmp.ne.s32.totalorder %s94, %s95
    %p106 = scmp.eq.s32.totalorder %s20, 0
    %p107 = por %p105, %p106
    %p108 = scmp.ne.s32.totalorder %s94, %s95
    %p109 = scmp.eq.s32.totalorder %s21, 1
    %p110 = por %p108, %p109
    %p112 = scmp.ne.s32.totalorder %s95, %s111
    %p113 = scmp.eq.s32.totalorder %s21, 0
    %p114 = por %p112, %p113
    %s116 = sadd.s32 %s115, 1
    %p119 = scmp.eq.s32.totalorder %s15, 1
    %p120 = scmp.ne.s32.totalorder %s115, %s117
    %p121 = scmp.eq.s32.totalorder %s15, 0
    %p122 = por %p120, %p121
    %p123 = scmp.ne.s32.totalorder %s115, %s117
    %p124 = scmp.eq.s32.totalorder %s20, 1
    %p125 = por %p123, %p124
    %p126 = scmp.ne.s32.totalorder %s117, %s118
    %p127 = scmp.eq.s32.totalorder %s20, 0
    %p128 = por %p126, %p127
    %p129 = scmp.ne.s32.totalorder %s117, %s118
    %p130 = scmp.eq.s32.totalorder %s21, 1
    %p131 = por %p129, %p130
    %p133 = scmp.ne.s32.totalorder %s118, %s132
    %p134 = scmp.eq.s32.totalorder %s21, 0
    %p135 = por %p133, %p134
    %s137 = sadd.s32 %s136, 1
    %p140 = scmp.eq.s32.totalorder %s15, 1
    %p141 = scmp.ne.s32.totalorder %s136, %s138
    %p142 = scmp.eq.s32.totalorder %s15, 0
    %p143 = por %p141, %p142
    %p144 = scmp.ne.s32.totalorder %s136, %s138
    %p145 = scmp.eq.s32.totalorder %s20, 1
    %p146 = por %p144, %p145
    %p147 = scmp.ne.s32.totalorder %s138, %s139
    %p148 = scmp.eq.s32.totalorder %s20, 0
    %p149 = por %p147, %p148
    %p150 = scmp.ne.s32.totalorder %s138, %s139
    %p151 = scmp.eq.s32.totalorder %s21, 1
    %p152 = por %p150, %p151
    %p154 = scmp.ne.s32.totalorder %s139, %s153
    %p155 = scmp.eq.s32.totalorder %s21, 0
    %p156 = por %p154, %p155
    %s158 = sadd.s32 %s157, 1
    %p161 = scmp.eq.s32.totalorder %s15, 1
    %p162 = scmp.ne.s32.totalorder %s157, %s159
    %p163 = scmp.eq.s32.totalorder %s15, 0
    %p164 = por %p162, %p163
    %p165 = scmp.ne.s32.totalorder %s157, %s159
    %p166 = scmp.eq.s32.totalorder %s20, 1
    %p167 = por %p165, %p166
    %p168 = scmp.ne.s32.totalorder %s159, %s160
    %p169 = scmp.eq.s32.totalorder %s20, 0
    %p170 = por %p168, %p169
    %p171 = scmp.ne.s32.totalorder %s159, %s160
    %p172 = scmp.eq.s32.totalorder %s21, 1
    %p173 = por %p171, %p172
    %p175 = scmp.ne.s32.totalorder %s160, %s174
    %p176 = scmp.eq.s32.totalorder %s21, 0
    %p177 = por %p175, %p176
    %s179 = sadd.s32 %s178, 1
    %p182 = scmp.eq.s32.totalorder %s15, 1
    %p183 = scmp.ne.s32.totalorder %s178, %s180
    %p184 = scmp.eq.s32.totalorder %s15, 0
    %p185 = por %p183, %p184
    %p186 = scmp.ne.s32.totalorder %s178, %s180
    %p187 = scmp.eq.s32.totalorder %s20, 1
    %p188 = por %p186, %p187
    %p189 = scmp.ne.s32.totalorder %s180, %s181
    %p190 = scmp.eq.s32.totalorder %s20, 0
    %p191 = por %p189, %p190
    %p192 = scmp.ne.s32.totalorder %s180, %s181
    %p193 = scmp.eq.s32.totalorder %s21, 1
    %p194 = por %p192, %p193
    %p196 = scmp.ne.s32.totalorder %s181, %s195
    %p197 = scmp.eq.s32.totalorder %s21, 0
    %p198 = por %p196, %p197
    %s200 = sadd.s32 %s199, 1
    %p203 = scmp.eq.s32.totalorder %s15, 1
    %p204 = scmp.ne.s32.totalorder %s199, %s201
    %p205 = scmp.eq.s32.totalorder %s15, 0
    %p206 = por %p204, %p205
    %p207 = scmp.ne.s32.totalorder %s199, %s201
    %p208 = scmp.eq.s32.totalorder %s20, 1
    %p209 = por %p207, %p208
    %p210 = scmp.ne.s32.totalorder %s201, %s202
    %p211 = scmp.eq.s32.totalorder %s20, 0
    %p212 = por %p210, %p211
    %p213 = scmp.ne.s32.totalorder %s201, %s202
    %p214 = scmp.eq.s32.totalorder %s21, 1
    %p215 = por %p213, %p214
    %p217 = scmp.ne.s32.totalorder %s202, %s216
    %p218 = scmp.eq.s32.totalorder %s21, 0
    %p219 = por %p217, %p218
    %s221 = sadd.s32 %s220, 1
    %p224 = scmp.eq.s32.totalorder %s15, 1
    %p225 = scmp.ne.s32.totalorder %s220, %s222
    %p226 = scmp.eq.s32.totalorder %s15, 0
    %p227 = por %p225, %p226
    %p228 = scmp.ne.s32.totalorder %s220, %s222
    %p229 = scmp.eq.s32.totalorder %s20, 1
    %p230 = por %p228, %p229
    %p231 = scmp.ne.s32.totalorder %s222, %s223
    %p232 = scmp.eq.s32.totalorder %s20, 0
    %p233 = por %p231, %p232
    %p234 = scmp.ne.s32.totalorder %s222, %s223
    %p235 = scmp.eq.s32.totalorder %s21, 1
    %p236 = por %p234, %p235
    %p238 = scmp.ne.s32.totalorder %s223, %s237
    %p239 = scmp.eq.s32.totalorder %s21, 0
    %p240 = por %p238, %p239
    %s241 = ssub.s32 %s22, %s34
    %s242 = ssub.s32 %s23, %s30
    %s243 = sor.u32 %s241, %s242
    %p244 = scmp.eq.s32.totalorder %s243, 0
    %s246 = sadd.s32 %s245, 1
    %s247 = scalar_select %p244, %s245, %s246
    %p250 = pneg %p244
    %p251 = scmp.eq.s32.totalorder %s15, 1
    %p252 = por %p250, %p251
    %p253 = scmp.ne.s32.totalorder %s245, %s248
    %p254 = scmp.eq.s32.totalorder %s15, 0
    %p255 = por %p253, %p254
    %p256 = scmp.ne.s32.totalorder %s245, %s248
    %p257 = scmp.eq.s32.totalorder %s20, 1
    %p258 = por %p256, %p257
    %p259 = scmp.ne.s32.totalorder %s248, %s249
    %p260 = scmp.eq.s32.totalorder %s20, 0
    %p261 = por %p259, %p260
    %p262 = scmp.ne.s32.totalorder %s248, %s249
    %p263 = scmp.eq.s32.totalorder %s21, 1
    %p264 = por %p262, %p263
    %p266 = scmp.ne.s32.totalorder %s249, %s265
    %p267 = scmp.eq.s32.totalorder %s21, 0
    %p268 = por %p266, %p267
    %p269 = scmp.le.s32.totalorder 1, %s15
    %p270 = scmp.lt.s32.totalorder %s15, 3
    %p271 = pnand %p269, %p270
    %p272 = pneg %p271
    // Predicated region
    $region9: #{transformer_forward.11} parent=5 // pred_check
      _
    $region10: #{transformer_forward.11} parent=5 // pred_check_branch
      %274 = sbr.rel (%p271) target = $region12
    $region11: #{transformer_forward.11} parent=5 // pred_region
      %s275 = ssub.s32 %s15, 1
      // Predicated region
      $region13: #{transformer_forward.11} parent=11 // pred_check
        %p276 = pneg %p128
      $region14: #{transformer_forward.11} parent=11 // pred_check_branch
        %278 = sbr.rel (%p276) target = $region16
      $region15: #{transformer_forward.11} parent=11 // pred_region
        _
      $region16: #{transformer_forward.11} parent=11 // pred_fallthru
        _
      // Predicated region
      $region17: #{transformer_forward.11} parent=11 // pred_check
        %p279 = pneg %p149
      $region18: #{transformer_forward.11} parent=11 // pred_check_branch
        %281 = sbr.rel (%p279) target = $region20
      $region19: #{transformer_forward.11} parent=11 // pred_region
        _
      $region20: #{transformer_forward.11} parent=11 // pred_fallthru
        _
      // Predicated region
      $region21: #{transformer_forward.11} parent=11 // pred_check
        %p282 = pneg %p170
      $region22: #{transformer_forward.11} parent=11 // pred_check_branch
        %284 = sbr.rel (%p282) target = $region24
      $region23: #{transformer_forward.11} parent=11 // pred_region
        _
      $region24: #{transformer_forward.11} parent=11 // pred_fallthru
        _
      // Predicated region
      $region25: #{transformer_forward.11} parent=11 // pred_check
        %p285 = pneg %p191
      $region26: #{transformer_forward.11} parent=11 // pred_check_branch
        %287 = sbr.rel (%p285) target = $region28
      $region27: #{transformer_forward.11} parent=11 // pred_region
        _
      $region28: #{transformer_forward.11} parent=11 // pred_fallthru
        _
      // Predicated region
      $region29: #{transformer_forward.11} parent=11 // pred_check
        %p288 = pneg %p212
      $region30: #{transformer_forward.11} parent=11 // pred_check_branch
        %290 = sbr.rel (%p288) target = $region32
      $region31: #{transformer_forward.11} parent=11 // pred_region
        _
      $region32: #{transformer_forward.11} parent=11 // pred_fallthru
        _
      // Predicated region
      $region33: #{transformer_forward.11} parent=11 // pred_check
        %p291 = pneg %p233
      $region34: #{transformer_forward.11} parent=11 // pred_check_branch
        %293 = sbr.rel (%p291) target = $region36
      $region35: #{transformer_forward.11} parent=11 // pred_region
        _
      $region36: #{transformer_forward.11} parent=11 // pred_fallthru
        _
    $region12: #{transformer_forward.11} parent=5 // pred_fallthru
      _
    %p294 = scmp.lt.s32.totalorder %s15, 2
    // Predicated region
    $region37: #{transformer_forward.11} parent=5 // pred_check
      %p295 = pneg %p294
    $region38: #{transformer_forward.11} parent=5 // pred_check_branch
      %297 = sbr.rel (%p295) target = $region40
    $region39: #{transformer_forward.11} parent=5 // pred_region
      // Predicated region
      $region41: #{transformer_forward.11} parent=39 // pred_check
        %p298 = pneg %p49
      $region42: #{transformer_forward.11} parent=39 // pred_check_branch
        %300 = sbr.rel (%p298) target = $region44
      $region43: #{transformer_forward.11} parent=39 // pred_region
        %p301 = scmp.lt.s32.totalorder %s22, 1
        %s302 = scalar_select %p301, %s22, 1
        %p303 = scmp.lt.s32.totalorder %s23, 0
        %s304 = scalar_select %p303, %s23, 0
        %s305 = sadd.s32 %s304, %s302
        %s306 = smul.addr %s305, 8
        %s307 = scalar_lea.vmem %s0, %s306
      $region44: #{transformer_forward.11} parent=39 // pred_fallthru
        _
      // Predicated region
      $region45: #{transformer_forward.11} parent=39 // pred_check
        %p308 = pneg %p75
      $region46: #{transformer_forward.11} parent=39 // pred_check_branch
        %310 = sbr.rel (%p308) target = $region48
      $region47: #{transformer_forward.11} parent=39 // pred_region
        %p311 = scmp.lt.s32.totalorder %s22, 1
        %s312 = scalar_select %p311, %s22, 1
        %s313 = smul.addr %s312, 8
        %s314 = scalar_lea.vmem %s1, %s313
      $region48: #{transformer_forward.11} parent=39 // pred_fallthru
        _
      // Predicated region
      $region49: #{transformer_forward.11} parent=39 // pred_check
        %p315 = pneg %p101
      $region50: #{transformer_forward.11} parent=39 // pred_check_branch
        %317 = sbr.rel (%p315) target = $region52
      $region51: #{transformer_forward.11} parent=39 // pred_region
        %p318 = scmp.lt.s32.totalorder %s22, 1
        %s319 = scalar_select %p318, %s22, 1
        %s320 = scalar_lea.vmem %s2, %s319
      $region52: #{transformer_forward.11} parent=39 // pred_fallthru
        _
    $region40: #{transformer_forward.11} parent=5 // pred_fallthru
      _
    %p321 = scmp.le.s32.totalorder 1, %s15
    %p322 = scmp.lt.s32.totalorder %s15, 3
    %p323 = pnand %p321, %p322
    %p324 = pneg %p323
    // Predicated region
    $region53: #{transformer_forward.11} parent=5 // pred_check
      _
    $region54: #{transformer_forward.11} parent=5 // pred_check_branch
      %326 = sbr.rel (%p323) target = $region56
    $region55: #{transformer_forward.11} parent=5 // pred_region
      %s327 = ssub.s32 %s15, 1
      %p328 = scmp.lt.s32.totalorder %s24, 1
      %s329 = scalar_select %p328, %s24, 1
      %p330 = scmp.lt.s32.totalorder %s25, 0
      %s331 = scalar_select %p330, %s25, 0
      %s332 = sadd.s32 %s331, %s329
      %s333 = smul.addr %s332, 8
      %s334 = scalar_lea.vmem %s0, %s333
      %p335 = pneg %p55
      %p336 = pneg %p52
      %p337 = scmp.lt.s32.totalorder %s24, 1
      %s338 = scalar_select %p337, %s24, 1
      %s339 = smul.addr %s338, 8
      %s340 = scalar_lea.vmem %s1, %s339
      %p341 = pneg %p81
      %p342 = pneg %p78
      %p343 = scmp.lt.s32.totalorder %s24, 1
      %s344 = scalar_select %p343, %s24, 1
      %s345 = scalar_lea.vmem %s2, %s344
      %p346 = pneg %p107
      %p347 = pneg %p104
      %p348 = pneg %p128
      %p349 = pneg %p125
      %p350 = pneg %p149
      %p351 = pneg %p146
      %p352 = pneg %p170
      %p353 = pneg %p167
      %p354 = pneg %p191
      %p355 = pneg %p188
      %p356 = pneg %p212
      %p357 = pneg %p209
      %p358 = pneg %p233
      %p359 = pneg %p230
      %p360 = pneg %p261
      %p361 = pneg %p258
      %p362 = scmp.lt.s32.totalorder %s24, 1
      %s363 = scalar_select %p362, %s24, 1
      %p364 = scmp.lt.s32.totalorder %s25, 0
      %s365 = scalar_select %p364, %s25, 0
      %s366 = sadd.s32 %s365, %s363
      %s367 = smul.addr %s366, 8
      %s368 = scalar_lea.vmem %s9, %s367
      %p369 = scmp.lt.s32.totalorder %s24, 1
      %s370 = scalar_select %p369, %s24, 1
      %p371 = scmp.lt.s32.totalorder %s25, 0
      %s372 = scalar_select %p371, %s25, 0
      %s373 = sadd.s32 %s372, %s370
      %s374 = smul.addr %s373, 8
      %s375 = scalar_lea.vmem %s0, %s374
      %p376 = scmp.lt.s32.totalorder %s24, 1
      %s377 = scalar_select %p376, %s24, 1
      %s378 = smul.addr %s377, 8
      %s379 = scalar_lea.vmem %s1, %s378
      %p380 = scmp.lt.s32.totalorder %s24, 1
      %s381 = scalar_select %p380, %s24, 1
      %s382 = scalar_lea.vmem %s2, %s381
      %p383 = scmp.lt.s32.totalorder %s24, 1
      %s384 = scalar_select %p383, %s24, 1
      %p385 = scmp.lt.s32.totalorder %s25, 0
      %s386 = scalar_select %p385, %s25, 0
      %s387 = sadd.s32 %s386, %s384
      %s388 = smul.addr %s387, 8
      %s389 = scalar_lea.vmem %s9, %s388
      %v391 = vld [vmem:[%s375] sm:$0xff]
      %v392 = vld [vmem:[%s382] sm:$0x1]
      %v393 = vld [vmem:[%s3] sm:$0xf]
      %v394 = vld [vmem:[%s3 + $0x4] sm:$0xf]
      %v395 = vld [vmem:[%s3 + $0x8] sm:$0xf]
      %v396 = vld [vmem:[%s3 + $0xc] sm:$0xf]
      %v397 = vld [vmem:[%s4] sm:$0x1]
      %v398 = vpack.c.bf16 %v391, %v391
      %v400 = vperm.slane %v397, 0
      %v406 = vunpack.c.l.b16 %v393
      %v407 = vunpack.c.l.b16 %v394
      %v408 = vunpack.c.l.b16 %v395
      %v409 = vunpack.c.l.b16 %v396
      %v410 = vpack.c.b16 %v407, %v406
      %v411 = vpack.c.b16 %v409, %v408
      %vm414 = vcmask 261120
      %v416 = vsel %vm414, %v398, 0
      %418 = vmatpush.bf16.msra.mxu0 0
      %419 = vmatpush.bf16.msra.mxu0 0
      %420 = vmatpush.bf16.msra.mxu0 0
      %421 = vmatpush.bf16.msra.mxu0 0
      %422 = vmatpush.bf16.msra.mxu0 0
      %423 = vmatpush.bf16.msra.mxu0 0
      %424 = vmatpush.bf16.msra.mxu0 %v411
      %425 = vmatpush.bf16.msra.mxu0 %v410
      %426 = vmatmul.bf16.gmra.mxu0 %v416
      %v427 = vpop.f32.mrf.mxu0
      %v428 = vadd.f32 %v400, %v427
      %v429 = vpop.f32.mrf.mxu0
      %430 = vdwg.mxu0
      %v431 = vpack.c.bf16 %v428, %v428
      %433 = vrot.lane.b32.xlu0 %v431, 120
      %v434 = vpop.permute.xlu0 %433
      %435 = vrot.lane.b32.xlu0 %v431, 112
      %v436 = vpop.permute.xlu0 %435
      %437 = vrot.lane.b32.xlu0 %v431, 104
      %v438 = vpop.permute.xlu0 %437
      %v441 = vpack.i.b16 %v434, %v431
      %v442 = vshrl.u32 %v431, 16
      %v443 = vshrl.u32 %v434, 16
      %v444 = vpack.i.b16 %v443, %v442
      %v447 = vpack.i.b16 %v438, %v436
      %v448 = vshrl.u32 %v436, 16
      %v449 = vshrl.u32 %v438, 16
      %v450 = vpack.i.b16 %v449, %v448
      %v453 = vunpack.c.l.s4 1983009808
      %v454 = vunpack.c.0.s8 %v453
      %v455 = vperm.slane %v441, %v454
      %v458 = vunpack.c.l.s4 1983009808
      %v459 = vunpack.c.0.s8 %v458
      %v460 = vperm.slane %v447, %v459
      %v461 = vrot.slane %v460, 4
      %vm462 = vcmask 1047556
      %v463 = vsel %vm462, %v461, %v455
      %v464 = vrot.slane %v455, 4
      %v465 = vsel %vm462, %v460, %v464
      %v467 = vunpack.c.l.s4 1934713408
      %v468 = vunpack.c.0.s8 %v467
      %v469 = vperm.slane %v463, %v468
      %v471 = vunpack.c.l.s4 1934713408
      %v472 = vunpack.c.0.s8 %v471
      %v473 = vperm.slane %v465, %v472
      %v474 = vrot.slane %v469, 4
      %v475 = vsel %vm462, 0, %v474
      %v476 = vrot.slane %v473, 4
      %v477 = vsel %vm462, 0, %v476
      %v480 = vunpack.c.l.s4 1983009808
      %v481 = vunpack.c.0.s8 %v480
      %v482 = vperm.slane %v444, %v481
      %v485 = vunpack.c.l.s4 1983009808
      %v486 = vunpack.c.0.s8 %v485
      %v487 = vperm.slane %v450, %v486
      %v488 = vrot.slane %v487, 4
      %v489 = vsel %vm462, %v488, %v482
      %v490 = vrot.slane %v482, 4
      %v491 = vsel %vm462, %v487, %v490
      %v493 = vunpack.c.l.s4 1934713408
      %v494 = vunpack.c.0.s8 %v493
      %v495 = vperm.slane %v489, %v494
      %v497 = vunpack.c.l.s4 1934713408
      %v498 = vunpack.c.0.s8 %v497
      %v499 = vperm.slane %v491, %v498
      %v500 = vrot.slane %v495, 4
      %v501 = vsel %vm462, 0, %v500
      %v502 = vrot.slane %v499, 4
      %v503 = vsel %vm462, 0, %v502
      %v504 = vsel %vm462, %v476, %v469
      %v506 = vunpack.c.l.s4 1983009808
      %v507 = vunpack.c.0.s8 %v506
      %v508 = vperm.slane %v504, %v507
      %v509 = vrot.slane %v477, 4
      %v510 = vsel %vm462, %v509, %v475
      %v512 = vunpack.c.l.s4 1983009808
      %v513 = vunpack.c.0.s8 %v512
      %v514 = vperm.slane %v510, %v513
      %v515 = vrot.slane %v514, 4
      %v516 = vsel %vm462, %v515, %v508
      %v518 = vunpack.c.l.s4 1934713408
      %v519 = vunpack.c.0.s8 %v518
      %v520 = vperm.slane %v516, %v519
      %v521 = vrot.slane %v520, 4
      %v522 = vsel %vm462, 0, %v521
      %v523 = vsel %vm462, %v502, %v495
      %v525 = vunpack.c.l.s4 1983009808
      %v526 = vunpack.c.0.s8 %v525
      %v527 = vperm.slane %v523, %v526
      %v528 = vrot.slane %v503, 4
      %v529 = vsel %vm462, %v528, %v501
      %v531 = vunpack.c.l.s4 1983009808
      %v532 = vunpack.c.0.s8 %v531
      %v533 = vperm.slane %v529, %v532
      %v534 = vrot.slane %v533, 4
      %v535 = vsel %vm462, %v534, %v527
      %v537 = vunpack.c.l.s4 1934713408
      %v538 = vunpack.c.0.s8 %v537
      %v539 = vperm.slane %v535, %v538
      %v540 = vrot.slane %v539, 4
      %v541 = vsel %vm462, 0, %v540
      %v544 = vpack.i.b16 %v539, %v520
      %v545 = vshrl.u32 %v520, 16
      %v546 = vshrl.u32 %v539, 16
      %v547 = vpack.i.b16 %v546, %v545
      %v550 = vpack.i.b16 %v541, %v522
      %v551 = vshrl.u32 %v522, 16
      %v552 = vshrl.u32 %v541, 16
      %v553 = vpack.i.b16 %v552, %v551
      %554 = vrot.lane.b32.xlu0 %v431, 96
      %v555 = vpop.permute.xlu0 %554
      %556 = vrot.lane.b32.xlu0 %v434, 96
      %v557 = vpop.permute.xlu0 %556
      %558 = vrot.lane.b32.xlu0 %v436, 96
      %v559 = vpop.permute.xlu0 %558
      %560 = vrot.lane.b32.xlu0 %v438, 96
      %v561 = vpop.permute.xlu0 %560
      %v564 = vpack.i.b16 %v557, %v555
      %v565 = vshrl.u32 %v555, 16
      %v566 = vshrl.u32 %v557, 16
      %v567 = vpack.i.b16 %v566, %v565
      %v570 = vpack.i.b16 %v561, %v559
      %v571 = vshrl.u32 %v559, 16
      %v572 = vshrl.u32 %v561, 16
      %v573 = vpack.i.b16 %v572, %v571
      %v576 = vunpack.c.l.s4 1983009808
      %v577 = vunpack.c.0.s8 %v576
      %v578 = vperm.slane %v564, %v577
      %v581 = vunpack.c.l.s4 1983009808
      %v582 = vunpack.c.0.s8 %v581
      %v583 = vperm.slane %v570, %v582
      %v584 = vrot.slane %v583, 4
      %v585 = vsel %vm462, %v584, %v578
      %v586 = vrot.slane %v578, 4
      %v587 = vsel %vm462, %v583, %v586
      %v589 = vunpack.c.l.s4 1934713408
      %v590 = vunpack.c.0.s8 %v589
      %v591 = vperm.slane %v585, %v590
      %v593 = vunpack.c.l.s4 1934713408
      %v594 = vunpack.c.0.s8 %v593
      %v595 = vperm.slane %v587, %v594
      %v596 = vrot.slane %v591, 4
      %v597 = vsel %vm462, 0, %v596
      %v598 = vrot.slane %v595, 4
      %v599 = vsel %vm462, 0, %v598
      %v602 = vunpack.c.l.s4 1983009808
      %v603 = vunpack.c.0.s8 %v602
      %v604 = vperm.slane %v567, %v603
      %v607 = vunpack.c.l.s4 1983009808
      %v608 = vunpack.c.0.s8 %v607
      %v609 = vperm.slane %v573, %v608
      %v610 = vrot.slane %v609, 4
      %v611 = vsel %vm462, %v610, %v604
      %v612 = vrot.slane %v604, 4
      %v613 = vsel %vm462, %v609, %v612
      %v615 = vunpack.c.l.s4 1934713408
      %v616 = vunpack.c.0.s8 %v615
      %v617 = vperm.slane %v611, %v616
      %v619 = vunpack.c.l.s4 1934713408
      %v620 = vunpack.c.0.s8 %v619
      %v621 = vperm.slane %v613, %v620
      %v622 = vrot.slane %v617, 4
      %v623 = vsel %vm462, 0, %v622
      %v624 = vrot.slane %v621, 4
      %v625 = vsel %vm462, 0, %v624
      %v626 = vsel %vm462, %v598, %v591
      %v628 = vunpack.c.l.s4 1983009808
      %v629 = vunpack.c.0.s8 %v628
      %v630 = vperm.slane %v626, %v629
      %v631 = vrot.slane %v599, 4
      %v632 = vsel %vm462, %v631, %v597
      %v634 = vunpack.c.l.s4 1983009808
      %v635 = vunpack.c.0.s8 %v634
      %v636 = vperm.slane %v632, %v635
      %v637 = vrot.slane %v636, 4
      %v638 = vsel %vm462, %v637, %v630
      %v640 = vunpack.c.l.s4 1934713408
      %v641 = vunpack.c.0.s8 %v640
      %v642 = vperm.slane %v638, %v641
      %v643 = vrot.slane %v642, 4
      %v644 = vsel %vm462, 0, %v643
      %v645 = vsel %vm462, %v624, %v617
      %v647 = vunpack.c.l.s4 1983009808
      %v648 = vunpack.c.0.s8 %v647
      %v649 = vperm.slane %v645, %v648
      %v650 = vrot.slane %v625, 4
      %v651 = vsel %vm462, %v650, %v623
      %v653 = vunpack.c.l.s4 1983009808
      %v654 = vunpack.c.0.s8 %v653
      %v655 = vperm.slane %v651, %v654
      %v656 = vrot.slane %v655, 4
      %v657 = vsel %vm462, %v656, %v649
      %v659 = vunpack.c.l.s4 1934713408
      %v660 = vunpack.c.0.s8 %v659
      %v661 = vperm.slane %v657, %v660
      %v662 = vrot.slane %v661, 4
      %v663 = vsel %vm462, 0, %v662
      %v666 = vpack.i.b16 %v661, %v642
      %v667 = vshrl.u32 %v642, 16
      %v668 = vshrl.u32 %v661, 16
      %v669 = vpack.i.b16 %v668, %v667
      %v672 = vpack.i.b16 %v663, %v644
      %v673 = vshrl.u32 %v644, 16
      %v674 = vshrl.u32 %v663, 16
      %v675 = vpack.i.b16 %v674, %v673
      %676 = vrot.lane.b32.xlu0 %v431, 64
      %v677 = vpop.permute.xlu0 %676
      %678 = vrot.lane.b32.xlu0 %v434, 64
      %v679 = vpop.permute.xlu0 %678
      %680 = vrot.lane.b32.xlu0 %v436, 64
      %v681 = vpop.permute.xlu0 %680
      %682 = vrot.lane.b32.xlu0 %v438, 64
      %v683 = vpop.permute.xlu0 %682
      %v686 = vpack.i.b16 %v679, %v677
      %v687 = vshrl.u32 %v677, 16
      %v688 = vshrl.u32 %v679, 16
      %v689 = vpack.i.b16 %v688, %v687
      %v692 = vpack.i.b16 %v683, %v681
      %v693 = vshrl.u32 %v681, 16
      %v694 = vshrl.u32 %v683, 16
      %v695 = vpack.i.b16 %v694, %v693
      %v698 = vunpack.c.l.s4 1983009808
      %v699 = vunpack.c.0.s8 %v698
      %v700 = vperm.slane %v686, %v699
      %v703 = vunpack.c.l.s4 1983009808
      %v704 = vunpack.c.0.s8 %v703
      %v705 = vperm.slane %v692, %v704
      %v706 = vrot.slane %v705, 4
      %v707 = vsel %vm462, %v706, %v700
      %v708 = vrot.slane %v700, 4
      %v709 = vsel %vm462, %v705, %v708
      %v711 = vunpack.c.l.s4 1934713408
      %v712 = vunpack.c.0.s8 %v711
      %v713 = vperm.slane %v707, %v712
      %v715 = vunpack.c.l.s4 1934713408
      %v716 = vunpack.c.0.s8 %v715
      %v717 = vperm.slane %v709, %v716
      %v718 = vrot.slane %v713, 4
      %v719 = vsel %vm462, 0, %v718
      %v720 = vrot.slane %v717, 4
      %v721 = vsel %vm462, 0, %v720
      %v724 = vunpack.c.l.s4 1983009808
      %v725 = vunpack.c.0.s8 %v724
      %v726 = vperm.slane %v689, %v725
      %v729 = vunpack.c.l.s4 1983009808
      %v730 = vunpack.c.0.s8 %v729
      %v731 = vperm.slane %v695, %v730
      %v732 = vrot.slane %v731, 4
      %v733 = vsel %vm462, %v732, %v726
      %v734 = vrot.slane %v726, 4
      %v735 = vsel %vm462, %v731, %v734
      %v737 = vunpack.c.l.s4 1934713408
      %v738 = vunpack.c.0.s8 %v737
      %v739 = vperm.slane %v733, %v738
      %v741 = vunpack.c.l.s4 1934713408
      %v742 = vunpack.c.0.s8 %v741
      %v743 = vperm.slane %v735, %v742
      %v744 = vrot.slane %v739, 4
      %v745 = vsel %vm462, 0, %v744
      %v746 = vrot.slane %v743, 4
      %v747 = vsel %vm462, 0, %v746
      %v748 = vsel %vm462, %v720, %v713
      %v750 = vunpack.c.l.s4 1983009808
      %v751 = vunpack.c.0.s8 %v750
      %v752 = vperm.slane %v748, %v751
      %v753 = vrot.slane %v721, 4
      %v754 = vsel %vm462, %v753, %v719
      %v756 = vunpack.c.l.s4 1983009808
      %v757 = vunpack.c.0.s8 %v756
      %v758 = vperm.slane %v754, %v757
      %v759 = vrot.slane %v758, 4
      %v760 = vsel %vm462, %v759, %v752
      %v762 = vunpack.c.l.s4 1934713408
      %v763 = vunpack.c.0.s8 %v762
      %v764 = vperm.slane %v760, %v763
      %v765 = vrot.slane %v764, 4
      %v766 = vsel %vm462, 0, %v765
      %v767 = vsel %vm462, %v746, %v739
      %v769 = vunpack.c.l.s4 1983009808
      %v770 = vunpack.c.0.s8 %v769
      %v771 = vperm.slane %v767, %v770
      %v772 = vrot.slane %v747, 4
      %v773 = vsel %vm462, %v772, %v745
      %v775 = vunpack.c.l.s4 1983009808
      %v776 = vunpack.c.0.s8 %v775
      %v777 = vperm.slane %v773, %v776
      %v778 = vrot.slane %v777, 4
      %v779 = vsel %vm462, %v778, %v771
      %v781 = vunpack.c.l.s4 1934713408
      %v782 = vunpack.c.0.s8 %v781
      %v783 = vperm.slane %v779, %v782
      %v784 = vrot.slane %v783, 4
      %v785 = vsel %vm462, 0, %v784
      %v788 = vpack.i.b16 %v783, %v764
      %v789 = vshrl.u32 %v764, 16
      %v790 = vshrl.u32 %v783, 16
      %v791 = vpack.i.b16 %v790, %v789
      %v794 = vpack.i.b16 %v785, %v766
      %v795 = vshrl.u32 %v766, 16
      %v796 = vshrl.u32 %v785, 16
      %v797 = vpack.i.b16 %v796, %v795
      %vm798 = vcmask 64512
      %v800 = vsel %vm798, %v544, 0
      %v803 = vsel %vm798, %v666, 0
      %805 = vmatpush.bf16.xpose.msra.mxu0 0
      %806 = vmatpush.bf16.xpose.msra.mxu0 0
      %807 = vmatpush.bf16.xpose.msra.mxu0 0
      %808 = vmatpush.bf16.xpose.msra.mxu0 0
      %809 = vmatpush.bf16.xpose.msra.mxu0 0
      %810 = vmatpush.bf16.xpose.msra.mxu0 0
      %811 = vmatpush.bf16.xpose.msra.mxu0 0
      %812 = vmatpush.bf16.xpose.msra.mxu0 %v803
      %813 = vmatmul.bf16.gmra.mxu0 %v800
      %v814 = vpop.f32.mrf.mxu0
      %v815 = vadd.f32 0.0, %v814
      %v816 = vpop.f32.mrf.mxu0
      %817 = vdwg.mxu0
      %v819 = vsel %vm798, %v547, 0
      %v822 = vsel %vm798, %v669, 0
      %824 = vmatpush.bf16.xpose.msra.mxu0 0
      %825 = vmatpush.bf16.xpose.msra.mxu0 0
      %826 = vmatpush.bf16.xpose.msra.mxu0 0
      %827 = vmatpush.bf16.xpose.msra.mxu0 0
      %828 = vmatpush.bf16.xpose.msra.mxu0 0
      %829 = vmatpush.bf16.xpose.msra.mxu0 0
      %830 = vmatpush.bf16.xpose.msra.mxu0 0
      %831 = vmatpush.bf16.xpose.msra.mxu0 %v822
      %832 = vmatmul.bf16.gmra.mxu0 %v819
      %v833 = vpop.f32.mrf.mxu0
      %v834 = vadd.f32 0.0, %v833
      %v835 = vpop.f32.mrf.mxu0
      %836 = vdwg.mxu0
      %v838 = vsel %vm798, %v550, 0
      %v841 = vsel %vm798, %v672, 0
      %843 = vmatpush.bf16.xpose.msra.mxu0 0
      %844 = vmatpush.bf16.xpose.msra.mxu0 0
      %845 = vmatpush.bf16.xpose.msra.mxu0 0
      %846 = vmatpush.bf16.xpose.msra.mxu0 0
      %847 = vmatpush.bf16.xpose.msra.mxu0 0
      %848 = vmatpush.bf16.xpose.msra.mxu0 0
      %849 = vmatpush.bf16.xpose.msra.mxu0 0
      %850 = vmatpush.bf16.xpose.msra.mxu0 %v841
      %851 = vmatmul.bf16.gmra.mxu0 %v838
      %v852 = vpop.f32.mrf.mxu0
      %v853 = vadd.f32 0.0, %v852
      %v854 = vpop.f32.mrf.mxu0
      %855 = vdwg.mxu0
      %v857 = vsel %vm798, %v553, 0
      %v860 = vsel %vm798, %v675, 0
      %862 = vmatpush.bf16.xpose.msra.mxu0 0
      %863 = vmatpush.bf16.xpose.msra.mxu0 0
      %864 = vmatpush.bf16.xpose.msra.mxu0 0
      %865 = vmatpush.bf16.xpose.msra.mxu0 0
      %866 = vmatpush.bf16.xpose.msra.mxu0 0
      %867 = vmatpush.bf16.xpose.msra.mxu0 0
      %868 = vmatpush.bf16.xpose.msra.mxu0 0
      %869 = vmatpush.bf16.xpose.msra.mxu0 %v860
      %870 = vmatmul.bf16.gmra.mxu0 %v857
      %v871 = vpop.f32.mrf.mxu0
      %v872 = vadd.f32 0.0, %v871
      %v873 = vpop.f32.mrf.mxu0
      %874 = vdwg.mxu0
      %v875 = vmul.f32 %v815, 0.35355338
      %v876 = vmul.f32 %v834, 0.35355338
      %v877 = vmul.f32 %v853, 0.35355338
      %v878 = vmul.f32 %v872, 0.35355338
      %v880 = vperm.slane %v392, 0
      %v882 = vadd.f32 %v875, %v880
      %v883 = vadd.f32 %v876, %v880
      %v884 = vadd.f32 %v877, %v880
      %v885 = vadd.f32 %v878, %v880
      %v886 = vsel %vm798, %v882, -inf
      %887 = vmax.xlane.f32.xlu0 %v886
      %v888 = vpop.xlane.xlu0 %887
      %v889 = vsel %vm798, %v883, -inf
      %890 = vmax.xlane.f32.xlu0 %v889
      %v891 = vpop.xlane.xlu0 %890
      %v892 = vsel %vm798, %v884, -inf
      %893 = vmax.xlane.f32.xlu0 %v892
      %v894 = vpop.xlane.xlu0 %893
      %v895 = vsel %vm798, %v885, -inf
      %896 = vmax.xlane.f32.xlu0 %v895
      %v897 = vpop.xlane.xlu0 %896
      %v898 = vsub.f32 %v882, %v888
      %v899 = vsub.f32 %v883, %v891
      %v900 = vsub.f32 %v884, %v894
      %v901 = vsub.f32 %v885, %v897
      %v902 = vmul.f32 %v898, 1.442695
      %v903 = vpow.pop %v902
      %v904 = vmul.f32 %v899, 1.442695
      %v905 = vpow.pop %v904
      %v906 = vmul.f32 %v900, 1.442695
      %v907 = vpow.pop %v906
      %v908 = vmul.f32 %v901, 1.442695
      %v909 = vpow.pop %v908
      %v910 = vsel %vm798, %v903, 0.0
      %911 = vadd.xlane.f32.xlu0 %v910
      %v912 = vpop.xlane.xlu0 %911
      %v913 = vsel %vm798, %v905, 0.0
      %914 = vadd.xlane.f32.xlu0 %v913
      %v915 = vpop.xlane.xlu0 %914
      %v916 = vsel %vm798, %v907, 0.0
      %917 = vadd.xlane.f32.xlu0 %v916
      %v918 = vpop.xlane.xlu0 %917
      %v919 = vsel %vm798, %v909, 0.0
      %920 = vadd.xlane.f32.xlu0 %v919
      %v921 = vpop.xlane.xlu0 %920
      %v922 = vrcp.pop %v912
      %v923 = vmul.f32 %v912, %v922
      %v924 = vsub.f32 1.0, %v923
      %v925 = vmul.f32 %v922, %v924
      %v926 = vadd.f32 %v922, %v925
      %vm927 = vweird.f32 %v912
      %vm928 = vweird.f32 %v922
      %vm929 = vmor %vm927, %vm928
      %v930 = vsel %vm929, %v922, %v926
      %v931 = vand.u32 2147483647, %v912
      %vm932 = vcmp.eq.f32.partialorder %v931, 8.507059e+37
      %v933 = vand.u32 %v912, 2147483648
      %v934 = vor.u32 1.1754944e-38, %v933
      %v935 = vsel %vm932, %v934, %v930
      %v936 = vmul.f32 %v903, %v935
      %v937 = vrcp.pop %v915
      %v938 = vmul.f32 %v915, %v937
      %v939 = vsub.f32 1.0, %v938
      %v940 = vmul.f32 %v937, %v939
      %v941 = vadd.f32 %v937, %v940
      %vm942 = vweird.f32 %v915
      %vm943 = vweird.f32 %v937
      %vm944 = vmor %vm942, %vm943
      %v945 = vsel %vm944, %v937, %v941
      %v946 = vand.u32 2147483647, %v915
      %vm947 = vcmp.eq.f32.partialorder %v946, 8.507059e+37
      %v948 = vand.u32 %v915, 2147483648
      %v949 = vor.u32 1.1754944e-38, %v948
      %v950 = vsel %vm947, %v949, %v945
      %v951 = vmul.f32 %v905, %v950
      %v952 = vrcp.pop %v918
      %v953 = vmul.f32 %v918, %v952
      %v954 = vsub.f32 1.0, %v953
      %v955 = vmul.f32 %v952, %v954
      %v956 = vadd.f32 %v952, %v955
      %vm957 = vweird.f32 %v918
      %vm958 = vweird.f32 %v952
      %vm959 = vmor %vm957, %vm958
      %v960 = vsel %vm959, %v952, %v956
      %v961 = vand.u32 2147483647, %v918
      %vm962 = vcmp.eq.f32.partialorder %v961, 8.507059e+37
      %v963 = vand.u32 %v918, 2147483648
      %v964 = vor.u32 1.1754944e-38, %v963
      %v965 = vsel %vm962, %v964, %v960
      %v966 = vmul.f32 %v907, %v965
      %v967 = vrcp.pop %v921
      %v968 = vmul.f32 %v921, %v967
      %v969 = vsub.f32 1.0, %v968
      %v970 = vmul.f32 %v967, %v969
      %v971 = vadd.f32 %v967, %v970
      %vm972 = vweird.f32 %v921
      %vm973 = vweird.f32 %v967
      %vm974 = vmor %vm972, %vm973
      %v975 = vsel %vm974, %v967, %v971
      %v976 = vand.u32 2147483647, %v921
      %vm977 = vcmp.eq.f32.partialorder %v976, 8.507059e+37
      %v978 = vand.u32 %v921, 2147483648
      %v979 = vor.u32 1.1754944e-38, %v978
      %v980 = vsel %vm977, %v979, %v975
      %v981 = vmul.f32 %v909, %v980
      %v982 = vpack.c.bf16 %v936, %v936
      %v983 = vpack.c.bf16 %v951, %v951
      %v984 = vpack.c.bf16 %v966, %v966
      %v985 = vpack.c.bf16 %v981, %v981
      %v987 = vsel %vm798, %v982, 0
      %vm989 = vcmask 1043456
      %v991 = vsel %vm989, %v788, 0
      %993 = vmatpush.bf16.msra.mxu0 0
      %994 = vmatpush.bf16.msra.mxu0 0
      %995 = vmatpush.bf16.msra.mxu0 0
      %996 = vmatpush.bf16.msra.mxu0 0
      %997 = vmatpush.bf16.msra.mxu0 0
      %998 = vmatpush.bf16.msra.mxu0 0
      %999 = vmatpush.bf16.msra.mxu0 0
      %1000 = vmatpush.bf16.msra.mxu0 %v991
      %1001 = vmatmul.bf16.gmra.mxu0 %v987
      %v1002 = vpop.f32.mrf.mxu0
      %v1003 = vadd.f32 0.0, %v1002
      %v1004 = vpop.f32.mrf.mxu0
      %1005 = vdwg.mxu0
      %v1007 = vsel %vm798, %v983, 0
      %v1010 = vsel %vm989, %v791, 0
      %1012 = vmatpush.bf16.msra.mxu0 0
      %1013 = vmatpush.bf16.msra.mxu0 0
      %1014 = vmatpush.bf16.msra.mxu0 0
      %1015 = vmatpush.bf16.msra.mxu0 0
      %1016 = vmatpush.bf16.msra.mxu0 0
      %1017 = vmatpush.bf16.msra.mxu0 0
      %1018 = vmatpush.bf16.msra.mxu0 0
      %1019 = vmatpush.bf16.msra.mxu0 %v1010
      %1020 = vmatmul.bf16.gmra.mxu0 %v1007
      %v1021 = vpop.f32.mrf.mxu0
      %v1022 = vadd.f32 0.0, %v1021
      %v1023 = vpop.f32.mrf.mxu0
      %1024 = vdwg.mxu0
      %v1026 = vsel %vm798, %v984, 0
      %v1029 = vsel %vm989, %v794, 0
      %1031 = vmatpush.bf16.msra.mxu0 0
      %1032 = vmatpush.bf16.msra.mxu0 0
      %1033 = vmatpush.bf16.msra.mxu0 0
      %1034 = vmatpush.bf16.msra.mxu0 0
      %1035 = vmatpush.bf16.msra.mxu0 0
      %1036 = vmatpush.bf16.msra.mxu0 0
      %1037 = vmatpush.bf16.msra.mxu0 0
      %1038 = vmatpush.bf16.msra.mxu0 %v1029
      %1039 = vmatmul.bf16.gmra.mxu0 %v1026
      %v1040 = vpop.f32.mrf.mxu0
      %v1041 = vadd.f32 0.0, %v1040
      %v1042 = vpop.f32.mrf.mxu0
      %1043 = vdwg.mxu0
      %v1045 = vsel %vm798, %v985, 0
      %v1048 = vsel %vm989, %v797, 0
      %1050 = vmatpush.bf16.msra.mxu0 0
      %1051 = vmatpush.bf16.msra.mxu0 0
      %1052 = vmatpush.bf16.msra.mxu0 0
      %1053 = vmatpush.bf16.msra.mxu0 0
      %1054 = vmatpush.bf16.msra.mxu0 0
      %1055 = vmatpush.bf16.msra.mxu0 0
      %1056 = vmatpush.bf16.msra.mxu0 0
      %1057 = vmatpush.bf16.msra.mxu0 %v1048
      %1058 = vmatmul.bf16.gmra.mxu0 %v1045
      %v1059 = vpop.f32.mrf.mxu0
      %v1060 = vadd.f32 0.0, %v1059
      %v1061 = vpop.f32.mrf.mxu0
      %1062 = vdwg.mxu0
      %v1063 = vrot.slane %v1041, 4
      %vm1064 = vcmask 1047556
      %v1065 = vsel %vm1064, %v1063, %v1003
      %v1066 = vrot.slane %v1003, 4
      %v1067 = vsel %vm1064, %v1041, %v1066
      %v1069 = vunpack.c.l.s4 1983009808
      %v1070 = vunpack.c.0.s8 %v1069
      %v1071 = vperm.slane %v1065, %v1070
      %v1073 = vunpack.c.l.s4 1983009808
      %v1074 = vunpack.c.0.s8 %v1073
      %v1075 = vperm.slane %v1067, %v1074
      %v1076 = vrot.slane %v1060, 4
      %v1077 = vsel %vm1064, %v1076, %v1022
      %v1078 = vrot.slane %v1022, 4
      %v1079 = vsel %vm1064, %v1060, %v1078
      %v1081 = vunpack.c.l.s4 1983009808
      %v1082 = vunpack.c.0.s8 %v1081
      %v1083 = vperm.slane %v1077, %v1082
      %v1085 = vunpack.c.l.s4 1983009808
      %v1086 = vunpack.c.0.s8 %v1085
      %v1087 = vperm.slane %v1079, %v1086
      %v1088 = vrot.slane %v1083, 4
      %v1089 = vsel %vm1064, %v1088, %v1071
      %v1090 = vrot.slane %v1071, 4
      %v1091 = vsel %vm1064, %v1083, %v1090
      %v1093 = vunpack.c.l.s4 1934713408
      %v1094 = vunpack.c.0.s8 %v1093
      %v1095 = vperm.slane %v1089, %v1094
      %v1097 = vunpack.c.l.s4 1934713408
      %v1098 = vunpack.c.0.s8 %v1097
      %v1099 = vperm.slane %v1091, %v1098
      %v1100 = vrot.slane %v1087, 4
      %v1101 = vsel %vm1064, %v1100, %v1075
      %v1102 = vrot.slane %v1075, 4
      %v1103 = vsel %vm1064, %v1087, %v1102
      %v1105 = vunpack.c.l.s4 1934713408
      %v1106 = vunpack.c.0.s8 %v1105
      %v1107 = vperm.slane %v1101, %v1106
      %v1109 = vunpack.c.l.s4 1934713408
      %v1110 = vunpack.c.0.s8 %v1109
      %v1111 = vperm.slane %v1103, %v1110
      %v1112 = vrot.slane %v1095, 4
      %v1113 = vsel %vm1064, 0.0, %v1112
      %v1114 = vrot.slane %v1099, 4
      %v1115 = vsel %vm1064, 0.0, %v1114
      %v1116 = vrot.slane %v1107, 4
      %v1117 = vsel %vm1064, 0.0, %v1116
      %v1118 = vrot.slane %v1111, 4
      %v1119 = vsel %vm1064, 0.0, %v1118
      %v1120 = vsel %vm1064, %v1114, %v1095
      %v1122 = vunpack.c.l.s4 1983009808
      %v1123 = vunpack.c.0.s8 %v1122
      %v1124 = vperm.slane %v1120, %v1123
      %v1125 = vrot.slane %v1115, 4
      %v1126 = vsel %vm1064, %v1125, %v1113
      %v1128 = vunpack.c.l.s4 1983009808
      %v1129 = vunpack.c.0.s8 %v1128
      %v1130 = vperm.slane %v1126, %v1129
      %v1131 = vsel %vm1064, %v1118, %v1107
      %v1133 = vunpack.c.l.s4 1983009808
      %v1134 = vunpack.c.0.s8 %v1133
      %v1135 = vperm.slane %v1131, %v1134
      %v1136 = vrot.slane %v1119, 4
      %v1137 = vsel %vm1064, %v1136, %v1117
      %v1139 = vunpack.c.l.s4 1983009808
      %v1140 = vunpack.c.0.s8 %v1139
      %v1141 = vperm.slane %v1137, %v1140
      %v1142 = vrot.slane %v1130, 4
      %v1143 = vsel %vm1064, %v1142, %v1124
      %v1144 = vrot.slane %v1124, 4
      %v1145 = vsel %vm1064, %v1130, %v1144
      %v1147 = vunpack.c.l.s4 1934713408
      %v1148 = vunpack.c.0.s8 %v1147
      %v1149 = vperm.slane %v1143, %v1148
      %v1151 = vunpack.c.l.s4 1934713408
      %v1152 = vunpack.c.0.s8 %v1151
      %v1153 = vperm.slane %v1145, %v1152
      %v1154 = vrot.slane %v1141, 4
      %v1155 = vsel %vm1064, %v1154, %v1135
      %v1156 = vrot.slane %v1135, 4
      %v1157 = vsel %vm1064, %v1141, %v1156
      %v1159 = vunpack.c.l.s4 1934713408
      %v1160 = vunpack.c.0.s8 %v1159
      %v1161 = vperm.slane %v1155, %v1160
      %v1163 = vunpack.c.l.s4 1934713408
      %v1164 = vunpack.c.0.s8 %v1163
      %v1165 = vperm.slane %v1157, %v1164
      %v1166 = vrot.slane %v1161, 4
      %v1167 = vsel %vm1064, %v1166, %v1149
      %v1168 = vrot.slane %v1149, 4
      %v1169 = vsel %vm1064, %v1161, %v1168
      %v1170 = vrot.slane %v1165, 4
      %v1171 = vsel %vm1064, %v1170, %v1153
      %v1172 = vrot.slane %v1153, 4
      %v1173 = vsel %vm1064, %v1165, %v1172
      %1175 = vrot.lane.b32.xlu0 %v1169, 8
      %v1176 = vpop.permute.xlu0 %1175
      %1179 = vrot.lane.b32.xlu0 %v1171, 16
      %v1180 = vpop.permute.xlu0 %1179
      %1183 = vrot.lane.b32.xlu0 %v1173, 24
      %v1184 = vpop.permute.xlu0 %1183
      %v1186 = vsel %vm798, %v1167, %v1176
      %vm1187 = vcmask 130048
      %v1188 = vsel %vm1187, %v1186, %v1180
      %vm1189 = vcmask 195584
      %v1190 = vsel %vm1189, %v1188, %v1184
      %v1191 = vpack.c.bf16 %v1190, %v1190
      %v1192 = vld [vmem:[%s5] sm:$0xf]
      %v1193 = vld [vmem:[%s5 + $0x4] sm:$0xf]
      %v1194 = vld [vmem:[%s5 + $0x8] sm:$0xf]
      %v1195 = vld [vmem:[%s5 + $0xc] sm:$0xf]
      %v1196 = vld [vmem:[%s6] sm:$0x1]
      %v1198 = vperm.slane %v1196, 0
      %v1204 = vunpack.c.l.b16 %v1192
      %v1205 = vunpack.c.l.b16 %v1193
      %v1206 = vunpack.c.l.b16 %v1194
      %v1207 = vunpack.c.l.b16 %v1195
      %v1208 = vpack.c.b16 %v1205, %v1204
      %v1209 = vpack.c.b16 %v1207, %v1206
      %v1213 = vsel %vm414, %v1191, 0
      %1215 = vmatpush.bf16.msra.mxu0 0
      %1216 = vmatpush.bf16.msra.mxu0 0
      %1217 = vmatpush.bf16.msra.mxu0 0
      %1218 = vmatpush.bf16.msra.mxu0 0
      %1219 = vmatpush.bf16.msra.mxu0 0
      %1220 = vmatpush.bf16.msra.mxu0 0
      %1221 = vmatpush.bf16.msra.mxu0 %v1209
      %1222 = vmatpush.bf16.msra.mxu0 %v1208
      %1223 = vmatmul.bf16.gmra.mxu0 %v1213
      %v1224 = vpop.f32.mrf.mxu0
      %v1225 = vadd.f32 %v1198, %v1224
      %v1226 = vpop.f32.mrf.mxu0
      %1227 = vdwg.mxu0
      %v1228 = vadd.f32 %v391, %v1225
      %v1229 = vld [vmem:[%s7] sm:$0x1]
      %v1230 = vld [vmem:[%s8] sm:$0x1]
      %v1231 = vsel %vm414, %v1228, 0.0
      %1232 = vadd.xlane.f32.xlu0 %v1231
      %v1233 = vpop.xlane.xlu0 %1232
      %v1234 = vrcp.pop 32.0
      %v1235 = vmul.f32 32.0, %v1234
      %v1236 = vsub.f32 1.0, %v1235
      %v1237 = vmul.f32 %v1234, %v1236
      %v1238 = vadd.f32 %v1234, %v1237
      %vm1239 = vweird.f32 %v1234
      %v1240 = vsel %vm1239, %v1234, %v1238
      %v1241 = vmul.f32 %v1233, %v1240
      %v1242 = vmul.f32 %v1228, %v1228
      %v1243 = vsel %vm414, %v1242, 0.0
      %1244 = vadd.xlane.f32.xlu0 %v1243
      %v1245 = vpop.xlane.xlu0 %1244
      %v1246 = vmul.f32 %v1245, %v1240
      %v1247 = vmul.f32 %v1241, %v1241
      %v1248 = vsub.f32 %v1246, %v1247
      %v1249 = vmax.f32 %v1248, 0.0
      %v1250 = vsub.f32 %v1228, %v1241
      %v1251 = vadd.f32 %v1249, 1e-05
      %v1252 = vrsqrt.pop %v1251
      %v1253 = vmul.f32 %v1252, %v1251
      %v1254 = vmul.f32 %v1253, %v1252
      %v1255 = vmul.f32 0.5, %v1254
      %v1256 = vsub.f32 1.5, %v1255
      %v1257 = vmul.f32 %v1252, %v1256
      %vm1258 = vweird.f32 %v1251
      %vm1259 = vweird.f32 %v1252
      %vm1260 = vmor %vm1258, %vm1259
      %v1261 = vsel %vm1260, %v1252, %v1257
      %v1262 = vmul.f32 %v1250, %v1261
      %v1264 = vperm.slane %v1229, 0
      %v1266 = vmul.f32 %v1262, %v1264
      %v1268 = vperm.slane %v1230, 0
      %v1270 = vadd.f32 %v1266, %v1268
      %1271 = vst.msk [vmem:[%s389] sm:$0xff] %vm414, %v1270
      %p1272 = scmp.lt.s32.totalorder %s24, 1
      %s1273 = scalar_select %p1272, %s24, 1
      %p1274 = scmp.lt.s32.totalorder %s25, 0
      %s1275 = scalar_select %p1274, %s25, 0
      %s1276 = sadd.s32 %s1275, %s1273
      %s1277 = smul.addr %s1276, 8
      %s1278 = scalar_lea.vmem %s9, %s1277
      // Predicated region
      $region57: #{transformer_forward.11} parent=55 // pred_check
        %p1279 = pneg %p258
      $region58: #{transformer_forward.11} parent=55 // pred_check_branch
        %1281 = sbr.rel (%p1279) target = $region60
      $region59: #{transformer_forward.11} parent=55 // pred_region
        _
      $region60: #{transformer_forward.11} parent=55 // pred_fallthru
        _
    $region56: #{transformer_forward.11} parent=5 // pred_fallthru
      _
    %p1282 = scmp.le.s32.totalorder 2, %s15
    // Predicated region
    $region61: #{transformer_forward.11} parent=5 // pred_check
      %p1283 = pneg %p1282
    $region62: #{transformer_forward.11} parent=5 // pred_check_branch
      %1285 = sbr.rel (%p1283) target = $region64
    $region63: #{transformer_forward.11} parent=5 // pred_region
      %s1286 = ssub.s32 %s15, 2
      // Predicated region
      $region65: #{transformer_forward.11} parent=63 // pred_check
        %p1287 = pneg %p264
      $region66: #{transformer_forward.11} parent=63 // pred_check_branch
        %1289 = sbr.rel (%p1287) target = $region68
      $region67: #{transformer_forward.11} parent=63 // pred_region
        %p1290 = scmp.lt.s32.totalorder %s26, 1
        %s1291 = scalar_select %p1290, %s26, 1
        %p1292 = scmp.lt.s32.totalorder %s27, 0
        %s1293 = scalar_select %p1292, %s27, 0
        %s1294 = sadd.s32 %s1293, %s1291
        %s1295 = smul.addr %s1294, 8
        %s1296 = scalar_lea.vmem %s9, %s1295
      $region68: #{transformer_forward.11} parent=63 // pred_fallthru
        _
    $region64: #{transformer_forward.11} parent=5 // pred_fallthru
      _
  $region6: #{transformer_forward.11} parent=0 // loop_footer
    %s19 = sadd.s32 1, %s15
  $region7: #{transformer_forward.11} parent=0 // loop_footer_branch
    %14 = sbr.rel target = $region3
  $region8: #{transformer_forward.11} parent=0 // loop_exit
    _

// kernel: transformer_forward.15
$region0: #{transformer_forward.15}
  #allocation0 [shape = 'u32[]', space=smem, size = 0x4, offset = 0x4, fixed_abs, tag = 'smem constant byte address 0x4 - core index']
  #allocation1 [shape = 'u32[72,128]{1,0:T(1,128)}', space=vmem, size = 0x9000, scoped, tag = 'internal scratch']
  %s0 = inlined_call_operand.vmem [shape: f32[2,8,32], index: 0, kind: input, shape index: {}, may-alias: {0,1}]
  %s1 = inlined_call_operand.vmem [shape: f32[2,8,32], index: 1, kind: input, shape index: {}, may-alias: {0,1}]
  %s2 = inlined_call_operand.vmem [shape: f32[2,8,8], index: 2, kind: input, shape index: {}]
  %s3 = inlined_call_operand.vmem [shape: bf16[32,96], index: 3, kind: input, shape index: {}]
  %s4 = inlined_call_operand.vmem [shape: f32[1,96], index: 4, kind: input, shape index: {}]
  %s5 = inlined_call_operand.vmem [shape: bf16[32,32], index: 5, kind: input, shape index: {}]
  %s6 = inlined_call_operand.vmem [shape: f32[1,32], index: 6, kind: input, shape index: {}]
  %s7 = inlined_call_operand.vmem [shape: f32[1,32], index: 7, kind: input, shape index: {}]
  %s8 = inlined_call_operand.vmem [shape: f32[1,32], index: 8, kind: input, shape index: {}]
  %s9 = inlined_call_operand.vmem [shape: f32[2,8,32], index: 9, kind: output, shape index: {}]
  %s10 = sld [smem:[#allocation0]]
  $region69: #{transformer_forward.15} parent=0
    _
  %s12 = ssub.s32 1, %s10
  %s13 = scalar_select 0, %s12, %s10
  loop: start=0, step=1, limit=4
  $region2: #{transformer_forward.15} parent=0 // loop_pre_header
    _
  $region3: #{transformer_forward.15} parent=0 // loop_header
    %s15 = sphi 0, %s19
    %p16 = scmp.ge.s32.totalorder %s15, 4
    %s22 = sphi 0, %s34
    %s23 = sphi 0, %s30
    %s24 = sphi 0, %s22
    %s25 = sphi 0, %s23
    %s26 = sphi 0, %s24
    %s27 = sphi 0, %s25
    %s39 = sphi 0, %s41
    %s42 = sphi 0, %s39
    %s43 = sphi 0, %s42
    %s59 = sphi 0, %s43
    %s65 = sphi 0, %s67
    %s68 = sphi 0, %s65
    %s69 = sphi 0, %s68
    %s85 = sphi 0, %s69
    %s93 = sphi 0, %s95
    %s96 = sphi 0, %s93
    %s97 = sphi 0, %s96
    %s113 = sphi 0, %s97
    %s117 = sphi 0, %s117
    %s119 = sphi 0, %s117
    %s120 = sphi 0, %s119
    %s134 = sphi 0, %s120
    %s138 = sphi 0, %s138
    %s140 = sphi 0, %s138
    %s141 = sphi 0, %s140
    %s155 = sphi 0, %s141
    %s159 = sphi 0, %s159
    %s161 = sphi 0, %s159
    %s162 = sphi 0, %s161
    %s176 = sphi 0, %s162
    %s180 = sphi 0, %s180
    %s182 = sphi 0, %s180
    %s183 = sphi 0, %s182
    %s197 = sphi 0, %s183
    %s201 = sphi 0, %s201
    %s203 = sphi 0, %s201
    %s204 = sphi 0, %s203
    %s218 = sphi 0, %s204
    %s222 = sphi 0, %s222
    %s224 = sphi 0, %s222
    %s225 = sphi 0, %s224
    %s239 = sphi 0, %s225
    %s247 = sphi 0, %s249
    %s250 = sphi 0, %s247
    %s251 = sphi 0, %s250
    %s267 = sphi 0, %s251
  $region4: #{transformer_forward.15} parent=0 // loop_header_branch
    %18 = sbr.rel (%p16) target = $region8
  $region5: #{transformer_forward.15} parent=0 // loop_body
    %s20 = ssub.s32 %s15, 1
    %s21 = ssub.s32 %s15, 2
    %s28 = sadd.s32 1, %s23
    %p29 = scmp.ge.s32.totalorder %s28, 1
    %s30 = scalar_select %p29, 0, %s28
    %s31 = sadd.s32 1, %s22
    %s32 = scalar_select %p29, %s31, %s22
    %p33 = scmp.ge.s32.totalorder %s32, 2
    %s34 = scalar_select %p33, 0, %s32
    %s35 = ssub.s32 %s22, %s34
    %s36 = ssub.s32 %s23, %s30
    %s37 = sor.u32 %s35, %s36
    %p38 = scmp.eq.s32.totalorder %s37, 0
    %s40 = sadd.s32 %s39, 1
    %s41 = scalar_select %p38, %s39, %s40
    %p44 = pneg %p38
    %p45 = scmp.eq.s32.totalorder %s15, 1
    %p46 = por %p44, %p45
    %p47 = scmp.ne.s32.totalorder %s39, %s42
    %p48 = scmp.eq.s32.totalorder %s15, 0
    %p49 = por %p47, %p48
    %p50 = scmp.ne.s32.totalorder %s39, %s42
    %p51 = scmp.eq.s32.totalorder %s20, 1
    %p52 = por %p50, %p51
    %p53 = scmp.ne.s32.totalorder %s42, %s43
    %p54 = scmp.eq.s32.totalorder %s20, 0
    %p55 = por %p53, %p54
    %p56 = scmp.ne.s32.totalorder %s42, %s43
    %p57 = scmp.eq.s32.totalorder %s21, 1
    %p58 = por %p56, %p57
    %p60 = scmp.ne.s32.totalorder %s43, %s59
    %p61 = scmp.eq.s32.totalorder %s21, 0
    %p62 = por %p60, %p61
    %s63 = ssub.s32 %s22, %s34
    %p64 = scmp.eq.s32.totalorder %s63, 0
    %s66 = sadd.s32 %s65, 1
    %s67 = scalar_select %p64, %s65, %s66
    %p70 = pneg %p64
    %p71 = scmp.eq.s32.totalorder %s15, 1
    %p72 = por %p70, %p71
    %p73 = scmp.ne.s32.totalorder %s65, %s68
    %p74 = scmp.eq.s32.totalorder %s15, 0
    %p75 = por %p73, %p74
    %p76 = scmp.ne.s32.totalorder %s65, %s68
    %p77 = scmp.eq.s32.totalorder %s20, 1
    %p78 = por %p76, %p77
    %p79 = scmp.ne.s32.totalorder %s68, %s69
    %p80 = scmp.eq.s32.totalorder %s20, 0
    %p81 = por %p79, %p80
    %p82 = scmp.ne.s32.totalorder %s68, %s69
    %p83 = scmp.eq.s32.totalorder %s21, 1
    %p84 = por %p82, %p83
    %p86 = scmp.ne.s32.totalorder %s69, %s85
    %p87 = scmp.eq.s32.totalorder %s21, 0
    %p88 = por %p86, %p87
    %s89 = ssub.s32 %s22, %s34
    %s90 = ssub.s32 %s23, %s30
    %s91 = sor.u32 %s89, %s90
    %p92 = scmp.eq.s32.totalorder %s91, 0
    %s94 = sadd.s32 %s93, 1
    %s95 = scalar_select %p92, %s93, %s94
    %p98 = pneg %p92
    %p99 = scmp.eq.s32.totalorder %s15, 1
    %p100 = por %p98, %p99
    %p101 = scmp.ne.s32.totalorder %s93, %s96
    %p102 = scmp.eq.s32.totalorder %s15, 0
    %p103 = por %p101, %p102
    %p104 = scmp.ne.s32.totalorder %s93, %s96
    %p105 = scmp.eq.s32.totalorder %s20, 1
    %p106 = por %p104, %p105
    %p107 = scmp.ne.s32.totalorder %s96, %s97
    %p108 = scmp.eq.s32.totalorder %s20, 0
    %p109 = por %p107, %p108
    %p110 = scmp.ne.s32.totalorder %s96, %s97
    %p111 = scmp.eq.s32.totalorder %s21, 1
    %p112 = por %p110, %p111
    %p114 = scmp.ne.s32.totalorder %s97, %s113
    %p115 = scmp.eq.s32.totalorder %s21, 0
    %p116 = por %p114, %p115
    %s118 = sadd.s32 %s117, 1
    %p121 = scmp.eq.s32.totalorder %s15, 1
    %p122 = scmp.ne.s32.totalorder %s117, %s119
    %p123 = scmp.eq.s32.totalorder %s15, 0
    %p124 = por %p122, %p123
    %p125 = scmp.ne.s32.totalorder %s117, %s119
    %p126 = scmp.eq.s32.totalorder %s20, 1
    %p127 = por %p125, %p126
    %p128 = scmp.ne.s32.totalorder %s119, %s120
    %p129 = scmp.eq.s32.totalorder %s20, 0
    %p130 = por %p128, %p129
    %p131 = scmp.ne.s32.totalorder %s119, %s120
    %p132 = scmp.eq.s32.totalorder %s21, 1
    %p133 = por %p131, %p132
    %p135 = scmp.ne.s32.totalorder %s120, %s134
    %p136 = scmp.eq.s32.totalorder %s21, 0
    %p137 = por %p135, %p136
    %s139 = sadd.s32 %s138, 1
    %p142 = scmp.eq.s32.totalorder %s15, 1
    %p143 = scmp.ne.s32.totalorder %s138, %s140
    %p144 = scmp.eq.s32.totalorder %s15, 0
    %p145 = por %p143, %p144
    %p146 = scmp.ne.s32.totalorder %s138, %s140
    %p147 = scmp.eq.s32.totalorder %s20, 1
    %p148 = por %p146, %p147
    %p149 = scmp.ne.s32.totalorder %s140, %s141
    %p150 = scmp.eq.s32.totalorder %s20, 0
    %p151 = por %p149, %p150
    %p152 = scmp.ne.s32.totalorder %s140, %s141
    %p153 = scmp.eq.s32.totalorder %s21, 1
    %p154 = por %p152, %p153
    %p156 = scmp.ne.s32.totalorder %s141, %s155
    %p157 = scmp.eq.s32.totalorder %s21, 0
    %p158 = por %p156, %p157
    %s160 = sadd.s32 %s159, 1
    %p163 = scmp.eq.s32.totalorder %s15, 1
    %p164 = scmp.ne.s32.totalorder %s159, %s161
    %p165 = scmp.eq.s32.totalorder %s15, 0
    %p166 = por %p164, %p165
    %p167 = scmp.ne.s32.totalorder %s159, %s161
    %p168 = scmp.eq.s32.totalorder %s20, 1
    %p169 = por %p167, %p168
    %p170 = scmp.ne.s32.totalorder %s161, %s162
    %p171 = scmp.eq.s32.totalorder %s20, 0
    %p172 = por %p170, %p171
    %p173 = scmp.ne.s32.totalorder %s161, %s162
    %p174 = scmp.eq.s32.totalorder %s21, 1
    %p175 = por %p173, %p174
    %p177 = scmp.ne.s32.totalorder %s162, %s176
    %p178 = scmp.eq.s32.totalorder %s21, 0
    %p179 = por %p177, %p178
    %s181 = sadd.s32 %s180, 1
    %p184 = scmp.eq.s32.totalorder %s15, 1
    %p185 = scmp.ne.s32.totalorder %s180, %s182
    %p186 = scmp.eq.s32.totalorder %s15, 0
    %p187 = por %p185, %p186
    %p188 = scmp.ne.s32.totalorder %s180, %s182
    %p189 = scmp.eq.s32.totalorder %s20, 1
    %p190 = por %p188, %p189
    %p191 = scmp.ne.s32.totalorder %s182, %s183
    %p192 = scmp.eq.s32.totalorder %s20, 0
    %p193 = por %p191, %p192
    %p194 = scmp.ne.s32.totalorder %s182, %s183
    %p195 = scmp.eq.s32.totalorder %s21, 1
    %p196 = por %p194, %p195
    %p198 = scmp.ne.s32.totalorder %s183, %s197
    %p199 = scmp.eq.s32.totalorder %s21, 0
    %p200 = por %p198, %p199
    %s202 = sadd.s32 %s201, 1
    %p205 = scmp.eq.s32.totalorder %s15, 1
    %p206 = scmp.ne.s32.totalorder %s201, %s203
    %p207 = scmp.eq.s32.totalorder %s15, 0
    %p208 = por %p206, %p207
    %p209 = scmp.ne.s32.totalorder %s201, %s203
    %p210 = scmp.eq.s32.totalorder %s20, 1
    %p211 = por %p209, %p210
    %p212 = scmp.ne.s32.totalorder %s203, %s204
    %p213 = scmp.eq.s32.totalorder %s20, 0
    %p214 = por %p212, %p213
    %p215 = scmp.ne.s32.totalorder %s203, %s204
    %p216 = scmp.eq.s32.totalorder %s21, 1
    %p217 = por %p215, %p216
    %p219 = scmp.ne.s32.totalorder %s204, %s218
    %p220 = scmp.eq.s32.totalorder %s21, 0
    %p221 = por %p219, %p220
    %s223 = sadd.s32 %s222, 1
    %p226 = scmp.eq.s32.totalorder %s15, 1
    %p227 = scmp.ne.s32.totalorder %s222, %s224
    %p228 = scmp.eq.s32.totalorder %s15, 0
    %p229 = por %p227, %p228
    %p230 = scmp.ne.s32.totalorder %s222, %s224
    %p231 = scmp.eq.s32.totalorder %s20, 1
    %p232 = por %p230, %p231
    %p233 = scmp.ne.s32.totalorder %s224, %s225
    %p234 = scmp.eq.s32.totalorder %s20, 0
    %p235 = por %p233, %p234
    %p236 = scmp.ne.s32.totalorder %s224, %s225
    %p237 = scmp.eq.s32.totalorder %s21, 1
    %p238 = por %p236, %p237
    %p240 = scmp.ne.s32.totalorder %s225, %s239
    %p241 = scmp.eq.s32.totalorder %s21, 0
    %p242 = por %p240, %p241
    %s243 = ssub.s32 %s22, %s34
    %s244 = ssub.s32 %s23, %s30
    %s245 = sor.u32 %s243, %s244
    %p246 = scmp.eq.s32.totalorder %s245, 0
    %s248 = sadd.s32 %s247, 1
    %s249 = scalar_select %p246, %s247, %s248
    %p252 = pneg %p246
    %p253 = scmp.eq.s32.totalorder %s15, 1
    %p254 = por %p252, %p253
    %p255 = scmp.ne.s32.totalorder %s247, %s250
    %p256 = scmp.eq.s32.totalorder %s15, 0
    %p257 = por %p255, %p256
    %p258 = scmp.ne.s32.totalorder %s247, %s250
    %p259 = scmp.eq.s32.totalorder %s20, 1
    %p260 = por %p258, %p259
    %p261 = scmp.ne.s32.totalorder %s250, %s251
    %p262 = scmp.eq.s32.totalorder %s20, 0
    %p263 = por %p261, %p262
    %p264 = scmp.ne.s32.totalorder %s250, %s251
    %p265 = scmp.eq.s32.totalorder %s21, 1
    %p266 = por %p264, %p265
    %p268 = scmp.ne.s32.totalorder %s251, %s267
    %p269 = scmp.eq.s32.totalorder %s21, 0
    %p270 = por %p268, %p269
    %p271 = scmp.le.s32.totalorder 1, %s15
    %p272 = scmp.lt.s32.totalorder %s15, 3
    %p273 = pnand %p271, %p272
    %p274 = pneg %p273
    // Predicated region
    $region9: #{transformer_forward.15} parent=5 // pred_check
      _
    $region10: #{transformer_forward.15} parent=5 // pred_check_branch
      %276 = sbr.rel (%p273) target = $region12
    $region11: #{transformer_forward.15} parent=5 // pred_region
      %s277 = ssub.s32 %s15, 1
      // Predicated region
      $region13: #{transformer_forward.15} parent=11 // pred_check
        %p278 = pneg %p130
      $region14: #{transformer_forward.15} parent=11 // pred_check_branch
        %280 = sbr.rel (%p278) target = $region16
      $region15: #{transformer_forward.15} parent=11 // pred_region
        _
      $region16: #{transformer_forward.15} parent=11 // pred_fallthru
        _
      // Predicated region
      $region17: #{transformer_forward.15} parent=11 // pred_check
        %p281 = pneg %p151
      $region18: #{transformer_forward.15} parent=11 // pred_check_branch
        %283 = sbr.rel (%p281) target = $region20
      $region19: #{transformer_forward.15} parent=11 // pred_region
        _
      $region20: #{transformer_forward.15} parent=11 // pred_fallthru
        _
      // Predicated region
      $region21: #{transformer_forward.15} parent=11 // pred_check
        %p284 = pneg %p172
      $region22: #{transformer_forward.15} parent=11 // pred_check_branch
        %286 = sbr.rel (%p284) target = $region24
      $region23: #{transformer_forward.15} parent=11 // pred_region
        _
      $region24: #{transformer_forward.15} parent=11 // pred_fallthru
        _
      // Predicated region
      $region25: #{transformer_forward.15} parent=11 // pred_check
        %p287 = pneg %p193
      $region26: #{transformer_forward.15} parent=11 // pred_check_branch
        %289 = sbr.rel (%p287) target = $region28
      $region27: #{transformer_forward.15} parent=11 // pred_region
        _
      $region28: #{transformer_forward.15} parent=11 // pred_fallthru
        _
      // Predicated region
      $region29: #{transformer_forward.15} parent=11 // pred_check
        %p290 = pneg %p214
      $region30: #{transformer_forward.15} parent=11 // pred_check_branch
        %292 = sbr.rel (%p290) target = $region32
      $region31: #{transformer_forward.15} parent=11 // pred_region
        _
      $region32: #{transformer_forward.15} parent=11 // pred_fallthru
        _
      // Predicated region
      $region33: #{transformer_forward.15} parent=11 // pred_check
        %p293 = pneg %p235
      $region34: #{transformer_forward.15} parent=11 // pred_check_branch
        %295 = sbr.rel (%p293) target = $region36
      $region35: #{transformer_forward.15} parent=11 // pred_region
        _
      $region36: #{transformer_forward.15} parent=11 // pred_fallthru
        _
    $region12: #{transformer_forward.15} parent=5 // pred_fallthru
      _
    %p296 = scmp.lt.s32.totalorder %s15, 2
    // Predicated region
    $region37: #{transformer_forward.15} parent=5 // pred_check
      %p297 = pneg %p296
    $region38: #{transformer_forward.15} parent=5 // pred_check_branch
      %299 = sbr.rel (%p297) target = $region40
    $region39: #{transformer_forward.15} parent=5 // pred_region
      // Predicated region
      $region41: #{transformer_forward.15} parent=39 // pred_check
        %p300 = pneg %p49
      $region42: #{transformer_forward.15} parent=39 // pred_check_branch
        %302 = sbr.rel (%p300) target = $region44
      $region43: #{transformer_forward.15} parent=39 // pred_region
        %p303 = scmp.lt.s32.totalorder %s22, 1
        %s304 = scalar_select %p303, %s22, 1
        %p305 = scmp.lt.s32.totalorder %s23, 0
        %s306 = scalar_select %p305, %s23, 0
        %s307 = sadd.s32 %s306, %s304
        %s308 = smul.addr %s307, 8
        %s309 = scalar_lea.vmem %s0, %s308
      $region44: #{transformer_forward.15} parent=39 // pred_fallthru
        _
      // Predicated region
      $region45: #{transformer_forward.15} parent=39 // pred_check
        %p310 = pneg %p75
      $region46: #{transformer_forward.15} parent=39 // pred_check_branch
        %312 = sbr.rel (%p310) target = $region48
      $region47: #{transformer_forward.15} parent=39 // pred_region
        %p313 = scmp.lt.s32.totalorder %s22, 1
        %s314 = scalar_select %p313, %s22, 1
        %s315 = smul.addr %s314, 8
        %s316 = scalar_lea.vmem %s1, %s315
      $region48: #{transformer_forward.15} parent=39 // pred_fallthru
        _
      // Predicated region
      $region49: #{transformer_forward.15} parent=39 // pred_check
        %p317 = pneg %p103
      $region50: #{transformer_forward.15} parent=39 // pred_check_branch
        %319 = sbr.rel (%p317) target = $region52
      $region51: #{transformer_forward.15} parent=39 // pred_region
        %p320 = scmp.lt.s32.totalorder %s22, 1
        %s321 = scalar_select %p320, %s22, 1
        %p322 = scmp.lt.s32.totalorder %s23, 0
        %s323 = scalar_select %p322, %s23, 0
        %s324 = sadd.s32 %s323, %s321
        %s325 = smul.addr %s324, 8
        %s326 = scalar_lea.vmem %s2, %s325
      $region52: #{transformer_forward.15} parent=39 // pred_fallthru
        _
    $region40: #{transformer_forward.15} parent=5 // pred_fallthru
      _
    %p327 = scmp.le.s32.totalorder 1, %s15
    %p328 = scmp.lt.s32.totalorder %s15, 3
    %p329 = pnand %p327, %p328
    %p330 = pneg %p329
    // Predicated region
    $region53: #{transformer_forward.15} parent=5 // pred_check
      _
    $region54: #{transformer_forward.15} parent=5 // pred_check_branch
      %332 = sbr.rel (%p329) target = $region56
    $region55: #{transformer_forward.15} parent=5 // pred_region
      %s333 = ssub.s32 %s15, 1
      %p334 = scmp.lt.s32.totalorder %s24, 1
      %s335 = scalar_select %p334, %s24, 1
      %p336 = scmp.lt.s32.totalorder %s25, 0
      %s337 = scalar_select %p336, %s25, 0
      %s338 = sadd.s32 %s337, %s335
      %s339 = smul.addr %s338, 8
      %s340 = scalar_lea.vmem %s0, %s339
      %p341 = pneg %p55
      %p342 = pneg %p52
      %p343 = scmp.lt.s32.totalorder %s24, 1
      %s344 = scalar_select %p343, %s24, 1
      %s345 = smul.addr %s344, 8
      %s346 = scalar_lea.vmem %s1, %s345
      %p347 = pneg %p81
      %p348 = pneg %p78
      %p349 = scmp.lt.s32.totalorder %s24, 1
      %s350 = scalar_select %p349, %s24, 1
      %p351 = scmp.lt.s32.totalorder %s25, 0
      %s352 = scalar_select %p351, %s25, 0
      %s353 = sadd.s32 %s352, %s350
      %s354 = smul.addr %s353, 8
      %s355 = scalar_lea.vmem %s2, %s354
      %p356 = pneg %p109
      %p357 = pneg %p106
      %p358 = pneg %p130
      %p359 = pneg %p127
      %p360 = pneg %p151
      %p361 = pneg %p148
      %p362 = pneg %p172
      %p363 = pneg %p169
      %p364 = pneg %p193
      %p365 = pneg %p190
      %p366 = pneg %p214
      %p367 = pneg %p211
      %p368 = pneg %p235
      %p369 = pneg %p232
      %p370 = pneg %p263
      %p371 = pneg %p260
      %p372 = scmp.lt.s32.totalorder %s24, 1
      %s373 = scalar_select %p372, %s24, 1
      %p374 = scmp.lt.s32.totalorder %s25, 0
      %s375 = scalar_select %p374, %s25, 0
      %s376 = sadd.s32 %s375, %s373
      %s377 = smul.addr %s376, 8
      %s378 = scalar_lea.vmem %s9, %s377
      %p379 = scmp.lt.s32.totalorder %s24, 1
      %s380 = scalar_select %p379, %s24, 1
      %p381 = scmp.lt.s32.totalorder %s25, 0
      %s382 = scalar_select %p381, %s25, 0
      %s383 = sadd.s32 %s382, %s380
      %s384 = smul.addr %s383, 8
      %s385 = scalar_lea.vmem %s0, %s384
      %p386 = scmp.lt.s32.totalorder %s24, 1
      %s387 = scalar_select %p386, %s24, 1
      %s388 = smul.addr %s387, 8
      %s389 = scalar_lea.vmem %s1, %s388
      %p390 = scmp.lt.s32.totalorder %s24, 1
      %s391 = scalar_select %p390, %s24, 1
      %p392 = scmp.lt.s32.totalorder %s25, 0
      %s393 = scalar_select %p392, %s25, 0
      %s394 = sadd.s32 %s393, %s391
      %s395 = smul.addr %s394, 8
      %s396 = scalar_lea.vmem %s2, %s395
      %p397 = scmp.lt.s32.totalorder %s24, 1
      %s398 = scalar_select %p397, %s24, 1
      %p399 = scmp.lt.s32.totalorder %s25, 0
      %s400 = scalar_select %p399, %s25, 0
      %s401 = sadd.s32 %s400, %s398
      %s402 = smul.addr %s401, 8
      %s403 = scalar_lea.vmem %s9, %s402
      %v405 = vld [vmem:[%s385] sm:$0xff]
      %v406 = vld [vmem:[%s396] sm:$0xff]
      %v407 = vld [vmem:[%s3] sm:$0xf]
      %v408 = vld [vmem:[%s3 + $0x4] sm:$0xf]
      %v409 = vld [vmem:[%s3 + $0x8] sm:$0xf]
      %v410 = vld [vmem:[%s3 + $0xc] sm:$0xf]
      %v411 = vld [vmem:[%s4] sm:$0x1]
      %v412 = vpack.c.bf16 %v405, %v405
      %v414 = vperm.slane %v411, 0
      %v420 = vunpack.c.l.b16 %v407
      %v421 = vunpack.c.l.b16 %v408
      %v422 = vunpack.c.l.b16 %v409
      %v423 = vunpack.c.l.b16 %v410
      %v424 = vpack.c.b16 %v421, %v420
      %v425 = vpack.c.b16 %v423, %v422
      %vm428 = vcmask 261120
      %v430 = vsel %vm428, %v412, 0
      %432 = vmatpush.bf16.msra.mxu0 0
      %433 = vmatpush.bf16.msra.mxu0 0
      %434 = vmatpush.bf16.msra.mxu0 0
      %435 = vmatpush.bf16.msra.mxu0 0
      %436 = vmatpush.bf16.msra.mxu0 0
      %437 = vmatpush.bf16.msra.mxu0 0
      %438 = vmatpush.bf16.msra.mxu0 %v425
      %439 = vmatpush.bf16.msra.mxu0 %v424
      %440 = vmatmul.bf16.gmra.mxu0 %v430
      %v441 = vpop.f32.mrf.mxu0
      %v442 = vadd.f32 %v414, %v441
      %v443 = vpop.f32.mrf.mxu0
      %444 = vdwg.mxu0
      %v445 = vpack.c.bf16 %v442, %v442
      %447 = vrot.lane.b32.xlu0 %v445, 120
      %v448 = vpop.permute.xlu0 %447
      %449 = vrot.lane.b32.xlu0 %v445, 112
      %v450 = vpop.permute.xlu0 %449
      %451 = vrot.lane.b32.xlu0 %v445, 104
      %v452 = vpop.permute.xlu0 %451
      %v455 = vpack.i.b16 %v448, %v445
      %v456 = vshrl.u32 %v445, 16
      %v457 = vshrl.u32 %v448, 16
      %v458 = vpack.i.b16 %v457, %v456
      %v461 = vpack.i.b16 %v452, %v450
      %v462 = vshrl.u32 %v450, 16
      %v463 = vshrl.u32 %v452, 16
      %v464 = vpack.i.b16 %v463, %v462
      %v467 = vunpack.c.l.s4 1983009808
      %v468 = vunpack.c.0.s8 %v467
      %v469 = vperm.slane %v455, %v468
      %v472 = vunpack.c.l.s4 1983009808
      %v473 = vunpack.c.0.s8 %v472
      %v474 = vperm.slane %v461, %v473
      %v475 = vrot.slane %v474, 4
      %vm476 = vcmask 1047556
      %v477 = vsel %vm476, %v475, %v469
      %v478 = vrot.slane %v469, 4
      %v479 = vsel %vm476, %v474, %v478
      %v481 = vunpack.c.l.s4 1934713408
      %v482 = vunpack.c.0.s8 %v481
      %v483 = vperm.slane %v477, %v482
      %v485 = vunpack.c.l.s4 1934713408
      %v486 = vunpack.c.0.s8 %v485
      %v487 = vperm.slane %v479, %v486
      %v488 = vrot.slane %v483, 4
      %v489 = vsel %vm476, 0, %v488
      %v490 = vrot.slane %v487, 4
      %v491 = vsel %vm476, 0, %v490
      %v494 = vunpack.c.l.s4 1983009808
      %v495 = vunpack.c.0.s8 %v494
      %v496 = vperm.slane %v458, %v495
      %v499 = vunpack.c.l.s4 1983009808
      %v500 = vunpack.c.0.s8 %v499
      %v501 = vperm.slane %v464, %v500
      %v502 = vrot.slane %v501, 4
      %v503 = vsel %vm476, %v502, %v496
      %v504 = vrot.slane %v496, 4
      %v505 = vsel %vm476, %v501, %v504
      %v507 = vunpack.c.l.s4 1934713408
      %v508 = vunpack.c.0.s8 %v507
      %v509 = vperm.slane %v503, %v508
      %v511 = vunpack.c.l.s4 1934713408
      %v512 = vunpack.c.0.s8 %v511
      %v513 = vperm.slane %v505, %v512
      %v514 = vrot.slane %v509, 4
      %v515 = vsel %vm476, 0, %v514
      %v516 = vrot.slane %v513, 4
      %v517 = vsel %vm476, 0, %v516
      %v518 = vsel %vm476, %v490, %v483
      %v520 = vunpack.c.l.s4 1983009808
      %v521 = vunpack.c.0.s8 %v520
      %v522 = vperm.slane %v518, %v521
      %v523 = vrot.slane %v491, 4
      %v524 = vsel %vm476, %v523, %v489
      %v526 = vunpack.c.l.s4 1983009808
      %v527 = vunpack.c.0.s8 %v526
      %v528 = vperm.slane %v524, %v527
      %v529 = vrot.slane %v528, 4
      %v530 = vsel %vm476, %v529, %v522
      %v532 = vunpack.c.l.s4 1934713408
      %v533 = vunpack.c.0.s8 %v532
      %v534 = vperm.slane %v530, %v533
      %v535 = vrot.slane %v534, 4
      %v536 = vsel %vm476, 0, %v535
      %v537 = vsel %vm476, %v516, %v509
      %v539 = vunpack.c.l.s4 1983009808
      %v540 = vunpack.c.0.s8 %v539
      %v541 = vperm.slane %v537, %v540
      %v542 = vrot.slane %v517, 4
      %v543 = vsel %vm476, %v542, %v515
      %v545 = vunpack.c.l.s4 1983009808
      %v546 = vunpack.c.0.s8 %v545
      %v547 = vperm.slane %v543, %v546
      %v548 = vrot.slane %v547, 4
      %v549 = vsel %vm476, %v548, %v541
      %v551 = vunpack.c.l.s4 1934713408
      %v552 = vunpack.c.0.s8 %v551
      %v553 = vperm.slane %v549, %v552
      %v554 = vrot.slane %v553, 4
      %v555 = vsel %vm476, 0, %v554
      %v558 = vpack.i.b16 %v553, %v534
      %v559 = vshrl.u32 %v534, 16
      %v560 = vshrl.u32 %v553, 16
      %v561 = vpack.i.b16 %v560, %v559
      %v564 = vpack.i.b16 %v555, %v536
      %v565 = vshrl.u32 %v536, 16
      %v566 = vshrl.u32 %v555, 16
      %v567 = vpack.i.b16 %v566, %v565
      %568 = vrot.lane.b32.xlu0 %v445, 96
      %v569 = vpop.permute.xlu0 %568
      %570 = vrot.lane.b32.xlu0 %v448, 96
      %v571 = vpop.permute.xlu0 %570
      %572 = vrot.lane.b32.xlu0 %v450, 96
      %v573 = vpop.permute.xlu0 %572
      %574 = vrot.lane.b32.xlu0 %v452, 96
      %v575 = vpop.permute.xlu0 %574
      %v578 = vpack.i.b16 %v571, %v569
      %v579 = vshrl.u32 %v569, 16
      %v580 = vshrl.u32 %v571, 16
      %v581 = vpack.i.b16 %v580, %v579
      %v584 = vpack.i.b16 %v575, %v573
      %v585 = vshrl.u32 %v573, 16
      %v586 = vshrl.u32 %v575, 16
      %v587 = vpack.i.b16 %v586, %v585
      %v590 = vunpack.c.l.s4 1983009808
      %v591 = vunpack.c.0.s8 %v590
      %v592 = vperm.slane %v578, %v591
      %v595 = vunpack.c.l.s4 1983009808
      %v596 = vunpack.c.0.s8 %v595
      %v597 = vperm.slane %v584, %v596
      %v598 = vrot.slane %v597, 4
      %v599 = vsel %vm476, %v598, %v592
      %v600 = vrot.slane %v592, 4
      %v601 = vsel %vm476, %v597, %v600
      %v603 = vunpack.c.l.s4 1934713408
      %v604 = vunpack.c.0.s8 %v603
      %v605 = vperm.slane %v599, %v604
      %v607 = vunpack.c.l.s4 1934713408
      %v608 = vunpack.c.0.s8 %v607
      %v609 = vperm.slane %v601, %v608
      %v610 = vrot.slane %v605, 4
      %v611 = vsel %vm476, 0, %v610
      %v612 = vrot.slane %v609, 4
      %v613 = vsel %vm476, 0, %v612
      %v616 = vunpack.c.l.s4 1983009808
      %v617 = vunpack.c.0.s8 %v616
      %v618 = vperm.slane %v581, %v617
      %v621 = vunpack.c.l.s4 1983009808
      %v622 = vunpack.c.0.s8 %v621
      %v623 = vperm.slane %v587, %v622
      %v624 = vrot.slane %v623, 4
      %v625 = vsel %vm476, %v624, %v618
      %v626 = vrot.slane %v618, 4
      %v627 = vsel %vm476, %v623, %v626
      %v629 = vunpack.c.l.s4 1934713408
      %v630 = vunpack.c.0.s8 %v629
      %v631 = vperm.slane %v625, %v630
      %v633 = vunpack.c.l.s4 1934713408
      %v634 = vunpack.c.0.s8 %v633
      %v635 = vperm.slane %v627, %v634
      %v636 = vrot.slane %v631, 4
      %v637 = vsel %vm476, 0, %v636
      %v638 = vrot.slane %v635, 4
      %v639 = vsel %vm476, 0, %v638
      %v640 = vsel %vm476, %v612, %v605
      %v642 = vunpack.c.l.s4 1983009808
      %v643 = vunpack.c.0.s8 %v642
      %v644 = vperm.slane %v640, %v643
      %v645 = vrot.slane %v613, 4
      %v646 = vsel %vm476, %v645, %v611
      %v648 = vunpack.c.l.s4 1983009808
      %v649 = vunpack.c.0.s8 %v648
      %v650 = vperm.slane %v646, %v649
      %v651 = vrot.slane %v650, 4
      %v652 = vsel %vm476, %v651, %v644
      %v654 = vunpack.c.l.s4 1934713408
      %v655 = vunpack.c.0.s8 %v654
      %v656 = vperm.slane %v652, %v655
      %v657 = vrot.slane %v656, 4
      %v658 = vsel %vm476, 0, %v657
      %v659 = vsel %vm476, %v638, %v631
      %v661 = vunpack.c.l.s4 1983009808
      %v662 = vunpack.c.0.s8 %v661
      %v663 = vperm.slane %v659, %v662
      %v664 = vrot.slane %v639, 4
      %v665 = vsel %vm476, %v664, %v637
      %v667 = vunpack.c.l.s4 1983009808
      %v668 = vunpack.c.0.s8 %v667
      %v669 = vperm.slane %v665, %v668
      %v670 = vrot.slane %v669, 4
      %v671 = vsel %vm476, %v670, %v663
      %v673 = vunpack.c.l.s4 1934713408
      %v674 = vunpack.c.0.s8 %v673
      %v675 = vperm.slane %v671, %v674
      %v676 = vrot.slane %v675, 4
      %v677 = vsel %vm476, 0, %v676
      %v680 = vpack.i.b16 %v675, %v656
      %v681 = vshrl.u32 %v656, 16
      %v682 = vshrl.u32 %v675, 16
      %v683 = vpack.i.b16 %v682, %v681
      %v686 = vpack.i.b16 %v677, %v658
      %v687 = vshrl.u32 %v658, 16
      %v688 = vshrl.u32 %v677, 16
      %v689 = vpack.i.b16 %v688, %v687
      %690 = vrot.lane.b32.xlu0 %v445, 64
      %v691 = vpop.permute.xlu0 %690
      %692 = vrot.lane.b32.xlu0 %v448, 64
      %v693 = vpop.permute.xlu0 %692
      %694 = vrot.lane.b32.xlu0 %v450, 64
      %v695 = vpop.permute.xlu0 %694
      %696 = vrot.lane.b32.xlu0 %v452, 64
      %v697 = vpop.permute.xlu0 %696
      %v700 = vpack.i.b16 %v693, %v691
      %v701 = vshrl.u32 %v691, 16
      %v702 = vshrl.u32 %v693, 16
      %v703 = vpack.i.b16 %v702, %v701
      %v706 = vpack.i.b16 %v697, %v695
      %v707 = vshrl.u32 %v695, 16
      %v708 = vshrl.u32 %v697, 16
      %v709 = vpack.i.b16 %v708, %v707
      %v712 = vunpack.c.l.s4 1983009808
      %v713 = vunpack.c.0.s8 %v712
      %v714 = vperm.slane %v700, %v713
      %v717 = vunpack.c.l.s4 1983009808
      %v718 = vunpack.c.0.s8 %v717
      %v719 = vperm.slane %v706, %v718
      %v720 = vrot.slane %v719, 4
      %v721 = vsel %vm476, %v720, %v714
      %v722 = vrot.slane %v714, 4
      %v723 = vsel %vm476, %v719, %v722
      %v725 = vunpack.c.l.s4 1934713408
      %v726 = vunpack.c.0.s8 %v725
      %v727 = vperm.slane %v721, %v726
      %v729 = vunpack.c.l.s4 1934713408
      %v730 = vunpack.c.0.s8 %v729
      %v731 = vperm.slane %v723, %v730
      %v732 = vrot.slane %v727, 4
      %v733 = vsel %vm476, 0, %v732
      %v734 = vrot.slane %v731, 4
      %v735 = vsel %vm476, 0, %v734
      %v738 = vunpack.c.l.s4 1983009808
      %v739 = vunpack.c.0.s8 %v738
      %v740 = vperm.slane %v703, %v739
      %v743 = vunpack.c.l.s4 1983009808
      %v744 = vunpack.c.0.s8 %v743
      %v745 = vperm.slane %v709, %v744
      %v746 = vrot.slane %v745, 4
      %v747 = vsel %vm476, %v746, %v740
      %v748 = vrot.slane %v740, 4
      %v749 = vsel %vm476, %v745, %v748
      %v751 = vunpack.c.l.s4 1934713408
      %v752 = vunpack.c.0.s8 %v751
      %v753 = vperm.slane %v747, %v752
      %v755 = vunpack.c.l.s4 1934713408
      %v756 = vunpack.c.0.s8 %v755
      %v757 = vperm.slane %v749, %v756
      %v758 = vrot.slane %v753, 4
      %v759 = vsel %vm476, 0, %v758
      %v760 = vrot.slane %v757, 4
      %v761 = vsel %vm476, 0, %v760
      %v762 = vsel %vm476, %v734, %v727
      %v764 = vunpack.c.l.s4 1983009808
      %v765 = vunpack.c.0.s8 %v764
      %v766 = vperm.slane %v762, %v765
      %v767 = vrot.slane %v735, 4
      %v768 = vsel %vm476, %v767, %v733
      %v770 = vunpack.c.l.s4 1983009808
      %v771 = vunpack.c.0.s8 %v770
      %v772 = vperm.slane %v768, %v771
      %v773 = vrot.slane %v772, 4
      %v774 = vsel %vm476, %v773, %v766
      %v776 = vunpack.c.l.s4 1934713408
      %v777 = vunpack.c.0.s8 %v776
      %v778 = vperm.slane %v774, %v777
      %v779 = vrot.slane %v778, 4
      %v780 = vsel %vm476, 0, %v779
      %v781 = vsel %vm476, %v760, %v753
      %v783 = vunpack.c.l.s4 1983009808
      %v784 = vunpack.c.0.s8 %v783
      %v785 = vperm.slane %v781, %v784
      %v786 = vrot.slane %v761, 4
      %v787 = vsel %vm476, %v786, %v759
      %v789 = vunpack.c.l.s4 1983009808
      %v790 = vunpack.c.0.s8 %v789
      %v791 = vperm.slane %v787, %v790
      %v792 = vrot.slane %v791, 4
      %v793 = vsel %vm476, %v792, %v785
      %v795 = vunpack.c.l.s4 1934713408
      %v796 = vunpack.c.0.s8 %v795
      %v797 = vperm.slane %v793, %v796
      %v798 = vrot.slane %v797, 4
      %v799 = vsel %vm476, 0, %v798
      %v802 = vpack.i.b16 %v797, %v778
      %v803 = vshrl.u32 %v778, 16
      %v804 = vshrl.u32 %v797, 16
      %v805 = vpack.i.b16 %v804, %v803
      %v808 = vpack.i.b16 %v799, %v780
      %v809 = vshrl.u32 %v780, 16
      %v810 = vshrl.u32 %v799, 16
      %v811 = vpack.i.b16 %v810, %v809
      %vm812 = vcmask 64512
      %v814 = vsel %vm812, %v558, 0
      %v817 = vsel %vm812, %v680, 0
      %819 = vmatpush.bf16.xpose.msra.mxu0 0
      %820 = vmatpush.bf16.xpose.msra.mxu0 0
      %821 = vmatpush.bf16.xpose.msra.mxu0 0
      %822 = vmatpush.bf16.xpose.msra.mxu0 0
      %823 = vmatpush.bf16.xpose.msra.mxu0 0
      %824 = vmatpush.bf16.xpose.msra.mxu0 0
      %825 = vmatpush.bf16.xpose.msra.mxu0 0
      %826 = vmatpush.bf16.xpose.msra.mxu0 %v817
      %827 = vmatmul.bf16.gmra.mxu0 %v814
      %v828 = vpop.f32.mrf.mxu0
      %v829 = vadd.f32 0.0, %v828
      %v830 = vpop.f32.mrf.mxu0
      %831 = vdwg.mxu0
      %v833 = vsel %vm812, %v561, 0
      %v836 = vsel %vm812, %v683, 0
      %838 = vmatpush.bf16.xpose.msra.mxu0 0
      %839 = vmatpush.bf16.xpose.msra.mxu0 0
      %840 = vmatpush.bf16.xpose.msra.mxu0 0
      %841 = vmatpush.bf16.xpose.msra.mxu0 0
      %842 = vmatpush.bf16.xpose.msra.mxu0 0
      %843 = vmatpush.bf16.xpose.msra.mxu0 0
      %844 = vmatpush.bf16.xpose.msra.mxu0 0
      %845 = vmatpush.bf16.xpose.msra.mxu0 %v836
      %846 = vmatmul.bf16.gmra.mxu0 %v833
      %v847 = vpop.f32.mrf.mxu0
      %v848 = vadd.f32 0.0, %v847
      %v849 = vpop.f32.mrf.mxu0
      %850 = vdwg.mxu0
      %v852 = vsel %vm812, %v564, 0
      %v855 = vsel %vm812, %v686, 0
      %857 = vmatpush.bf16.xpose.msra.mxu0 0
      %858 = vmatpush.bf16.xpose.msra.mxu0 0
      %859 = vmatpush.bf16.xpose.msra.mxu0 0
      %860 = vmatpush.bf16.xpose.msra.mxu0 0
      %861 = vmatpush.bf16.xpose.msra.mxu0 0
      %862 = vmatpush.bf16.xpose.msra.mxu0 0
      %863 = vmatpush.bf16.xpose.msra.mxu0 0
      %864 = vmatpush.bf16.xpose.msra.mxu0 %v855
      %865 = vmatmul.bf16.gmra.mxu0 %v852
      %v866 = vpop.f32.mrf.mxu0
      %v867 = vadd.f32 0.0, %v866
      %v868 = vpop.f32.mrf.mxu0
      %869 = vdwg.mxu0
      %v871 = vsel %vm812, %v567, 0
      %v874 = vsel %vm812, %v689, 0
      %876 = vmatpush.bf16.xpose.msra.mxu0 0
      %877 = vmatpush.bf16.xpose.msra.mxu0 0
      %878 = vmatpush.bf16.xpose.msra.mxu0 0
      %879 = vmatpush.bf16.xpose.msra.mxu0 0
      %880 = vmatpush.bf16.xpose.msra.mxu0 0
      %881 = vmatpush.bf16.xpose.msra.mxu0 0
      %882 = vmatpush.bf16.xpose.msra.mxu0 0
      %883 = vmatpush.bf16.xpose.msra.mxu0 %v874
      %884 = vmatmul.bf16.gmra.mxu0 %v871
      %v885 = vpop.f32.mrf.mxu0
      %v886 = vadd.f32 0.0, %v885
      %v887 = vpop.f32.mrf.mxu0
      %888 = vdwg.mxu0
      %v889 = vmul.f32 %v829, 0.35355338
      %v890 = vmul.f32 %v848, 0.35355338
      %v891 = vmul.f32 %v867, 0.35355338
      %v892 = vmul.f32 %v886, 0.35355338
      %v893 = vadd.f32 %v889, %v406
      %v894 = vadd.f32 %v890, %v406
      %v895 = vadd.f32 %v891, %v406
      %v896 = vadd.f32 %v892, %v406
      %v897 = vsel %vm812, %v893, -inf
      %898 = vmax.xlane.f32.xlu0 %v897
      %v899 = vpop.xlane.xlu0 %898
      %v900 = vsel %vm812, %v894, -inf
      %901 = vmax.xlane.f32.xlu0 %v900
      %v902 = vpop.xlane.xlu0 %901
      %v903 = vsel %vm812, %v895, -inf
      %904 = vmax.xlane.f32.xlu0 %v903
      %v905 = vpop.xlane.xlu0 %904
      %v906 = vsel %vm812, %v896, -inf
      %907 = vmax.xlane.f32.xlu0 %v906
      %v908 = vpop.xlane.xlu0 %907
      %v909 = vsub.f32 %v893, %v899
      %v910 = vsub.f32 %v894, %v902
      %v911 = vsub.f32 %v895, %v905
      %v912 = vsub.f32 %v896, %v908
      %v913 = vmul.f32 %v909, 1.442695
      %v914 = vpow.pop %v913
      %v915 = vmul.f32 %v910, 1.442695
      %v916 = vpow.pop %v915
      %v917 = vmul.f32 %v911, 1.442695
      %v918 = vpow.pop %v917
      %v919 = vmul.f32 %v912, 1.442695
      %v920 = vpow.pop %v919
      %v921 = vsel %vm812, %v914, 0.0
      %922 = vadd.xlane.f32.xlu0 %v921
      %v923 = vpop.xlane.xlu0 %922
      %v924 = vsel %vm812, %v916, 0.0
      %925 = vadd.xlane.f32.xlu0 %v924
      %v926 = vpop.xlane.xlu0 %925
      %v927 = vsel %vm812, %v918, 0.0
      %928 = vadd.xlane.f32.xlu0 %v927
      %v929 = vpop.xlane.xlu0 %928
      %v930 = vsel %vm812, %v920, 0.0
      %931 = vadd.xlane.f32.xlu0 %v930
      %v932 = vpop.xlane.xlu0 %931
      %v933 = vrcp.pop %v923
      %v934 = vmul.f32 %v923, %v933
      %v935 = vsub.f32 1.0, %v934
      %v936 = vmul.f32 %v933, %v935
      %v937 = vadd.f32 %v933, %v936
      %vm938 = vweird.f32 %v923
      %vm939 = vweird.f32 %v933
      %vm940 = vmor %vm938, %vm939
      %v941 = vsel %vm940, %v933, %v937
      %v942 = vand.u32 2147483647, %v923
      %vm943 = vcmp.eq.f32.partialorder %v942, 8.507059e+37
      %v944 = vand.u32 %v923, 2147483648
      %v945 = vor.u32 1.1754944e-38, %v944
      %v946 = vsel %vm943, %v945, %v941
      %v947 = vmul.f32 %v914, %v946
      %v948 = vrcp.pop %v926
      %v949 = vmul.f32 %v926, %v948
      %v950 = vsub.f32 1.0, %v949
      %v951 = vmul.f32 %v948, %v950
      %v952 = vadd.f32 %v948, %v951
      %vm953 = vweird.f32 %v926
      %vm954 = vweird.f32 %v948
      %vm955 = vmor %vm953, %vm954
      %v956 = vsel %vm955, %v948, %v952
      %v957 = vand.u32 2147483647, %v926
      %vm958 = vcmp.eq.f32.partialorder %v957, 8.507059e+37
      %v959 = vand.u32 %v926, 2147483648
      %v960 = vor.u32 1.1754944e-38, %v959
      %v961 = vsel %vm958, %v960, %v956
      %v962 = vmul.f32 %v916, %v961
      %v963 = vrcp.pop %v929
      %v964 = vmul.f32 %v929, %v963
      %v965 = vsub.f32 1.0, %v964
      %v966 = vmul.f32 %v963, %v965
      %v967 = vadd.f32 %v963, %v966
      %vm968 = vweird.f32 %v929
      %vm969 = vweird.f32 %v963
      %vm970 = vmor %vm968, %vm969
      %v971 = vsel %vm970, %v963, %v967
      %v972 = vand.u32 2147483647, %v929
      %vm973 = vcmp.eq.f32.partialorder %v972, 8.507059e+37
      %v974 = vand.u32 %v929, 2147483648
      %v975 = vor.u32 1.1754944e-38, %v974
      %v976 = vsel %vm973, %v975, %v971
      %v977 = vmul.f32 %v918, %v976
      %v978 = vrcp.pop %v932
      %v979 = vmul.f32 %v932, %v978
      %v980 = vsub.f32 1.0, %v979
      %v981 = vmul.f32 %v978, %v980
      %v982 = vadd.f32 %v978, %v981
      %vm983 = vweird.f32 %v932
      %vm984 = vweird.f32 %v978
      %vm985 = vmor %vm983, %vm984
      %v986 = vsel %vm985, %v978, %v982
      %v987 = vand.u32 2147483647, %v932
      %vm988 = vcmp.eq.f32.partialorder %v987, 8.507059e+37
      %v989 = vand.u32 %v932, 2147483648
      %v990 = vor.u32 1.1754944e-38, %v989
      %v991 = vsel %vm988, %v990, %v986
      %v992 = vmul.f32 %v920, %v991
      %v993 = vpack.c.bf16 %v947, %v947
      %v994 = vpack.c.bf16 %v962, %v962
      %v995 = vpack.c.bf16 %v977, %v977
      %v996 = vpack.c.bf16 %v992, %v992
      %v998 = vsel %vm812, %v993, 0
      %vm1000 = vcmask 1043456
      %v1002 = vsel %vm1000, %v802, 0
      %1004 = vmatpush.bf16.msra.mxu0 0
      %1005 = vmatpush.bf16.msra.mxu0 0
      %1006 = vmatpush.bf16.msra.mxu0 0
      %1007 = vmatpush.bf16.msra.mxu0 0
      %1008 = vmatpush.bf16.msra.mxu0 0
      %1009 = vmatpush.bf16.msra.mxu0 0
      %1010 = vmatpush.bf16.msra.mxu0 0
      %1011 = vmatpush.bf16.msra.mxu0 %v1002
      %1012 = vmatmul.bf16.gmra.mxu0 %v998
      %v1013 = vpop.f32.mrf.mxu0
      %v1014 = vadd.f32 0.0, %v1013
      %v1015 = vpop.f32.mrf.mxu0
      %1016 = vdwg.mxu0
      %v1018 = vsel %vm812, %v994, 0
      %v1021 = vsel %vm1000, %v805, 0
      %1023 = vmatpush.bf16.msra.mxu0 0
      %1024 = vmatpush.bf16.msra.mxu0 0
      %1025 = vmatpush.bf16.msra.mxu0 0
      %1026 = vmatpush.bf16.msra.mxu0 0
      %1027 = vmatpush.bf16.msra.mxu0 0
      %1028 = vmatpush.bf16.msra.mxu0 0
      %1029 = vmatpush.bf16.msra.mxu0 0
      %1030 = vmatpush.bf16.msra.mxu0 %v1021
      %1031 = vmatmul.bf16.gmra.mxu0 %v1018
      %v1032 = vpop.f32.mrf.mxu0
      %v1033 = vadd.f32 0.0, %v1032
      %v1034 = vpop.f32.mrf.mxu0
      %1035 = vdwg.mxu0
      %v1037 = vsel %vm812, %v995, 0
      %v1040 = vsel %vm1000, %v808, 0
      %1042 = vmatpush.bf16.msra.mxu0 0
      %1043 = vmatpush.bf16.msra.mxu0 0
      %1044 = vmatpush.bf16.msra.mxu0 0
      %1045 = vmatpush.bf16.msra.mxu0 0
      %1046 = vmatpush.bf16.msra.mxu0 0
      %1047 = vmatpush.bf16.msra.mxu0 0
      %1048 = vmatpush.bf16.msra.mxu0 0
      %1049 = vmatpush.bf16.msra.mxu0 %v1040
      %1050 = vmatmul.bf16.gmra.mxu0 %v1037
      %v1051 = vpop.f32.mrf.mxu0
      %v1052 = vadd.f32 0.0, %v1051
      %v1053 = vpop.f32.mrf.mxu0
      %1054 = vdwg.mxu0
      %v1056 = vsel %vm812, %v996, 0
      %v1059 = vsel %vm1000, %v811, 0
      %1061 = vmatpush.bf16.msra.mxu0 0
      %1062 = vmatpush.bf16.msra.mxu0 0
      %1063 = vmatpush.bf16.msra.mxu0 0
      %1064 = vmatpush.bf16.msra.mxu0 0
      %1065 = vmatpush.bf16.msra.mxu0 0
      %1066 = vmatpush.bf16.msra.mxu0 0
      %1067 = vmatpush.bf16.msra.mxu0 0
      %1068 = vmatpush.bf16.msra.mxu0 %v1059
      %1069 = vmatmul.bf16.gmra.mxu0 %v1056
      %v1070 = vpop.f32.mrf.mxu0
      %v1071 = vadd.f32 0.0, %v1070
      %v1072 = vpop.f32.mrf.mxu0
      %1073 = vdwg.mxu0
      %v1074 = vrot.slane %v1052, 4
      %vm1075 = vcmask 1047556
      %v1076 = vsel %vm1075, %v1074, %v1014
      %v1077 = vrot.slane %v1014, 4
      %v1078 = vsel %vm1075, %v1052, %v1077
      %v1080 = vunpack.c.l.s4 1983009808
      %v1081 = vunpack.c.0.s8 %v1080
      %v1082 = vperm.slane %v1076, %v1081
      %v1084 = vunpack.c.l.s4 1983009808
      %v1085 = vunpack.c.0.s8 %v1084
      %v1086 = vperm.slane %v1078, %v1085
      %v1087 = vrot.slane %v1071, 4
      %v1088 = vsel %vm1075, %v1087, %v1033
      %v1089 = vrot.slane %v1033, 4
      %v1090 = vsel %vm1075, %v1071, %v1089
      %v1092 = vunpack.c.l.s4 1983009808
      %v1093 = vunpack.c.0.s8 %v1092
      %v1094 = vperm.slane %v1088, %v1093
      %v1096 = vunpack.c.l.s4 1983009808
      %v1097 = vunpack.c.0.s8 %v1096
      %v1098 = vperm.slane %v1090, %v1097
      %v1099 = vrot.slane %v1094, 4
      %v1100 = vsel %vm1075, %v1099, %v1082
      %v1101 = vrot.slane %v1082, 4
      %v1102 = vsel %vm1075, %v1094, %v1101
      %v1104 = vunpack.c.l.s4 1934713408
      %v1105 = vunpack.c.0.s8 %v1104
      %v1106 = vperm.slane %v1100, %v1105
      %v1108 = vunpack.c.l.s4 1934713408
      %v1109 = vunpack.c.0.s8 %v1108
      %v1110 = vperm.slane %v1102, %v1109
      %v1111 = vrot.slane %v1098, 4
      %v1112 = vsel %vm1075, %v1111, %v1086
      %v1113 = vrot.slane %v1086, 4
      %v1114 = vsel %vm1075, %v1098, %v1113
      %v1116 = vunpack.c.l.s4 1934713408
      %v1117 = vunpack.c.0.s8 %v1116
      %v1118 = vperm.slane %v1112, %v1117
      %v1120 = vunpack.c.l.s4 1934713408
      %v1121 = vunpack.c.0.s8 %v1120
      %v1122 = vperm.slane %v1114, %v1121
      %v1123 = vrot.slane %v1106, 4
      %v1124 = vsel %vm1075, 0.0, %v1123
      %v1125 = vrot.slane %v1110, 4
      %v1126 = vsel %vm1075, 0.0, %v1125
      %v1127 = vrot.slane %v1118, 4
      %v1128 = vsel %vm1075, 0.0, %v1127
      %v1129 = vrot.slane %v1122, 4
      %v1130 = vsel %vm1075, 0.0, %v1129
      %v1131 = vsel %vm1075, %v1125, %v1106
      %v1133 = vunpack.c.l.s4 1983009808
      %v1134 = vunpack.c.0.s8 %v1133
      %v1135 = vperm.slane %v1131, %v1134
      %v1136 = vrot.slane %v1126, 4
      %v1137 = vsel %vm1075, %v1136, %v1124
      %v1139 = vunpack.c.l.s4 1983009808
      %v1140 = vunpack.c.0.s8 %v1139
      %v1141 = vperm.slane %v1137, %v1140
      %v1142 = vsel %vm1075, %v1129, %v1118
      %v1144 = vunpack.c.l.s4 1983009808
      %v1145 = vunpack.c.0.s8 %v1144
      %v1146 = vperm.slane %v1142, %v1145
      %v1147 = vrot.slane %v1130, 4
      %v1148 = vsel %vm1075, %v1147, %v1128
      %v1150 = vunpack.c.l.s4 1983009808
      %v1151 = vunpack.c.0.s8 %v1150
      %v1152 = vperm.slane %v1148, %v1151
      %v1153 = vrot.slane %v1141, 4
      %v1154 = vsel %vm1075, %v1153, %v1135
      %v1155 = vrot.slane %v1135, 4
      %v1156 = vsel %vm1075, %v1141, %v1155
      %v1158 = vunpack.c.l.s4 1934713408
      %v1159 = vunpack.c.0.s8 %v1158
      %v1160 = vperm.slane %v1154, %v1159
      %v1162 = vunpack.c.l.s4 1934713408
      %v1163 = vunpack.c.0.s8 %v1162
      %v1164 = vperm.slane %v1156, %v1163
      %v1165 = vrot.slane %v1152, 4
      %v1166 = vsel %vm1075, %v1165, %v1146
      %v1167 = vrot.slane %v1146, 4
      %v1168 = vsel %vm1075, %v1152, %v1167
      %v1170 = vunpack.c.l.s4 1934713408
      %v1171 = vunpack.c.0.s8 %v1170
      %v1172 = vperm.slane %v1166, %v1171
      %v1174 = vunpack.c.l.s4 1934713408
      %v1175 = vunpack.c.0.s8 %v1174
      %v1176 = vperm.slane %v1168, %v1175
      %v1177 = vrot.slane %v1172, 4
      %v1178 = vsel %vm1075, %v1177, %v1160
      %v1179 = vrot.slane %v1160, 4
      %v1180 = vsel %vm1075, %v1172, %v1179
      %v1181 = vrot.slane %v1176, 4
      %v1182 = vsel %vm1075, %v1181, %v1164
      %v1183 = vrot.slane %v1164, 4
      %v1184 = vsel %vm1075, %v1176, %v1183
      %1186 = vrot.lane.b32.xlu0 %v1180, 8
      %v1187 = vpop.permute.xlu0 %1186
      %1190 = vrot.lane.b32.xlu0 %v1182, 16
      %v1191 = vpop.permute.xlu0 %1190
      %1194 = vrot.lane.b32.xlu0 %v1184, 24
      %v1195 = vpop.permute.xlu0 %1194
      %v1197 = vsel %vm812, %v1178, %v1187
      %vm1198 = vcmask 130048
      %v1199 = vsel %vm1198, %v1197, %v1191
      %vm1200 = vcmask 195584
      %v1201 = vsel %vm1200, %v1199, %v1195
      %v1202 = vpack.c.bf16 %v1201, %v1201
      %v1203 = vld [vmem:[%s5] sm:$0xf]
      %v1204 = vld [vmem:[%s5 + $0x4] sm:$0xf]
      %v1205 = vld [vmem:[%s5 + $0x8] sm:$0xf]
      %v1206 = vld [vmem:[%s5 + $0xc] sm:$0xf]
      %v1207 = vld [vmem:[%s6] sm:$0x1]
      %v1209 = vperm.slane %v1207, 0
      %v1215 = vunpack.c.l.b16 %v1203
      %v1216 = vunpack.c.l.b16 %v1204
      %v1217 = vunpack.c.l.b16 %v1205
      %v1218 = vunpack.c.l.b16 %v1206
      %v1219 = vpack.c.b16 %v1216, %v1215
      %v1220 = vpack.c.b16 %v1218, %v1217
      %v1224 = vsel %vm428, %v1202, 0
      %1226 = vmatpush.bf16.msra.mxu0 0
      %1227 = vmatpush.bf16.msra.mxu0 0
      %1228 = vmatpush.bf16.msra.mxu0 0
      %1229 = vmatpush.bf16.msra.mxu0 0
      %1230 = vmatpush.bf16.msra.mxu0 0
      %1231 = vmatpush.bf16.msra.mxu0 0
      %1232 = vmatpush.bf16.msra.mxu0 %v1220
      %1233 = vmatpush.bf16.msra.mxu0 %v1219
      %1234 = vmatmul.bf16.gmra.mxu0 %v1224
      %v1235 = vpop.f32.mrf.mxu0
      %v1236 = vadd.f32 %v1209, %v1235
      %v1237 = vpop.f32.mrf.mxu0
      %1238 = vdwg.mxu0
      %v1239 = vadd.f32 %v405, %v1236
      %v1240 = vld [vmem:[%s7] sm:$0x1]
      %v1241 = vld [vmem:[%s8] sm:$0x1]
      %v1242 = vsel %vm428, %v1239, 0.0
      %1243 = vadd.xlane.f32.xlu0 %v1242
      %v1244 = vpop.xlane.xlu0 %1243
      %v1245 = vrcp.pop 32.0
      %v1246 = vmul.f32 32.0, %v1245
      %v1247 = vsub.f32 1.0, %v1246
      %v1248 = vmul.f32 %v1245, %v1247
      %v1249 = vadd.f32 %v1245, %v1248
      %vm1250 = vweird.f32 %v1245
      %v1251 = vsel %vm1250, %v1245, %v1249
      %v1252 = vmul.f32 %v1244, %v1251
      %v1253 = vmul.f32 %v1239, %v1239
      %v1254 = vsel %vm428, %v1253, 0.0
      %1255 = vadd.xlane.f32.xlu0 %v1254
      %v1256 = vpop.xlane.xlu0 %1255
      %v1257 = vmul.f32 %v1256, %v1251
      %v1258 = vmul.f32 %v1252, %v1252
      %v1259 = vsub.f32 %v1257, %v1258
      %v1260 = vmax.f32 %v1259, 0.0
      %v1261 = vsub.f32 %v1239, %v1252
      %v1262 = vadd.f32 %v1260, 1e-05
      %v1263 = vrsqrt.pop %v1262
      %v1264 = vmul.f32 %v1263, %v1262
      %v1265 = vmul.f32 %v1264, %v1263
      %v1266 = vmul.f32 0.5, %v1265
      %v1267 = vsub.f32 1.5, %v1266
      %v1268 = vmul.f32 %v1263, %v1267
      %vm1269 = vweird.f32 %v1262
      %vm1270 = vweird.f32 %v1263
      %vm1271 = vmor %vm1269, %vm1270
      %v1272 = vsel %vm1271, %v1263, %v1268
      %v1273 = vmul.f32 %v1261, %v1272
      %v1275 = vperm.slane %v1240, 0
      %v1277 = vmul.f32 %v1273, %v1275
      %v1279 = vperm.slane %v1241, 0
      %v1281 = vadd.f32 %v1277, %v1279
      %1282 = vst.msk [vmem:[%s403] sm:$0xff] %vm428, %v1281
      %p1283 = scmp.lt.s32.totalorder %s24, 1
      %s1284 = scalar_select %p1283, %s24, 1
      %p1285 = scmp.lt.s32.totalorder %s25, 0
      %s1286 = scalar_select %p1285, %s25, 0
      %s1287 = sadd.s32 %s1286, %s1284
      %s1288 = smul.addr %s1287, 8
      %s1289 = scalar_lea.vmem %s9, %s1288
      // Predicated region
      $region57: #{transformer_forward.15} parent=55 // pred_check
        %p1290 = pneg %p260
      $region58: #{transformer_forward.15} parent=55 // pred_check_branch
        %1292 = sbr.rel (%p1290) target = $region60
      $region59: #{transformer_forward.15} parent=55 // pred_region
        _
      $region60: #{transformer_forward.15} parent=55 // pred_fallthru
        _
    $region56: #{transformer_forward.15} parent=5 // pred_fallthru
      _
    %p1293 = scmp.le.s32.totalorder 2, %s15
    // Predicated region
    $region61: #{transformer_forward.15} parent=5 // pred_check
      %p1294 = pneg %p1293
    $region62: #{transformer_forward.15} parent=5 // pred_check_branch
      %1296 = sbr.rel (%p1294) target = $region64
    $region63: #{transformer_forward.15} parent=5 // pred_region
      %s1297 = ssub.s32 %s15, 2
      // Predicated region
      $region65: #{transformer_forward.15} parent=63 // pred_check
        %p1298 = pneg %p266
      $region66: #{transformer_forward.15} parent=63 // pred_check_branch
        %1300 = sbr.rel (%p1298) target = $region68
      $region67: #{transformer_forward.15} parent=63 // pred_region
        %p1301 = scmp.lt.s32.totalorder %s26, 1
        %s1302 = scalar_select %p1301, %s26, 1
        %p1303 = scmp.lt.s32.totalorder %s27, 0
        %s1304 = scalar_select %p1303, %s27, 0
        %s1305 = sadd.s32 %s1304, %s1302
        %s1306 = smul.addr %s1305, 8
        %s1307 = scalar_lea.vmem %s9, %s1306
      $region68: #{transformer_forward.15} parent=63 // pred_fallthru
        _
    $region64: #{transformer_forward.15} parent=5 // pred_fallthru
      _
  $region6: #{transformer_forward.15} parent=0 // loop_footer
    %s19 = sadd.s32 1, %s15
  $region7: #{transformer_forward.15} parent=0 // loop_footer_branch
    %14 = sbr.rel target = $region3
  $region8: #{transformer_forward.15} parent=0 // loop_exit
    _

// kernel: transformer_forward.16
$region0: #{transformer_forward.16}
  #allocation0 [shape = 'u32[]', space=smem, size = 0x4, offset = 0x4, fixed_abs, tag = 'smem constant byte address 0x4 - core index']
  #allocation1 [shape = 'u32[72,128]{1,0:T(1,128)}', space=vmem, size = 0x9000, scoped, tag = 'internal scratch']
  %s0 = inlined_call_operand.vmem [shape: f32[2,8,32], index: 0, kind: input, shape index: {}]
  %s1 = inlined_call_operand.vmem [shape: f32[2,8,32], index: 1, kind: input, shape index: {}]
  %s2 = inlined_call_operand.vmem [shape: f32[2,1,8], index: 2, kind: input, shape index: {}]
  %s3 = inlined_call_operand.vmem [shape: bf16[32,96], index: 3, kind: input, shape index: {}]
  %s4 = inlined_call_operand.vmem [shape: f32[1,96], index: 4, kind: input, shape index: {}]
  %s5 = inlined_call_operand.vmem [shape: bf16[32,32], index: 5, kind: input, shape index: {}]
  %s6 = inlined_call_operand.vmem [shape: f32[1,32], index: 6, kind: input, shape index: {}]
  %s7 = inlined_call_operand.vmem [shape: f32[1,32], index: 7, kind: input, shape index: {}]
  %s8 = inlined_call_operand.vmem [shape: f32[1,32], index: 8, kind: input, shape index: {}]
  %s9 = inlined_call_operand.vmem [shape: f32[2,8,32], index: 9, kind: output, shape index: {}]
  %s10 = sld [smem:[#allocation0]]
  $region69: #{transformer_forward.16} parent=0
    _
  %s12 = ssub.s32 1, %s10
  %s13 = scalar_select 0, %s12, %s10
  loop: start=0, step=1, limit=4
  $region2: #{transformer_forward.16} parent=0 // loop_pre_header
    _
  $region3: #{transformer_forward.16} parent=0 // loop_header
    %s15 = sphi 0, %s19
    %p16 = scmp.ge.s32.totalorder %s15, 4
    %s22 = sphi 0, %s34
    %s23 = sphi 0, %s30
    %s24 = sphi 0, %s22
    %s25 = sphi 0, %s23
    %s26 = sphi 0, %s24
    %s27 = sphi 0, %s25
    %s39 = sphi 0, %s41
    %s42 = sphi 0, %s39
    %s43 = sphi 0, %s42
    %s59 = sphi 0, %s43
    %s65 = sphi 0, %s67
    %s68 = sphi 0, %s65
    %s69 = sphi 0, %s68
    %s85 = sphi 0, %s69
    %s91 = sphi 0, %s93
    %s94 = sphi 0, %s91
    %s95 = sphi 0, %s94
    %s111 = sphi 0, %s95
    %s115 = sphi 0, %s115
    %s117 = sphi 0, %s115
    %s118 = sphi 0, %s117
    %s132 = sphi 0, %s118
    %s136 = sphi 0, %s136
    %s138 = sphi 0, %s136
    %s139 = sphi 0, %s138
    %s153 = sphi 0, %s139
    %s157 = sphi 0, %s157
    %s159 = sphi 0, %s157
    %s160 = sphi 0, %s159
    %s174 = sphi 0, %s160
    %s178 = sphi 0, %s178
    %s180 = sphi 0, %s178
    %s181 = sphi 0, %s180
    %s195 = sphi 0, %s181
    %s199 = sphi 0, %s199
    %s201 = sphi 0, %s199
    %s202 = sphi 0, %s201
    %s216 = sphi 0, %s202
    %s220 = sphi 0, %s220
    %s222 = sphi 0, %s220
    %s223 = sphi 0, %s222
    %s237 = sphi 0, %s223
    %s245 = sphi 0, %s247
    %s248 = sphi 0, %s245
    %s249 = sphi 0, %s248
    %s265 = sphi 0, %s249
  $region4: #{transformer_forward.16} parent=0 // loop_header_branch
    %18 = sbr.rel (%p16) target = $region8
  $region5: #{transformer_forward.16} parent=0 // loop_body
    %s20 = ssub.s32 %s15, 1
    %s21 = ssub.s32 %s15, 2
    %s28 = sadd.s32 1, %s23
    %p29 = scmp.ge.s32.totalorder %s28, 1
    %s30 = scalar_select %p29, 0, %s28
    %s31 = sadd.s32 1, %s22
    %s32 = scalar_select %p29, %s31, %s22
    %p33 = scmp.ge.s32.totalorder %s32, 2
    %s34 = scalar_select %p33, 0, %s32
    %s35 = ssub.s32 %s22, %s34
    %s36 = ssub.s32 %s23, %s30
    %s37 = sor.u32 %s35, %s36
    %p38 = scmp.eq.s32.totalorder %s37, 0
    %s40 = sadd.s32 %s39, 1
    %s41 = scalar_select %p38, %s39, %s40
    %p44 = pneg %p38
    %p45 = scmp.eq.s32.totalorder %s15, 1
    %p46 = por %p44, %p45
    %p47 = scmp.ne.s32.totalorder %s39, %s42
    %p48 = scmp.eq.s32.totalorder %s15, 0
    %p49 = por %p47, %p48
    %p50 = scmp.ne.s32.totalorder %s39, %s42
    %p51 = scmp.eq.s32.totalorder %s20, 1
    %p52 = por %p50, %p51
    %p53 = scmp.ne.s32.totalorder %s42, %s43
    %p54 = scmp.eq.s32.totalorder %s20, 0
    %p55 = por %p53, %p54
    %p56 = scmp.ne.s32.totalorder %s42, %s43
    %p57 = scmp.eq.s32.totalorder %s21, 1
    %p58 = por %p56, %p57
    %p60 = scmp.ne.s32.totalorder %s43, %s59
    %p61 = scmp.eq.s32.totalorder %s21, 0
    %p62 = por %p60, %p61
    %s63 = ssub.s32 %s22, %s34
    %p64 = scmp.eq.s32.totalorder %s63, 0
    %s66 = sadd.s32 %s65, 1
    %s67 = scalar_select %p64, %s65, %s66
    %p70 = pneg %p64
    %p71 = scmp.eq.s32.totalorder %s15, 1
    %p72 = por %p70, %p71
    %p73 = scmp.ne.s32.totalorder %s65, %s68
    %p74 = scmp.eq.s32.totalorder %s15, 0
    %p75 = por %p73, %p74
    %p76 = scmp.ne.s32.totalorder %s65, %s68
    %p77 = scmp.eq.s32.totalorder %s20, 1
    %p78 = por %p76, %p77
    %p79 = scmp.ne.s32.totalorder %s68, %s69
    %p80 = scmp.eq.s32.totalorder %s20, 0
    %p81 = por %p79, %p80
    %p82 = scmp.ne.s32.totalorder %s68, %s69
    %p83 = scmp.eq.s32.totalorder %s21, 1
    %p84 = por %p82, %p83
    %p86 = scmp.ne.s32.totalorder %s69, %s85
    %p87 = scmp.eq.s32.totalorder %s21, 0
    %p88 = por %p86, %p87
    %s89 = ssub.s32 %s22, %s34
    %p90 = scmp.eq.s32.totalorder %s89, 0
    %s92 = sadd.s32 %s91, 1
    %s93 = scalar_select %p90, %s91, %s92
    %p96 = pneg %p90
    %p97 = scmp.eq.s32.totalorder %s15, 1
    %p98 = por %p96, %p97
    %p99 = scmp.ne.s32.totalorder %s91, %s94
    %p100 = scmp.eq.s32.totalorder %s15, 0
    %p101 = por %p99, %p100
    %p102 = scmp.ne.s32.totalorder %s91, %s94
    %p103 = scmp.eq.s32.totalorder %s20, 1
    %p104 = por %p102, %p103
    %p105 = scmp.ne.s32.totalorder %s94, %s95
    %p106 = scmp.eq.s32.totalorder %s20, 0
    %p107 = por %p105, %p106
    %p108 = scmp.ne.s32.totalorder %s94, %s95
    %p109 = scmp.eq.s32.totalorder %s21, 1
    %p110 = por %p108, %p109
    %p112 = scmp.ne.s32.totalorder %s95, %s111
    %p113 = scmp.eq.s32.totalorder %s21, 0
    %p114 = por %p112, %p113
    %s116 = sadd.s32 %s115, 1
    %p119 = scmp.eq.s32.totalorder %s15, 1
    %p120 = scmp.ne.s32.totalorder %s115, %s117
    %p121 = scmp.eq.s32.totalorder %s15, 0
    %p122 = por %p120, %p121
    %p123 = scmp.ne.s32.totalorder %s115, %s117
    %p124 = scmp.eq.s32.totalorder %s20, 1
    %p125 = por %p123, %p124
    %p126 = scmp.ne.s32.totalorder %s117, %s118
    %p127 = scmp.eq.s32.totalorder %s20, 0
    %p128 = por %p126, %p127
    %p129 = scmp.ne.s32.totalorder %s117, %s118
    %p130 = scmp.eq.s32.totalorder %s21, 1
    %p131 = por %p129, %p130
    %p133 = scmp.ne.s32.totalorder %s118, %s132
    %p134 = scmp.eq.s32.totalorder %s21, 0
    %p135 = por %p133, %p134
    %s137 = sadd.s32 %s136, 1
    %p140 = scmp.eq.s32.totalorder %s15, 1
    %p141 = scmp.ne.s32.totalorder %s136, %s138
    %p142 = scmp.eq.s32.totalorder %s15, 0
    %p143 = por %p141, %p142
    %p144 = scmp.ne.s32.totalorder %s136, %s138
    %p145 = scmp.eq.s32.totalorder %s20, 1
    %p146 = por %p144, %p145
    %p147 = scmp.ne.s32.totalorder %s138, %s139
    %p148 = scmp.eq.s32.totalorder %s20, 0
    %p149 = por %p147, %p148
    %p150 = scmp.ne.s32.totalorder %s138, %s139
    %p151 = scmp.eq.s32.totalorder %s21, 1
    %p152 = por %p150, %p151
    %p154 = scmp.ne.s32.totalorder %s139, %s153
    %p155 = scmp.eq.s32.totalorder %s21, 0
    %p156 = por %p154, %p155
    %s158 = sadd.s32 %s157, 1
    %p161 = scmp.eq.s32.totalorder %s15, 1
    %p162 = scmp.ne.s32.totalorder %s157, %s159
    %p163 = scmp.eq.s32.totalorder %s15, 0
    %p164 = por %p162, %p163
    %p165 = scmp.ne.s32.totalorder %s157, %s159
    %p166 = scmp.eq.s32.totalorder %s20, 1
    %p167 = por %p165, %p166
    %p168 = scmp.ne.s32.totalorder %s159, %s160
    %p169 = scmp.eq.s32.totalorder %s20, 0
    %p170 = por %p168, %p169
    %p171 = scmp.ne.s32.totalorder %s159, %s160
    %p172 = scmp.eq.s32.totalorder %s21, 1
    %p173 = por %p171, %p172
    %p175 = scmp.ne.s32.totalorder %s160, %s174
    %p176 = scmp.eq.s32.totalorder %s21, 0
    %p177 = por %p175, %p176
    %s179 = sadd.s32 %s178, 1
    %p182 = scmp.eq.s32.totalorder %s15, 1
    %p183 = scmp.ne.s32.totalorder %s178, %s180
    %p184 = scmp.eq.s32.totalorder %s15, 0
    %p185 = por %p183, %p184
    %p186 = scmp.ne.s32.totalorder %s178, %s180
    %p187 = scmp.eq.s32.totalorder %s20, 1
    %p188 = por %p186, %p187
    %p189 = scmp.ne.s32.totalorder %s180, %s181
    %p190 = scmp.eq.s32.totalorder %s20, 0
    %p191 = por %p189, %p190
    %p192 = scmp.ne.s32.totalorder %s180, %s181
    %p193 = scmp.eq.s32.totalorder %s21, 1
    %p194 = por %p192, %p193
    %p196 = scmp.ne.s32.totalorder %s181, %s195
    %p197 = scmp.eq.s32.totalorder %s21, 0
    %p198 = por %p196, %p197
    %s200 = sadd.s32 %s199, 1
    %p203 = scmp.eq.s32.totalorder %s15, 1
    %p204 = scmp.ne.s32.totalorder %s199, %s201
    %p205 = scmp.eq.s32.totalorder %s15, 0
    %p206 = por %p204, %p205
    %p207 = scmp.ne.s32.totalorder %s199, %s201
    %p208 = scmp.eq.s32.totalorder %s20, 1
    %p209 = por %p207, %p208
    %p210 = scmp.ne.s32.totalorder %s201, %s202
    %p211 = scmp.eq.s32.totalorder %s20, 0
    %p212 = por %p210, %p211
    %p213 = scmp.ne.s32.totalorder %s201, %s202
    %p214 = scmp.eq.s32.totalorder %s21, 1
    %p215 = por %p213, %p214
    %p217 = scmp.ne.s32.totalorder %s202, %s216
    %p218 = scmp.eq.s32.totalorder %s21, 0
    %p219 = por %p217, %p218
    %s221 = sadd.s32 %s220, 1
    %p224 = scmp.eq.s32.totalorder %s15, 1
    %p225 = scmp.ne.s32.totalorder %s220, %s222
    %p226 = scmp.eq.s32.totalorder %s15, 0
    %p227 = por %p225, %p226
    %p228 = scmp.ne.s32.totalorder %s220, %s222
    %p229 = scmp.eq.s32.totalorder %s20, 1
    %p230 = por %p228, %p229
    %p231 = scmp.ne.s32.totalorder %s222, %s223
    %p232 = scmp.eq.s32.totalorder %s20, 0
    %p233 = por %p231, %p232
    %p234 = scmp.ne.s32.totalorder %s222, %s223
    %p235 = scmp.eq.s32.totalorder %s21, 1
    %p236 = por %p234, %p235
    %p238 = scmp.ne.s32.totalorder %s223, %s237
    %p239 = scmp.eq.s32.totalorder %s21, 0
    %p240 = por %p238, %p239
    %s241 = ssub.s32 %s22, %s34
    %s242 = ssub.s32 %s23, %s30
    %s243 = sor.u32 %s241, %s242
    %p244 = scmp.eq.s32.totalorder %s243, 0
    %s246 = sadd.s32 %s245, 1
    %s247 = scalar_select %p244, %s245, %s246
    %p250 = pneg %p244
    %p251 = scmp.eq.s32.totalorder %s15, 1
    %p252 = por %p250, %p251
    %p253 = scmp.ne.s32.totalorder %s245, %s248
    %p254 = scmp.eq.s32.totalorder %s15, 0
    %p255 = por %p253, %p254
    %p256 = scmp.ne.s32.totalorder %s245, %s248
    %p257 = scmp.eq.s32.totalorder %s20, 1
    %p258 = por %p256, %p257
    %p259 = scmp.ne.s32.totalorder %s248, %s249
    %p260 = scmp.eq.s32.totalorder %s20, 0
    %p261 = por %p259, %p260
    %p262 = scmp.ne.s32.totalorder %s248, %s249
    %p263 = scmp.eq.s32.totalorder %s21, 1
    %p264 = por %p262, %p263
    %p266 = scmp.ne.s32.totalorder %s249, %s265
    %p267 = scmp.eq.s32.totalorder %s21, 0
    %p268 = por %p266, %p267
    %p269 = scmp.le.s32.totalorder 1, %s15
    %p270 = scmp.lt.s32.totalorder %s15, 3
    %p271 = pnand %p269, %p270
    %p272 = pneg %p271
    // Predicated region
    $region9: #{transformer_forward.16} parent=5 // pred_check
      _
    $region10: #{transformer_forward.16} parent=5 // pred_check_branch
      %274 = sbr.rel (%p271) target = $region12
    $region11: #{transformer_forward.16} parent=5 // pred_region
      %s275 = ssub.s32 %s15, 1
      // Predicated region
      $region13: #{transformer_forward.16} parent=11 // pred_check
        %p276 = pneg %p128
      $region14: #{transformer_forward.16} parent=11 // pred_check_branch
        %278 = sbr.rel (%p276) target = $region16
      $region15: #{transformer_forward.16} parent=11 // pred_region
        _
      $region16: #{transformer_forward.16} parent=11 // pred_fallthru
        _
      // Predicated region
      $region17: #{transformer_forward.16} parent=11 // pred_check
        %p279 = pneg %p149
      $region18: #{transformer_forward.16} parent=11 // pred_check_branch
        %281 = sbr.rel (%p279) target = $region20
      $region19: #{transformer_forward.16} parent=11 // pred_region
        _
      $region20: #{transformer_forward.16} parent=11 // pred_fallthru
        _
      // Predicated region
      $region21: #{transformer_forward.16} parent=11 // pred_check
        %p282 = pneg %p170
      $region22: #{transformer_forward.16} parent=11 // pred_check_branch
        %284 = sbr.rel (%p282) target = $region24
      $region23: #{transformer_forward.16} parent=11 // pred_region
        _
      $region24: #{transformer_forward.16} parent=11 // pred_fallthru
        _
      // Predicated region
      $region25: #{transformer_forward.16} parent=11 // pred_check
        %p285 = pneg %p191
      $region26: #{transformer_forward.16} parent=11 // pred_check_branch
        %287 = sbr.rel (%p285) target = $region28
      $region27: #{transformer_forward.16} parent=11 // pred_region
        _
      $region28: #{transformer_forward.16} parent=11 // pred_fallthru
        _
      // Predicated region
      $region29: #{transformer_forward.16} parent=11 // pred_check
        %p288 = pneg %p212
      $region30: #{transformer_forward.16} parent=11 // pred_check_branch
        %290 = sbr.rel (%p288) target = $region32
      $region31: #{transformer_forward.16} parent=11 // pred_region
        _
      $region32: #{transformer_forward.16} parent=11 // pred_fallthru
        _
      // Predicated region
      $region33: #{transformer_forward.16} parent=11 // pred_check
        %p291 = pneg %p233
      $region34: #{transformer_forward.16} parent=11 // pred_check_branch
        %293 = sbr.rel (%p291) target = $region36
      $region35: #{transformer_forward.16} parent=11 // pred_region
        _
      $region36: #{transformer_forward.16} parent=11 // pred_fallthru
        _
    $region12: #{transformer_forward.16} parent=5 // pred_fallthru
      _
    %p294 = scmp.lt.s32.totalorder %s15, 2
    // Predicated region
    $region37: #{transformer_forward.16} parent=5 // pred_check
      %p295 = pneg %p294
    $region38: #{transformer_forward.16} parent=5 // pred_check_branch
      %297 = sbr.rel (%p295) target = $region40
    $region39: #{transformer_forward.16} parent=5 // pred_region
      // Predicated region
      $region41: #{transformer_forward.16} parent=39 // pred_check
        %p298 = pneg %p49
      $region42: #{transformer_forward.16} parent=39 // pred_check_branch
        %300 = sbr.rel (%p298) target = $region44
      $region43: #{transformer_forward.16} parent=39 // pred_region
        %p301 = scmp.lt.s32.totalorder %s22, 1
        %s302 = scalar_select %p301, %s22, 1
        %p303 = scmp.lt.s32.totalorder %s23, 0
        %s304 = scalar_select %p303, %s23, 0
        %s305 = sadd.s32 %s304, %s302
        %s306 = smul.addr %s305, 8
        %s307 = scalar_lea.vmem %s0, %s306
      $region44: #{transformer_forward.16} parent=39 // pred_fallthru
        _
      // Predicated region
      $region45: #{transformer_forward.16} parent=39 // pred_check
        %p308 = pneg %p75
      $region46: #{transformer_forward.16} parent=39 // pred_check_branch
        %310 = sbr.rel (%p308) target = $region48
      $region47: #{transformer_forward.16} parent=39 // pred_region
        %p311 = scmp.lt.s32.totalorder %s22, 1
        %s312 = scalar_select %p311, %s22, 1
        %s313 = smul.addr %s312, 8
        %s314 = scalar_lea.vmem %s1, %s313
      $region48: #{transformer_forward.16} parent=39 // pred_fallthru
        _
      // Predicated region
      $region49: #{transformer_forward.16} parent=39 // pred_check
        %p315 = pneg %p101
      $region50: #{transformer_forward.16} parent=39 // pred_check_branch
        %317 = sbr.rel (%p315) target = $region52
      $region51: #{transformer_forward.16} parent=39 // pred_region
        %p318 = scmp.lt.s32.totalorder %s22, 1
        %s319 = scalar_select %p318, %s22, 1
        %s320 = scalar_lea.vmem %s2, %s319
      $region52: #{transformer_forward.16} parent=39 // pred_fallthru
        _
    $region40: #{transformer_forward.16} parent=5 // pred_fallthru
      _
    %p321 = scmp.le.s32.totalorder 1, %s15
    %p322 = scmp.lt.s32.totalorder %s15, 3
    %p323 = pnand %p321, %p322
    %p324 = pneg %p323
    // Predicated region
    $region53: #{transformer_forward.16} parent=5 // pred_check
      _
    $region54: #{transformer_forward.16} parent=5 // pred_check_branch
      %326 = sbr.rel (%p323) target = $region56
    $region55: #{transformer_forward.16} parent=5 // pred_region
      %s327 = ssub.s32 %s15, 1
      %p328 = scmp.lt.s32.totalorder %s24, 1
      %s329 = scalar_select %p328, %s24, 1
      %p330 = scmp.lt.s32.totalorder %s25, 0
      %s331 = scalar_select %p330, %s25, 0
      %s332 = sadd.s32 %s331, %s329
      %s333 = smul.addr %s332, 8
      %s334 = scalar_lea.vmem %s0, %s333
      %p335 = pneg %p55
      %p336 = pneg %p52
      %p337 = scmp.lt.s32.totalorder %s24, 1
      %s338 = scalar_select %p337, %s24, 1
      %s339 = smul.addr %s338, 8
      %s340 = scalar_lea.vmem %s1, %s339
      %p341 = pneg %p81
      %p342 = pneg %p78
      %p343 = scmp.lt.s32.totalorder %s24, 1
      %s344 = scalar_select %p343, %s24, 1
      %s345 = scalar_lea.vmem %s2, %s344
      %p346 = pneg %p107
      %p347 = pneg %p104
      %p348 = pneg %p128
      %p349 = pneg %p125
      %p350 = pneg %p149
      %p351 = pneg %p146
      %p352 = pneg %p170
      %p353 = pneg %p167
      %p354 = pneg %p191
      %p355 = pneg %p188
      %p356 = pneg %p212
      %p357 = pneg %p209
      %p358 = pneg %p233
      %p359 = pneg %p230
      %p360 = pneg %p261
      %p361 = pneg %p258
      %p362 = scmp.lt.s32.totalorder %s24, 1
      %s363 = scalar_select %p362, %s24, 1
      %p364 = scmp.lt.s32.totalorder %s25, 0
      %s365 = scalar_select %p364, %s25, 0
      %s366 = sadd.s32 %s365, %s363
      %s367 = smul.addr %s366, 8
      %s368 = scalar_lea.vmem %s9, %s367
      %p369 = scmp.lt.s32.totalorder %s24, 1
      %s370 = scalar_select %p369, %s24, 1
      %p371 = scmp.lt.s32.totalorder %s25, 0
      %s372 = scalar_select %p371, %s25, 0
      %s373 = sadd.s32 %s372, %s370
      %s374 = smul.addr %s373, 8
      %s375 = scalar_lea.vmem %s0, %s374
      %p376 = scmp.lt.s32.totalorder %s24, 1
      %s377 = scalar_select %p376, %s24, 1
      %s378 = smul.addr %s377, 8
      %s379 = scalar_lea.vmem %s1, %s378
      %p380 = scmp.lt.s32.totalorder %s24, 1
      %s381 = scalar_select %p380, %s24, 1
      %s382 = scalar_lea.vmem %s2, %s381
      %p383 = scmp.lt.s32.totalorder %s24, 1
      %s384 = scalar_select %p383, %s24, 1
      %p385 = scmp.lt.s32.totalorder %s25, 0
      %s386 = scalar_select %p385, %s25, 0
      %s387 = sadd.s32 %s386, %s384
      %s388 = smul.addr %s387, 8
      %s389 = scalar_lea.vmem %s9, %s388
      %v391 = vld [vmem:[%s375] sm:$0xff]
      %v392 = vld [vmem:[%s382] sm:$0x1]
      %v393 = vld [vmem:[%s3] sm:$0xf]
      %v394 = vld [vmem:[%s3 + $0x4] sm:$0xf]
      %v395 = vld [vmem:[%s3 + $0x8] sm:$0xf]
      %v396 = vld [vmem:[%s3 + $0xc] sm:$0xf]
      %v397 = vld [vmem:[%s4] sm:$0x1]
      %v398 = vpack.c.bf16 %v391, %v391
      %v399 = vld [vmem:[%s379] sm:$0xff]
      %v400 = vpack.c.bf16 %v399, %v399
      %v402 = vperm.slane %v397, 0
      %v408 = vunpack.c.l.b16 %v393
      %v409 = vunpack.c.l.b16 %v394
      %v410 = vunpack.c.l.b16 %v395
      %v411 = vunpack.c.l.b16 %v396
      %v412 = vpack.c.b16 %v409, %v408
      %v413 = vpack.c.b16 %v411, %v410
      %vm416 = vcmask 261120
      %v418 = vsel %vm416, %v398, 0
      %420 = vmatpush.bf16.msra.mxu0 0
      %421 = vmatpush.bf16.msra.mxu0 0
      %422 = vmatpush.bf16.msra.mxu0 0
      %423 = vmatpush.bf16.msra.mxu0 0
      %424 = vmatpush.bf16.msra.mxu0 0
      %425 = vmatpush.bf16.msra.mxu0 0
      %426 = vmatpush.bf16.msra.mxu0 %v413
      %427 = vmatpush.bf16.msra.mxu0 %v412
      %428 = vmatmul.bf16.gmra.mxu0 %v418
      %v429 = vpop.f32.mrf.mxu0
      %v430 = vadd.f32 %v402, %v429
      %v431 = vpop.f32.mrf.mxu0
      %432 = vdwg.mxu0
      %433 = vrot.lane.b32.xlu0 %v412, 96
      %v434 = vpop.permute.xlu0 %433
      %435 = vrot.lane.b32.xlu0 %v413, 96
      %v436 = vpop.permute.xlu0 %435
      %439 = vrot.lane.b32.xlu0 %v402, 96
      %v440 = vpop.permute.xlu0 %439
      %v443 = vsel %vm416, %v400, 0
      %445 = vmatpush.bf16.msra.mxu0 0
      %446 = vmatpush.bf16.msra.mxu0 0
      %447 = vmatpush.bf16.msra.mxu0 0
      %448 = vmatpush.bf16.msra.mxu0 0
      %449 = vmatpush.bf16.msra.mxu0 0
      %450 = vmatpush.bf16.msra.mxu0 0
      %451 = vmatpush.bf16.msra.mxu0 %v436
      %452 = vmatpush.bf16.msra.mxu0 %v434
      %453 = vmatmul.bf16.gmra.mxu0 %v443
      %v454 = vpop.f32.mrf.mxu0
      %v455 = vadd.f32 %v440, %v454
      %v456 = vpop.f32.mrf.mxu0
      %457 = vdwg.mxu0
      %v458 = vpack.c.bf16 %v430, %v430
      %460 = vrot.lane.b32.xlu0 %v458, 120
      %v461 = vpop.permute.xlu0 %460
      %462 = vrot.lane.b32.xlu0 %v458, 112
      %v463 = vpop.permute.xlu0 %462
      %464 = vrot.lane.b32.xlu0 %v458, 104
      %v465 = vpop.permute.xlu0 %464
      %v468 = vpack.i.b16 %v461, %v458
      %v469 = vshrl.u32 %v458, 16
      %v470 = vshrl.u32 %v461, 16
      %v471 = vpack.i.b16 %v470, %v469
      %v474 = vpack.i.b16 %v465, %v463
      %v475 = vshrl.u32 %v463, 16
      %v476 = vshrl.u32 %v465, 16
      %v477 = vpack.i.b16 %v476, %v475
      %v480 = vunpack.c.l.s4 1983009808
      %v481 = vunpack.c.0.s8 %v480
      %v482 = vperm.slane %v468, %v481
      %v485 = vunpack.c.l.s4 1983009808
      %v486 = vunpack.c.0.s8 %v485
      %v487 = vperm.slane %v474, %v486
      %v488 = vrot.slane %v487, 4
      %vm489 = vcmask 1047556
      %v490 = vsel %vm489, %v488, %v482
      %v491 = vrot.slane %v482, 4
      %v492 = vsel %vm489, %v487, %v491
      %v494 = vunpack.c.l.s4 1934713408
      %v495 = vunpack.c.0.s8 %v494
      %v496 = vperm.slane %v490, %v495
      %v498 = vunpack.c.l.s4 1934713408
      %v499 = vunpack.c.0.s8 %v498
      %v500 = vperm.slane %v492, %v499
      %v501 = vrot.slane %v496, 4
      %v502 = vsel %vm489, 0, %v501
      %v503 = vrot.slane %v500, 4
      %v504 = vsel %vm489, 0, %v503
      %v507 = vunpack.c.l.s4 1983009808
      %v508 = vunpack.c.0.s8 %v507
      %v509 = vperm.slane %v471, %v508
      %v512 = vunpack.c.l.s4 1983009808
      %v513 = vunpack.c.0.s8 %v512
      %v514 = vperm.slane %v477, %v513
      %v515 = vrot.slane %v514, 4
      %v516 = vsel %vm489, %v515, %v509
      %v517 = vrot.slane %v509, 4
      %v518 = vsel %vm489, %v514, %v517
      %v520 = vunpack.c.l.s4 1934713408
      %v521 = vunpack.c.0.s8 %v520
      %v522 = vperm.slane %v516, %v521
      %v524 = vunpack.c.l.s4 1934713408
      %v525 = vunpack.c.0.s8 %v524
      %v526 = vperm.slane %v518, %v525
      %v527 = vrot.slane %v522, 4
      %v528 = vsel %vm489, 0, %v527
      %v529 = vrot.slane %v526, 4
      %v530 = vsel %vm489, 0, %v529
      %v531 = vsel %vm489, %v503, %v496
      %v533 = vunpack.c.l.s4 1983009808
      %v534 = vunpack.c.0.s8 %v533
      %v535 = vperm.slane %v531, %v534
      %v536 = vrot.slane %v504, 4
      %v537 = vsel %vm489, %v536, %v502
      %v539 = vunpack.c.l.s4 1983009808
      %v540 = vunpack.c.0.s8 %v539
      %v541 = vperm.slane %v537, %v540
      %v542 = vrot.slane %v541, 4
      %v543 = vsel %vm489, %v542, %v535
      %v545 = vunpack.c.l.s4 1934713408
      %v546 = vunpack.c.0.s8 %v545
      %v547 = vperm.slane %v543, %v546
      %v548 = vrot.slane %v547, 4
      %v549 = vsel %vm489, 0, %v548
      %v550 = vsel %vm489, %v529, %v522
      %v552 = vunpack.c.l.s4 1983009808
      %v553 = vunpack.c.0.s8 %v552
      %v554 = vperm.slane %v550, %v553
      %v555 = vrot.slane %v530, 4
      %v556 = vsel %vm489, %v555, %v528
      %v558 = vunpack.c.l.s4 1983009808
      %v559 = vunpack.c.0.s8 %v558
      %v560 = vperm.slane %v556, %v559
      %v561 = vrot.slane %v560, 4
      %v562 = vsel %vm489, %v561, %v554
      %v564 = vunpack.c.l.s4 1934713408
      %v565 = vunpack.c.0.s8 %v564
      %v566 = vperm.slane %v562, %v565
      %v567 = vrot.slane %v566, 4
      %v568 = vsel %vm489, 0, %v567
      %v571 = vpack.i.b16 %v566, %v547
      %v572 = vshrl.u32 %v547, 16
      %v573 = vshrl.u32 %v566, 16
      %v574 = vpack.i.b16 %v573, %v572
      %v577 = vpack.i.b16 %v568, %v549
      %v578 = vshrl.u32 %v549, 16
      %v579 = vshrl.u32 %v568, 16
      %v580 = vpack.i.b16 %v579, %v578
      %v581 = vpack.c.bf16 %v455, %v455
      %583 = vrot.lane.b32.xlu0 %v581, 120
      %v584 = vpop.permute.xlu0 %583
      %585 = vrot.lane.b32.xlu0 %v581, 112
      %v586 = vpop.permute.xlu0 %585
      %587 = vrot.lane.b32.xlu0 %v581, 104
      %v588 = vpop.permute.xlu0 %587
      %v591 = vpack.i.b16 %v584, %v581
      %v592 = vshrl.u32 %v581, 16
      %v593 = vshrl.u32 %v584, 16
      %v594 = vpack.i.b16 %v593, %v592
      %v597 = vpack.i.b16 %v588, %v586
      %v598 = vshrl.u32 %v586, 16
      %v599 = vshrl.u32 %v588, 16
      %v600 = vpack.i.b16 %v599, %v598
      %v603 = vunpack.c.l.s4 1983009808
      %v604 = vunpack.c.0.s8 %v603
      %v605 = vperm.slane %v591, %v604
      %v608 = vunpack.c.l.s4 1983009808
      %v609 = vunpack.c.0.s8 %v608
      %v610 = vperm.slane %v597, %v609
      %v611 = vrot.slane %v610, 4
      %v612 = vsel %vm489, %v611, %v605
      %v613 = vrot.slane %v605, 4
      %v614 = vsel %vm489, %v610, %v613
      %v616 = vunpack.c.l.s4 1934713408
      %v617 = vunpack.c.0.s8 %v616
      %v618 = vperm.slane %v612, %v617
      %v620 = vunpack.c.l.s4 1934713408
      %v621 = vunpack.c.0.s8 %v620
      %v622 = vperm.slane %v614, %v621
      %v623 = vrot.slane %v618, 4
      %v624 = vsel %vm489, 0, %v623
      %v625 = vrot.slane %v622, 4
      %v626 = vsel %vm489, 0, %v625
      %v629 = vunpack.c.l.s4 1983009808
      %v630 = vunpack.c.0.s8 %v629
      %v631 = vperm.slane %v594, %v630
      %v634 = vunpack.c.l.s4 1983009808
      %v635 = vunpack.c.0.s8 %v634
      %v636 = vperm.slane %v600, %v635
      %v637 = vrot.slane %v636, 4
      %v638 = vsel %vm489, %v637, %v631
      %v639 = vrot.slane %v631, 4
      %v640 = vsel %vm489, %v636, %v639
      %v642 = vunpack.c.l.s4 1934713408
      %v643 = vunpack.c.0.s8 %v642
      %v644 = vperm.slane %v638, %v643
      %v646 = vunpack.c.l.s4 1934713408
      %v647 = vunpack.c.0.s8 %v646
      %v648 = vperm.slane %v640, %v647
      %v649 = vrot.slane %v644, 4
      %v650 = vsel %vm489, 0, %v649
      %v651 = vrot.slane %v648, 4
      %v652 = vsel %vm489, 0, %v651
      %v653 = vsel %vm489, %v625, %v618
      %v655 = vunpack.c.l.s4 1983009808
      %v656 = vunpack.c.0.s8 %v655
      %v657 = vperm.slane %v653, %v656
      %v658 = vrot.slane %v626, 4
      %v659 = vsel %vm489, %v658, %v624
      %v661 = vunpack.c.l.s4 1983009808
      %v662 = vunpack.c.0.s8 %v661
      %v663 = vperm.slane %v659, %v662
      %v664 = vrot.slane %v663, 4
      %v665 = vsel %vm489, %v664, %v657
      %v667 = vunpack.c.l.s4 1934713408
      %v668 = vunpack.c.0.s8 %v667
      %v669 = vperm.slane %v665, %v668
      %v670 = vrot.slane %v669, 4
      %v671 = vsel %vm489, 0, %v670
      %v672 = vsel %vm489, %v651, %v644
      %v674 = vunpack.c.l.s4 1983009808
      %v675 = vunpack.c.0.s8 %v674
      %v676 = vperm.slane %v672, %v675
      %v677 = vrot.slane %v652, 4
      %v678 = vsel %vm489, %v677, %v650
      %v680 = vunpack.c.l.s4 1983009808
      %v681 = vunpack.c.0.s8 %v680
      %v682 = vperm.slane %v678, %v681
      %v683 = vrot.slane %v682, 4
      %v684 = vsel %vm489, %v683, %v676
      %v686 = vunpack.c.l.s4 1934713408
      %v687 = vunpack.c.0.s8 %v686
      %v688 = vperm.slane %v684, %v687
      %v689 = vrot.slane %v688, 4
      %v690 = vsel %vm489, 0, %v689
      %v693 = vpack.i.b16 %v688, %v669
      %v694 = vshrl.u32 %v669, 16
      %v695 = vshrl.u32 %v688, 16
      %v696 = vpack.i.b16 %v695, %v694
      %v699 = vpack.i.b16 %v690, %v671
      %v700 = vshrl.u32 %v671, 16
      %v701 = vshrl.u32 %v690, 16
      %v702 = vpack.i.b16 %v701, %v700
      %703 = vrot.lane.b32.xlu0 %v581, 96
      %v704 = vpop.permute.xlu0 %703
      %705 = vrot.lane.b32.xlu0 %v584, 96
      %v706 = vpop.permute.xlu0 %705
      %707 = vrot.lane.b32.xlu0 %v586, 96
      %v708 = vpop.permute.xlu0 %707
      %709 = vrot.lane.b32.xlu0 %v588, 96
      %v710 = vpop.permute.xlu0 %709
      %v713 = vpack.i.b16 %v706, %v704
      %v714 = vshrl.u32 %v704, 16
      %v715 = vshrl.u32 %v706, 16
      %v716 = vpack.i.b16 %v715, %v714
      %v719 = vpack.i.b16 %v710, %v708
      %v720 = vshrl.u32 %v708, 16
      %v721 = vshrl.u32 %v710, 16
      %v722 = vpack.i.b16 %v721, %v720
      %v725 = vunpack.c.l.s4 1983009808
      %v726 = vunpack.c.0.s8 %v725
      %v727 = vperm.slane %v713, %v726
      %v730 = vunpack.c.l.s4 1983009808
      %v731 = vunpack.c.0.s8 %v730
      %v732 = vperm.slane %v719, %v731
      %v733 = vrot.slane %v732, 4
      %v734 = vsel %vm489, %v733, %v727
      %v735 = vrot.slane %v727, 4
      %v736 = vsel %vm489, %v732, %v735
      %v738 = vunpack.c.l.s4 1934713408
      %v739 = vunpack.c.0.s8 %v738
      %v740 = vperm.slane %v734, %v739
      %v742 = vunpack.c.l.s4 1934713408
      %v743 = vunpack.c.0.s8 %v742
      %v744 = vperm.slane %v736, %v743
      %v745 = vrot.slane %v740, 4
      %v746 = vsel %vm489, 0, %v745
      %v747 = vrot.slane %v744, 4
      %v748 = vsel %vm489, 0, %v747
      %v751 = vunpack.c.l.s4 1983009808
      %v752 = vunpack.c.0.s8 %v751
      %v753 = vperm.slane %v716, %v752
      %v756 = vunpack.c.l.s4 1983009808
      %v757 = vunpack.c.0.s8 %v756
      %v758 = vperm.slane %v722, %v757
      %v759 = vrot.slane %v758, 4
      %v760 = vsel %vm489, %v759, %v753
      %v761 = vrot.slane %v753, 4
      %v762 = vsel %vm489, %v758, %v761
      %v764 = vunpack.c.l.s4 1934713408
      %v765 = vunpack.c.0.s8 %v764
      %v766 = vperm.slane %v760, %v765
      %v768 = vunpack.c.l.s4 1934713408
      %v769 = vunpack.c.0.s8 %v768
      %v770 = vperm.slane %v762, %v769
      %v771 = vrot.slane %v766, 4
      %v772 = vsel %vm489, 0, %v771
      %v773 = vrot.slane %v770, 4
      %v774 = vsel %vm489, 0, %v773
      %v775 = vsel %vm489, %v747, %v740
      %v777 = vunpack.c.l.s4 1983009808
      %v778 = vunpack.c.0.s8 %v777
      %v779 = vperm.slane %v775, %v778
      %v780 = vrot.slane %v748, 4
      %v781 = vsel %vm489, %v780, %v746
      %v783 = vunpack.c.l.s4 1983009808
      %v784 = vunpack.c.0.s8 %v783
      %v785 = vperm.slane %v781, %v784
      %v786 = vrot.slane %v785, 4
      %v787 = vsel %vm489, %v786, %v779
      %v789 = vunpack.c.l.s4 1934713408
      %v790 = vunpack.c.0.s8 %v789
      %v791 = vperm.slane %v787, %v790
      %v792 = vrot.slane %v791, 4
      %v793 = vsel %vm489, 0, %v792
      %v794 = vsel %vm489, %v773, %v766
      %v796 = vunpack.c.l.s4 1983009808
      %v797 = vunpack.c.0.s8 %v796
      %v798 = vperm.slane %v794, %v797
      %v799 = vrot.slane %v774, 4
      %v800 = vsel %vm489, %v799, %v772
      %v802 = vunpack.c.l.s4 1983009808
      %v803 = vunpack.c.0.s8 %v802
      %v804 = vperm.slane %v800, %v803
      %v805 = vrot.slane %v804, 4
      %v806 = vsel %vm489, %v805, %v798
      %v808 = vunpack.c.l.s4 1934713408
      %v809 = vunpack.c.0.s8 %v808
      %v810 = vperm.slane %v806, %v809
      %v811 = vrot.slane %v810, 4
      %v812 = vsel %vm489, 0, %v811
      %v815 = vpack.i.b16 %v810, %v791
      %v816 = vshrl.u32 %v791, 16
      %v817 = vshrl.u32 %v810, 16
      %v818 = vpack.i.b16 %v817, %v816
      %v821 = vpack.i.b16 %v812, %v793
      %v822 = vshrl.u32 %v793, 16
      %v823 = vshrl.u32 %v812, 16
      %v824 = vpack.i.b16 %v823, %v822
      %vm825 = vcmask 64512
      %v827 = vsel %vm825, %v571, 0
      %v830 = vsel %vm825, %v693, 0
      %832 = vmatpush.bf16.xpose.msra.mxu0 0
      %833 = vmatpush.bf16.xpose.msra.mxu0 0
      %834 = vmatpush.bf16.xpose.msra.mxu0 0
      %835 = vmatpush.bf16.xpose.msra.mxu0 0
      %836 = vmatpush.bf16.xpose.msra.mxu0 0
      %837 = vmatpush.bf16.xpose.msra.mxu0 0
      %838 = vmatpush.bf16.xpose.msra.mxu0 0
      %839 = vmatpush.bf16.xpose.msra.mxu0 %v830
      %840 = vmatmul.bf16.gmra.mxu0 %v827
      %v841 = vpop.f32.mrf.mxu0
      %v842 = vadd.f32 0.0, %v841
      %v843 = vpop.f32.mrf.mxu0
      %844 = vdwg.mxu0
      %v846 = vsel %vm825, %v574, 0
      %v849 = vsel %vm825, %v696, 0
      %851 = vmatpush.bf16.xpose.msra.mxu0 0
      %852 = vmatpush.bf16.xpose.msra.mxu0 0
      %853 = vmatpush.bf16.xpose.msra.mxu0 0
      %854 = vmatpush.bf16.xpose.msra.mxu0 0
      %855 = vmatpush.bf16.xpose.msra.mxu0 0
      %856 = vmatpush.bf16.xpose.msra.mxu0 0
      %857 = vmatpush.bf16.xpose.msra.mxu0 0
      %858 = vmatpush.bf16.xpose.msra.mxu0 %v849
      %859 = vmatmul.bf16.gmra.mxu0 %v846
      %v860 = vpop.f32.mrf.mxu0
      %v861 = vadd.f32 0.0, %v860
      %v862 = vpop.f32.mrf.mxu0
      %863 = vdwg.mxu0
      %v865 = vsel %vm825, %v577, 0
      %v868 = vsel %vm825, %v699, 0
      %870 = vmatpush.bf16.xpose.msra.mxu0 0
      %871 = vmatpush.bf16.xpose.msra.mxu0 0
      %872 = vmatpush.bf16.xpose.msra.mxu0 0
      %873 = vmatpush.bf16.xpose.msra.mxu0 0
      %874 = vmatpush.bf16.xpose.msra.mxu0 0
      %875 = vmatpush.bf16.xpose.msra.mxu0 0
      %876 = vmatpush.bf16.xpose.msra.mxu0 0
      %877 = vmatpush.bf16.xpose.msra.mxu0 %v868
      %878 = vmatmul.bf16.gmra.mxu0 %v865
      %v879 = vpop.f32.mrf.mxu0
      %v880 = vadd.f32 0.0, %v879
      %v881 = vpop.f32.mrf.mxu0
      %882 = vdwg.mxu0
      %v884 = vsel %vm825, %v580, 0
      %v887 = vsel %vm825, %v702, 0
      %889 = vmatpush.bf16.xpose.msra.mxu0 0
      %890 = vmatpush.bf16.xpose.msra.mxu0 0
      %891 = vmatpush.bf16.xpose.msra.mxu0 0
      %892 = vmatpush.bf16.xpose.msra.mxu0 0
      %893 = vmatpush.bf16.xpose.msra.mxu0 0
      %894 = vmatpush.bf16.xpose.msra.mxu0 0
      %895 = vmatpush.bf16.xpose.msra.mxu0 0
      %896 = vmatpush.bf16.xpose.msra.mxu0 %v887
      %897 = vmatmul.bf16.gmra.mxu0 %v884
      %v898 = vpop.f32.mrf.mxu0
      %v899 = vadd.f32 0.0, %v898
      %v900 = vpop.f32.mrf.mxu0
      %901 = vdwg.mxu0
      %v902 = vmul.f32 %v842, 0.35355338
      %v903 = vmul.f32 %v861, 0.35355338
      %v904 = vmul.f32 %v880, 0.35355338
      %v905 = vmul.f32 %v899, 0.35355338
      %v907 = vperm.slane %v392, 0
      %v909 = vadd.f32 %v902, %v907
      %v910 = vadd.f32 %v903, %v907
      %v911 = vadd.f32 %v904, %v907
      %v912 = vadd.f32 %v905, %v907
      %v913 = vsel %vm825, %v909, -inf
      %914 = vmax.xlane.f32.xlu0 %v913
      %v915 = vpop.xlane.xlu0 %914
      %v916 = vsel %vm825, %v910, -inf
      %917 = vmax.xlane.f32.xlu0 %v916
      %v918 = vpop.xlane.xlu0 %917
      %v919 = vsel %vm825, %v911, -inf
      %920 = vmax.xlane.f32.xlu0 %v919
      %v921 = vpop.xlane.xlu0 %920
      %v922 = vsel %vm825, %v912, -inf
      %923 = vmax.xlane.f32.xlu0 %v922
      %v924 = vpop.xlane.xlu0 %923
      %v925 = vsub.f32 %v909, %v915
      %v926 = vsub.f32 %v910, %v918
      %v927 = vsub.f32 %v911, %v921
      %v928 = vsub.f32 %v912, %v924
      %v929 = vmul.f32 %v925, 1.442695
      %v930 = vpow.pop %v929
      %v931 = vmul.f32 %v926, 1.442695
      %v932 = vpow.pop %v931
      %v933 = vmul.f32 %v927, 1.442695
      %v934 = vpow.pop %v933
      %v935 = vmul.f32 %v928, 1.442695
      %v936 = vpow.pop %v935
      %v937 = vsel %vm825, %v930, 0.0
      %938 = vadd.xlane.f32.xlu0 %v937
      %v939 = vpop.xlane.xlu0 %938
      %v940 = vsel %vm825, %v932, 0.0
      %941 = vadd.xlane.f32.xlu0 %v940
      %v942 = vpop.xlane.xlu0 %941
      %v943 = vsel %vm825, %v934, 0.0
      %944 = vadd.xlane.f32.xlu0 %v943
      %v945 = vpop.xlane.xlu0 %944
      %v946 = vsel %vm825, %v936, 0.0
      %947 = vadd.xlane.f32.xlu0 %v946
      %v948 = vpop.xlane.xlu0 %947
      %v949 = vrcp.pop %v939
      %v950 = vmul.f32 %v939, %v949
      %v951 = vsub.f32 1.0, %v950
      %v952 = vmul.f32 %v949, %v951
      %v953 = vadd.f32 %v949, %v952
      %vm954 = vweird.f32 %v939
      %vm955 = vweird.f32 %v949
      %vm956 = vmor %vm954, %vm955
      %v957 = vsel %vm956, %v949, %v953
      %v958 = vand.u32 2147483647, %v939
      %vm959 = vcmp.eq.f32.partialorder %v958, 8.507059e+37
      %v960 = vand.u32 %v939, 2147483648
      %v961 = vor.u32 1.1754944e-38, %v960
      %v962 = vsel %vm959, %v961, %v957
      %v963 = vmul.f32 %v930, %v962
      %v964 = vrcp.pop %v942
      %v965 = vmul.f32 %v942, %v964
      %v966 = vsub.f32 1.0, %v965
      %v967 = vmul.f32 %v964, %v966
      %v968 = vadd.f32 %v964, %v967
      %vm969 = vweird.f32 %v942
      %vm970 = vweird.f32 %v964
      %vm971 = vmor %vm969, %vm970
      %v972 = vsel %vm971, %v964, %v968
      %v973 = vand.u32 2147483647, %v942
      %vm974 = vcmp.eq.f32.partialorder %v973, 8.507059e+37
      %v975 = vand.u32 %v942, 2147483648
      %v976 = vor.u32 1.1754944e-38, %v975
      %v977 = vsel %vm974, %v976, %v972
      %v978 = vmul.f32 %v932, %v977
      %v979 = vrcp.pop %v945
      %v980 = vmul.f32 %v945, %v979
      %v981 = vsub.f32 1.0, %v980
      %v982 = vmul.f32 %v979, %v981
      %v983 = vadd.f32 %v979, %v982
      %vm984 = vweird.f32 %v945
      %vm985 = vweird.f32 %v979
      %vm986 = vmor %vm984, %vm985
      %v987 = vsel %vm986, %v979, %v983
      %v988 = vand.u32 2147483647, %v945
      %vm989 = vcmp.eq.f32.partialorder %v988, 8.507059e+37
      %v990 = vand.u32 %v945, 2147483648
      %v991 = vor.u32 1.1754944e-38, %v990
      %v992 = vsel %vm989, %v991, %v987
      %v993 = vmul.f32 %v934, %v992
      %v994 = vrcp.pop %v948
      %v995 = vmul.f32 %v948, %v994
      %v996 = vsub.f32 1.0, %v995
      %v997 = vmul.f32 %v994, %v996
      %v998 = vadd.f32 %v994, %v997
      %vm999 = vweird.f32 %v948
      %vm1000 = vweird.f32 %v994
      %vm1001 = vmor %vm999, %vm1000
      %v1002 = vsel %vm1001, %v994, %v998
      %v1003 = vand.u32 2147483647, %v948
      %vm1004 = vcmp.eq.f32.partialorder %v1003, 8.507059e+37
      %v1005 = vand.u32 %v948, 2147483648
      %v1006 = vor.u32 1.1754944e-38, %v1005
      %v1007 = vsel %vm1004, %v1006, %v1002
      %v1008 = vmul.f32 %v936, %v1007
      %v1009 = vpack.c.bf16 %v963, %v963
      %v1010 = vpack.c.bf16 %v978, %v978
      %v1011 = vpack.c.bf16 %v993, %v993
      %v1012 = vpack.c.bf16 %v1008, %v1008
      %v1014 = vsel %vm825, %v1009, 0
      %vm1016 = vcmask 1043456
      %v1018 = vsel %vm1016, %v815, 0
      %1020 = vmatpush.bf16.msra.mxu0 0
      %1021 = vmatpush.bf16.msra.mxu0 0
      %1022 = vmatpush.bf16.msra.mxu0 0
      %1023 = vmatpush.bf16.msra.mxu0 0
      %1024 = vmatpush.bf16.msra.mxu0 0
      %1025 = vmatpush.bf16.msra.mxu0 0
      %1026 = vmatpush.bf16.msra.mxu0 0
      %1027 = vmatpush.bf16.msra.mxu0 %v1018
      %1028 = vmatmul.bf16.gmra.mxu0 %v1014
      %v1029 = vpop.f32.mrf.mxu0
      %v1030 = vadd.f32 0.0, %v1029
      %v1031 = vpop.f32.mrf.mxu0
      %1032 = vdwg.mxu0
      %v1034 = vsel %vm825, %v1010, 0
      %v1037 = vsel %vm1016, %v818, 0
      %1039 = vmatpush.bf16.msra.mxu0 0
      %1040 = vmatpush.bf16.msra.mxu0 0
      %1041 = vmatpush.bf16.msra.mxu0 0
      %1042 = vmatpush.bf16.msra.mxu0 0
      %1043 = vmatpush.bf16.msra.mxu0 0
      %1044 = vmatpush.bf16.msra.mxu0 0
      %1045 = vmatpush.bf16.msra.mxu0 0
      %1046 = vmatpush.bf16.msra.mxu0 %v1037
      %1047 = vmatmul.bf16.gmra.mxu0 %v1034
      %v1048 = vpop.f32.mrf.mxu0
      %v1049 = vadd.f32 0.0, %v1048
      %v1050 = vpop.f32.mrf.mxu0
      %1051 = vdwg.mxu0
      %v1053 = vsel %vm825, %v1011, 0
      %v1056 = vsel %vm1016, %v821, 0
      %1058 = vmatpush.bf16.msra.mxu0 0
      %1059 = vmatpush.bf16.msra.mxu0 0
      %1060 = vmatpush.bf16.msra.mxu0 0
      %1061 = vmatpush.bf16.msra.mxu0 0
      %1062 = vmatpush.bf16.msra.mxu0 0
      %1063 = vmatpush.bf16.msra.mxu0 0
      %1064 = vmatpush.bf16.msra.mxu0 0
      %1065 = vmatpush.bf16.msra.mxu0 %v1056
      %1066 = vmatmul.bf16.gmra.mxu0 %v1053
      %v1067 = vpop.f32.mrf.mxu0
      %v1068 = vadd.f32 0.0, %v1067
      %v1069 = vpop.f32.mrf.mxu0
      %1070 = vdwg.mxu0
      %v1072 = vsel %vm825, %v1012, 0
      %v1075 = vsel %vm1016, %v824, 0
      %1077 = vmatpush.bf16.msra.mxu0 0
      %1078 = vmatpush.bf16.msra.mxu0 0
      %1079 = vmatpush.bf16.msra.mxu0 0
      %1080 = vmatpush.bf16.msra.mxu0 0
      %1081 = vmatpush.bf16.msra.mxu0 0
      %1082 = vmatpush.bf16.msra.mxu0 0
      %1083 = vmatpush.bf16.msra.mxu0 0
      %1084 = vmatpush.bf16.msra.mxu0 %v1075
      %1085 = vmatmul.bf16.gmra.mxu0 %v1072
      %v1086 = vpop.f32.mrf.mxu0
      %v1087 = vadd.f32 0.0, %v1086
      %v1088 = vpop.f32.mrf.mxu0
      %1089 = vdwg.mxu0
      %v1090 = vrot.slane %v1068, 4
      %vm1091 = vcmask 1047556
      %v1092 = vsel %vm1091, %v1090, %v1030
      %v1093 = vrot.slane %v1030, 4
      %v1094 = vsel %vm1091, %v1068, %v1093
      %v1096 = vunpack.c.l.s4 1983009808
      %v1097 = vunpack.c.0.s8 %v1096
      %v1098 = vperm.slane %v1092, %v1097
      %v1100 = vunpack.c.l.s4 1983009808
      %v1101 = vunpack.c.0.s8 %v1100
      %v1102 = vperm.slane %v1094, %v1101
      %v1103 = vrot.slane %v1087, 4
      %v1104 = vsel %vm1091, %v1103, %v1049
      %v1105 = vrot.slane %v1049, 4
      %v1106 = vsel %vm1091, %v1087, %v1105
      %v1108 = vunpack.c.l.s4 1983009808
      %v1109 = vunpack.c.0.s8 %v1108
      %v1110 = vperm.slane %v1104, %v1109
      %v1112 = vunpack.c.l.s4 1983009808
      %v1113 = vunpack.c.0.s8 %v1112
      %v1114 = vperm.slane %v1106, %v1113
      %v1115 = vrot.slane %v1110, 4
      %v1116 = vsel %vm1091, %v1115, %v1098
      %v1117 = vrot.slane %v1098, 4
      %v1118 = vsel %vm1091, %v1110, %v1117
      %v1120 = vunpack.c.l.s4 1934713408
      %v1121 = vunpack.c.0.s8 %v1120
      %v1122 = vperm.slane %v1116, %v1121
      %v1124 = vunpack.c.l.s4 1934713408
      %v1125 = vunpack.c.0.s8 %v1124
      %v1126 = vperm.slane %v1118, %v1125
      %v1127 = vrot.slane %v1114, 4
      %v1128 = vsel %vm1091, %v1127, %v1102
      %v1129 = vrot.slane %v1102, 4
      %v1130 = vsel %vm1091, %v1114, %v1129
      %v1132 = vunpack.c.l.s4 1934713408
      %v1133 = vunpack.c.0.s8 %v1132
      %v1134 = vperm.slane %v1128, %v1133
      %v1136 = vunpack.c.l.s4 1934713408
      %v1137 = vunpack.c.0.s8 %v1136
      %v1138 = vperm.slane %v1130, %v1137
      %v1139 = vrot.slane %v1122, 4
      %v1140 = vsel %vm1091, 0.0, %v1139
      %v1141 = vrot.slane %v1126, 4
      %v1142 = vsel %vm1091, 0.0, %v1141
      %v1143 = vrot.slane %v1134, 4
      %v1144 = vsel %vm1091, 0.0, %v1143
      %v1145 = vrot.slane %v1138, 4
      %v1146 = vsel %vm1091, 0.0, %v1145
      %v1147 = vsel %vm1091, %v1141, %v1122
      %v1149 = vunpack.c.l.s4 1983009808
      %v1150 = vunpack.c.0.s8 %v1149
      %v1151 = vperm.slane %v1147, %v1150
      %v1152 = vrot.slane %v1142, 4
      %v1153 = vsel %vm1091, %v1152, %v1140
      %v1155 = vunpack.c.l.s4 1983009808
      %v1156 = vunpack.c.0.s8 %v1155
      %v1157 = vperm.slane %v1153, %v1156
      %v1158 = vsel %vm1091, %v1145, %v1134
      %v1160 = vunpack.c.l.s4 1983009808
      %v1161 = vunpack.c.0.s8 %v1160
      %v1162 = vperm.slane %v1158, %v1161
      %v1163 = vrot.slane %v1146, 4
      %v1164 = vsel %vm1091, %v1163, %v1144
      %v1166 = vunpack.c.l.s4 1983009808
      %v1167 = vunpack.c.0.s8 %v1166
      %v1168 = vperm.slane %v1164, %v1167
      %v1169 = vrot.slane %v1157, 4
      %v1170 = vsel %vm1091, %v1169, %v1151
      %v1171 = vrot.slane %v1151, 4
      %v1172 = vsel %vm1091, %v1157, %v1171
      %v1174 = vunpack.c.l.s4 1934713408
      %v1175 = vunpack.c.0.s8 %v1174
      %v1176 = vperm.slane %v1170, %v1175
      %v1178 = vunpack.c.l.s4 1934713408
      %v1179 = vunpack.c.0.s8 %v1178
      %v1180 = vperm.slane %v1172, %v1179
      %v1181 = vrot.slane %v1168, 4
      %v1182 = vsel %vm1091, %v1181, %v1162
      %v1183 = vrot.slane %v1162, 4
      %v1184 = vsel %vm1091, %v1168, %v1183
      %v1186 = vunpack.c.l.s4 1934713408
      %v1187 = vunpack.c.0.s8 %v1186
      %v1188 = vperm.slane %v1182, %v1187
      %v1190 = vunpack.c.l.s4 1934713408
      %v1191 = vunpack.c.0.s8 %v1190
      %v1192 = vperm.slane %v1184, %v1191
      %v1193 = vrot.slane %v1188, 4
      %v1194 = vsel %vm1091, %v1193, %v1176
      %v1195 = vrot.slane %v1176, 4
      %v1196 = vsel %vm1091, %v1188, %v1195
      %v1197 = vrot.slane %v1192, 4
      %v1198 = vsel %vm1091, %v1197, %v1180
      %v1199 = vrot.slane %v1180, 4
      %v1200 = vsel %vm1091, %v1192, %v1199
      %1202 = vrot.lane.b32.xlu0 %v1196, 8
      %v1203 = vpop.permute.xlu0 %1202
      %1206 = vrot.lane.b32.xlu0 %v1198, 16
      %v1207 = vpop.permute.xlu0 %1206
      %1210 = vrot.lane.b32.xlu0 %v1200, 24
      %v1211 = vpop.permute.xlu0 %1210
      %v1213 = vsel %vm825, %v1194, %v1203
      %vm1214 = vcmask 130048
      %v1215 = vsel %vm1214, %v1213, %v1207
      %vm1216 = vcmask 195584
      %v1217 = vsel %vm1216, %v1215, %v1211
      %v1218 = vpack.c.bf16 %v1217, %v1217
      %v1219 = vld [vmem:[%s5] sm:$0xf]
      %v1220 = vld [vmem:[%s5 + $0x4] sm:$0xf]
      %v1221 = vld [vmem:[%s5 + $0x8] sm:$0xf]
      %v1222 = vld [vmem:[%s5 + $0xc] sm:$0xf]
      %v1223 = vld [vmem:[%s6] sm:$0x1]
      %v1225 = vperm.slane %v1223, 0
      %v1231 = vunpack.c.l.b16 %v1219
      %v1232 = vunpack.c.l.b16 %v1220
      %v1233 = vunpack.c.l.b16 %v1221
      %v1234 = vunpack.c.l.b16 %v1222
      %v1235 = vpack.c.b16 %v1232, %v1231
      %v1236 = vpack.c.b16 %v1234, %v1233
      %v1240 = vsel %vm416, %v1218, 0
      %1242 = vmatpush.bf16.msra.mxu0 0
      %1243 = vmatpush.bf16.msra.mxu0 0
      %1244 = vmatpush.bf16.msra.mxu0 0
      %1245 = vmatpush.bf16.msra.mxu0 0
      %1246 = vmatpush.bf16.msra.mxu0 0
      %1247 = vmatpush.bf16.msra.mxu0 0
      %1248 = vmatpush.bf16.msra.mxu0 %v1236
      %1249 = vmatpush.bf16.msra.mxu0 %v1235
      %1250 = vmatmul.bf16.gmra.mxu0 %v1240
      %v1251 = vpop.f32.mrf.mxu0
      %v1252 = vadd.f32 %v1225, %v1251
      %v1253 = vpop.f32.mrf.mxu0
      %1254 = vdwg.mxu0
      %v1255 = vadd.f32 %v391, %v1252
      %v1256 = vld [vmem:[%s7] sm:$0x1]
      %v1257 = vld [vmem:[%s8] sm:$0x1]
      %v1258 = vsel %vm416, %v1255, 0.0
      %1259 = vadd.xlane.f32.xlu0 %v1258
      %v1260 = vpop.xlane.xlu0 %1259
      %v1261 = vrcp.pop 32.0
      %v1262 = vmul.f32 32.0, %v1261
      %v1263 = vsub.f32 1.0, %v1262
      %v1264 = vmul.f32 %v1261, %v1263
      %v1265 = vadd.f32 %v1261, %v1264
      %vm1266 = vweird.f32 %v1261
      %v1267 = vsel %vm1266, %v1261, %v1265
      %v1268 = vmul.f32 %v1260, %v1267
      %v1269 = vmul.f32 %v1255, %v1255
      %v1270 = vsel %vm416, %v1269, 0.0
      %1271 = vadd.xlane.f32.xlu0 %v1270
      %v1272 = vpop.xlane.xlu0 %1271
      %v1273 = vmul.f32 %v1272, %v1267
      %v1274 = vmul.f32 %v1268, %v1268
      %v1275 = vsub.f32 %v1273, %v1274
      %v1276 = vmax.f32 %v1275, 0.0
      %v1277 = vsub.f32 %v1255, %v1268
      %v1278 = vadd.f32 %v1276, 1e-05
      %v1279 = vrsqrt.pop %v1278
      %v1280 = vmul.f32 %v1279, %v1278
      %v1281 = vmul.f32 %v1280, %v1279
      %v1282 = vmul.f32 0.5, %v1281
      %v1283 = vsub.f32 1.5, %v1282
      %v1284 = vmul.f32 %v1279, %v1283
      %vm1285 = vweird.f32 %v1278
      %vm1286 = vweird.f32 %v1279
      %vm1287 = vmor %vm1285, %vm1286
      %v1288 = vsel %vm1287, %v1279, %v1284
      %v1289 = vmul.f32 %v1277, %v1288
      %v1291 = vperm.slane %v1256, 0
      %v1293 = vmul.f32 %v1289, %v1291
      %v1295 = vperm.slane %v1257, 0
      %v1297 = vadd.f32 %v1293, %v1295
      %1298 = vst.msk [vmem:[%s389] sm:$0xff] %vm416, %v1297
      %p1299 = scmp.lt.s32.totalorder %s24, 1
      %s1300 = scalar_select %p1299, %s24, 1
      %p1301 = scmp.lt.s32.totalorder %s25, 0
      %s1302 = scalar_select %p1301, %s25, 0
      %s1303 = sadd.s32 %s1302, %s1300
      %s1304 = smul.addr %s1303, 8
      %s1305 = scalar_lea.vmem %s9, %s1304
      // Predicated region
      $region57: #{transformer_forward.16} parent=55 // pred_check
        %p1306 = pneg %p258
      $region58: #{transformer_forward.16} parent=55 // pred_check_branch
        %1308 = sbr.rel (%p1306) target = $region60
      $region59: #{transformer_forward.16} parent=55 // pred_region
        _
      $region60: #{transformer_forward.16} parent=55 // pred_fallthru
        _
    $region56: #{transformer_forward.16} parent=5 // pred_fallthru
      _
    %p1309 = scmp.le.s32.totalorder 2, %s15
    // Predicated region
    $region61: #{transformer_forward.16} parent=5 // pred_check
      %p1310 = pneg %p1309
    $region62: #{transformer_forward.16} parent=5 // pred_check_branch
      %1312 = sbr.rel (%p1310) target = $region64
    $region63: #{transformer_forward.16} parent=5 // pred_region
      %s1313 = ssub.s32 %s15, 2
      // Predicated region
      $region65: #{transformer_forward.16} parent=63 // pred_check
        %p1314 = pneg %p264
      $region66: #{transformer_forward.16} parent=63 // pred_check_branch
        %1316 = sbr.rel (%p1314) target = $region68
      $region67: #{transformer_forward.16} parent=63 // pred_region
        %p1317 = scmp.lt.s32.totalorder %s26, 1
        %s1318 = scalar_select %p1317, %s26, 1
        %p1319 = scmp.lt.s32.totalorder %s27, 0
        %s1320 = scalar_select %p1319, %s27, 0
        %s1321 = sadd.s32 %s1320, %s1318
        %s1322 = smul.addr %s1321, 8
        %s1323 = scalar_lea.vmem %s9, %s1322
      $region68: #{transformer_forward.16} parent=63 // pred_fallthru
        _
    $region64: #{transformer_forward.16} parent=5 // pred_fallthru
      _
  $region6: #{transformer_forward.16} parent=0 // loop_footer
    %s19 = sadd.s32 1, %s15
  $region7: #{transformer_forward.16} parent=0 // loop_footer_branch
    %14 = sbr.rel target = $region3
  $region8: #{transformer_forward.16} parent=0 // loop_exit
    _

// kernel: transformer_forward.21
$region0: #{transformer_forward.21}
  #allocation0 [shape = 'u32[]', space=smem, size = 0x4, offset = 0x4, fixed_abs, tag = 'smem constant byte address 0x4 - core index']
  #allocation1 [shape = 'u32[72,128]{1,0:T(1,128)}', space=vmem, size = 0x9000, scoped, tag = 'internal scratch']
  %s0 = inlined_call_operand.vmem [shape: f32[16,32], index: 0, kind: input, shape index: {}]
  %s1 = inlined_call_operand.vmem [shape: bf16[32,64], index: 1, kind: input, shape index: {}]
  %s2 = inlined_call_operand.vmem [shape: f32[1,64], index: 2, kind: input, shape index: {}]
  %s3 = inlined_call_operand.hbm [shape: f32[16,64], index: 3, kind: output, shape index: {0}]
  %s4 = inlined_call_operand.hbm [shape: f32[16,64], index: 4, kind: output, shape index: {1}]
  %5 = xla_tuple %s3, %s4
  %s6 = sld [smem:[#allocation0]]
  $region30: #{transformer_forward.21} parent=0
    _
  %s8 = ssub.s32 1, %s6
  %s9 = scalar_select 0, %s8, %s6
  $region1: #{transformer_forward.21} parent=0
    #allocation2 [shape = 'u8[8192]{0}', space=vmem, size = 0x2000, scoped, tag = 'output window, operand 0, single buffered']
    #allocation3 [shape = 's32[1]{0}', space=sflag, size = 0x4, scoped, tag = 'scoped memory for transformer_forward.21']
    #allocation4 [shape = 'u8[8192]{0}', space=vmem, size = 0x2000, scoped, tag = 'output window, operand 1, single buffered']
    #allocation5 [shape = 's32[1]{0}', space=sflag, size = 0x4, scoped, tag = 'scoped memory for transformer_forward.21']
    %10 = vsyncpa [#allocation3], 0
    %11 = vsyncpa [#allocation5], 0
    // Predicated region
    $region2: #{transformer_forward.21} parent=1 // pred_check
      _
    $region3: #{transformer_forward.21} parent=1 // pred_check_branch
      %13 = sbr.rel (0) target = $region5
    $region4: #{transformer_forward.21} parent=1 // pred_region
      _
    $region5: #{transformer_forward.21} parent=1 // pred_fallthru
      _
    // Predicated region
    $region6: #{transformer_forward.21} parent=1 // pred_check
      _
    $region7: #{transformer_forward.21} parent=1 // pred_check_branch
      %15 = sbr.rel (0) target = $region9
    $region8: #{transformer_forward.21} parent=1 // pred_region
      _
    $region9: #{transformer_forward.21} parent=1 // pred_fallthru
      _
    // Predicated region
    $region10: #{transformer_forward.21} parent=1 // pred_check
      _
    $region11: #{transformer_forward.21} parent=1 // pred_check_branch
      %17 = sbr.rel (0) target = $region13
    $region12: #{transformer_forward.21} parent=1 // pred_region
      _
    $region13: #{transformer_forward.21} parent=1 // pred_fallthru
      _
    %v19 = vld [vmem:[%s0] sm:$0xff]
    %v20 = vld [vmem:[%s0 + $0x8] sm:$0xff]
    %v21 = vpack.c.bf16 %v20, %v19
    %v22 = vld [vmem:[%s1] sm:$0xf]
    %v23 = vld [vmem:[%s1 + $0x4] sm:$0xf]
    %v24 = vld [vmem:[%s1 + $0x8] sm:$0xf]
    %v25 = vld [vmem:[%s1 + $0xc] sm:$0xf]
    %v26 = vld [vmem:[%s2] sm:$0x1]
    %v28 = vperm.slane %v26, 0
    %v34 = vunpack.c.l.b16 %v22
    %v35 = vunpack.c.l.b16 %v23
    %v36 = vunpack.c.l.b16 %v24
    %v37 = vunpack.c.l.b16 %v25
    %v38 = vpack.c.b16 %v35, %v34
    %v39 = vpack.c.b16 %v37, %v36
    %vm42 = vcmask 261120
    %v44 = vsel %vm42, %v21, 0
    %46 = vmatpush.bf16.msra.mxu0 0
    %47 = vmatpush.bf16.msra.mxu0 0
    %48 = vmatpush.bf16.msra.mxu0 0
    %49 = vmatpush.bf16.msra.mxu0 0
    %50 = vmatpush.bf16.msra.mxu0 0
    %51 = vmatpush.bf16.msra.mxu0 0
    %52 = vmatpush.bf16.msra.mxu0 %v39
    %53 = vmatpush.bf16.msra.mxu0 %v38
    %54 = vmatmul.bf16.gmra.mxu0 %v44
    %v55 = vpop.f32.mrf.mxu0
    %v56 = vadd.f32 %v28, %v55
    %v57 = vpop.f32.mrf.mxu0
    %v58 = vadd.f32 %v28, %v57
    %59 = vdwg.mxu0
    %vm60 = vcmask 523264
    %61 = vst.msk [vmem:[#allocation2] sm:$0xff] %vm60, %v56
    %62 = vst.msk [vmem:[#allocation2 + $0x8] sm:$0xff] %vm60, %v58
    %v63 = vsel %vm60, %v56, -inf
    %64 = vmax.xlane.f32.xlu0 %v63
    %v65 = vpop.xlane.xlu0 %64
    %v66 = vsel %vm60, %v58, -inf
    %67 = vmax.xlane.f32.xlu0 %v66
    %v68 = vpop.xlane.xlu0 %67
    %v69 = vsub.f32 %v56, %v65
    %v70 = vsub.f32 %v58, %v68
    %v71 = vmul.f32 %v69, 1.442695
    %v72 = vpow.pop %v71
    %v73 = vmul.f32 %v70, 1.442695
    %v74 = vpow.pop %v73
    %v75 = vsel %vm60, %v72, 0.0
    %76 = vadd.xlane.f32.xlu0 %v75
    %v77 = vpop.xlane.xlu0 %76
    %v78 = vsel %vm60, %v74, 0.0
    %79 = vadd.xlane.f32.xlu0 %v78
    %v80 = vpop.xlane.xlu0 %79
    %v81 = vlog2.pop %v77
    %v82 = vmul.f32 %v81, 0.6931472
    %v83 = vlog2.pop %v80
    %v84 = vmul.f32 %v83, 0.6931472
    %v85 = vsub.f32 %v69, %v82
    %v86 = vsub.f32 %v70, %v84
    %87 = vst.msk [vmem:[#allocation4] sm:$0xff] %vm60, %v85
    %88 = vst.msk [vmem:[#allocation4 + $0x8] sm:$0xff] %vm60, %v86
    // Predicated region
    $region14: #{transformer_forward.21} parent=1 // pred_check
      _
    $region15: #{transformer_forward.21} parent=1 // pred_check_branch
      %90 = sbr.rel (0) target = $region17
    $region16: #{transformer_forward.21} parent=1 // pred_region
      %92 = vsyncadd [#allocation3], 0
      %s93 = sshll.u32 [#allocation2], 4
      %s94 = int_to_ptr.vmem [resolvable:$true] %s93
      %s95 = sshll.u32 %s3, 4
      %s96 = int_to_ptr.hbm [resolvable:$true] %s95
      %101 = dma.vmem_to_hbm [thread:$0]  %s94, 256, %s96, [#allocation3], 128, 128, 8
    $region17: #{transformer_forward.21} parent=1 // pred_fallthru
      _
    // Predicated region
    $region18: #{transformer_forward.21} parent=1 // pred_check
      _
    $region19: #{transformer_forward.21} parent=1 // pred_check_branch
      %103 = sbr.rel (0) target = $region21
    $region20: #{transformer_forward.21} parent=1 // pred_region
      %105 = vsyncadd [#allocation5], 0
      %s106 = sshll.u32 [#allocation4], 4
      %s107 = int_to_ptr.vmem [resolvable:$true] %s106
      %s108 = sshll.u32 %s4, 4
      %s109 = int_to_ptr.hbm [resolvable:$true] %s108
      %114 = dma.vmem_to_hbm [thread:$0]  %s107, 256, %s109, [#allocation5], 128, 128, 8
    $region21: #{transformer_forward.21} parent=1 // pred_fallthru
      _
    // Predicated region
    $region22: #{transformer_forward.21} parent=1 // pred_check
      _
    $region23: #{transformer_forward.21} parent=1 // pred_check_branch
      %116 = sbr.rel (0) target = $region25
    $region24: #{transformer_forward.21} parent=1 // pred_region
      %118 = dma.done [#allocation3], 256
    $region25: #{transformer_forward.21} parent=1 // pred_fallthru
      _
    // Predicated region
    $region26: #{transformer_forward.21} parent=1 // pred_check
      _
    $region27: #{transformer_forward.21} parent=1 // pred_check_branch
      %120 = sbr.rel (0) target = $region29
    $region28: #{transformer_forward.21} parent=1 // pred_region
      %122 = dma.done [#allocation5], 256
    $region29: #{transformer_forward.21} parent=1 // pred_fallthru
      _
    %123 = vsyncpa [#allocation3], 1
    %124 = vsyncpa [#allocation5], 1

</llo_original>
